<compile_context>
chip_gen: v6e
topology: v6e:2x2x1
jax: 0.10.0
libtpu: 0.0.40
codegen_flags: <defaults>
</compile_context>

<pallas_src>
import jax
import jax.numpy as jnp
from jax import lax
from jax.experimental import pallas as pl
from jax.experimental.pallas import tpu as pltpu

_LANES = 128
_TILE_ROWS = 2048      # (2048, 128) f32 block = 1 MiB per input tensor
_NCORES = 2            # parallel grid axis (v7x megacore); harmless on 1-TC chips
_NORM_VAL = 1e-24


def _bce_partial_kernel(lim_ref, w_ref, x_ref, t_ref, out_ref):
    """Accumulates per-lane partial sums of the BCE terms into an (8,128) block."""
    p = pl.program_id(0)            # parallel (core) axis
    i = pl.program_id(1)            # reduction axis
    tiles_per_core = pl.num_programs(1)

    @pl.when(i == 0)
    def _():
        out_ref[...] = jnp.zeros_like(out_ref)

    x = x_ref[...].astype(jnp.float32)
    t = t_ref[...].astype(jnp.float32)
    w = w_ref[0]

    weights = 1.0 + (w - 1.0) * t
    # NOTE: the clamps keep masked/garbage tail elements finite before the
    # jnp.where below zeroes them out.
    term = (weights * t * jnp.log(jnp.maximum(x, _NORM_VAL))
            + (1.0 - t) * jnp.log(jnp.maximum(1.0 - x, _NORM_VAL)))

    # Mask rows/lanes beyond the true element count: covers the ragged tail of
    # the last (partial) block and any clamped/duplicated blocks on the
    # parallel axis.
    tile_rows = x.shape[0]
    full_rows = lim_ref[0]          # number of fully-valid 128-lane rows
    rem_lanes = lim_ref[1]          # valid lanes in the row right after them
    row = lax.broadcasted_iota(jnp.int32, term.shape, 0)
    lane = lax.broadcasted_iota(jnp.int32, term.shape, 1)
    grow = (p * tiles_per_core + i) * tile_rows + row
    mask = (grow < full_rows) | ((grow == full_rows) & (lane < rem_lanes))
    term = jnp.where(mask, term, 0.0)

    # Block-local reduce down to one (8, 128) vreg: a leading-axis reduce that
    # stays on the VPU.  The single cross-lane sum happens once in the wrapper.
    out_ref[...] += term.reshape(-1, 8, _LANES).sum(axis=0)


def my_bce_loss(inputs, target, weight):
    """Weighted BCE loss (mean over all elements), matching myBCELoss.forward."""
    assert inputs.shape == target.shape
    n_elem = inputs.size

    # Contiguous flatten -> free reshape, native dtype (cast happens on load).
    x = inputs.reshape(-1)
    t = target.reshape(-1)

    # Only if the element count is not lane-aligned do we pad to a 128
    # multiple (needed purely for the 2-D reshape).  Pad values are irrelevant
    # because the kernel masks by element count.
    if n_elem % _LANES:
        pad = _LANES - n_elem % _LANES
        x = jnp.pad(x, (0, pad))
        t = jnp.pad(t, (0, pad))

    rows = x.size // _LANES
    x2 = x.reshape(rows, _LANES)
    t2 = t.reshape(rows, _LANES)

    n_tiles = pl.cdiv(rows, _TILE_ROWS)
    tiles_per_core = pl.cdiv(n_tiles, _NCORES)
    last_tile = n_tiles - 1

    def in_map(p, i, lim, w):
        # Clamp so out-of-range (p, i) pairs re-read the last tile; their
        # contribution is masked to zero inside the kernel.
        return (jnp.minimum(p * tiles_per_core + i, last_tile), 0)

    def out_map(p, i, lim, w):
        return (p, 0)

    lims = jnp.array([n_elem // _LANES, n_elem % _LANES], dtype=jnp.int32)
    w_arr = jnp.array([weight], dtype=jnp.float32)

    bytes_accessed = int(x2.size * x2.dtype.itemsize
                         + t2.size * t2.dtype.itemsize
                         + _NCORES * 8 * _LANES * 4)

    partials = pl.pallas_call(
        _bce_partial_kernel,
        out_shape=jax.ShapeDtypeStruct((_NCORES * 8, _LANES), jnp.float32),
        grid_spec=pltpu.PrefetchScalarGridSpec(
            num_scalar_prefetch=2,
            grid=(_NCORES, tiles_per_core),
            in_specs=[
                pl.BlockSpec((_TILE_ROWS, _LANES), in_map),
                pl.BlockSpec((_TILE_ROWS, _LANES), in_map),
            ],
            out_specs=pl.BlockSpec((8, _LANES), out_map),
        ),
        compiler_params=pltpu.CompilerParams(
            dimension_semantics=("parallel", "arbitrary")),
        cost_estimate=pl.CostEstimate(
            flops=9 * n_elem,
            transcendentals=2 * n_elem,
            bytes_accessed=bytes_accessed),
    )(lims, w_arr, x2, t2)

    # Tiny final cross-lane reduce + mean + negate in the wrapper.
    return -(jnp.sum(partials) / jnp.float32(n_elem))


def _reference(inputs, target, weight):
    w = 1.0 + (weight - 1.0) * target.astype(jnp.float32)
    x = inputs.astype(jnp.float32)
    t = target.astype(jnp.float32)
    term = (w * t * jnp.log(jnp.maximum(x, _NORM_VAL))
            + (1.0 - t) * jnp.log(jnp.maximum(1.0 - x, _NORM_VAL)))
    return -jnp.mean(term)


if __name__ == "__main__":
    key = jax.random.PRNGKey(0)
    k1, k2, k3, k4 = jax.random.split(key, 4)

    weight = 3.0  # deterministic "weight" parameter from __init__

    # Small NCHW-shaped probabilities and binary targets.
    shape = (2, 4, 16, 16)
    inputs = jax.nn.sigmoid(jax.random.normal(k1, shape, dtype=jnp.float32))
    target = (jax.random.uniform(k2, shape) > 0.5).astype(jnp.float32)

    loss = jax.block_until_ready(my_bce_loss(inputs, target, weight))
    ref = _reference(inputs, target, weight)
    assert jnp.allclose(loss, ref, rtol=1e-5, atol=1e-6), (loss, ref)

    # Ragged element count (exercises the in-kernel tail masking path).
    shape2 = (2, 3, 7, 5)
    inputs2 = jax.nn.sigmoid(jax.random.normal(k3, shape2, dtype=jnp.float32))
    target2 = (jax.random.uniform(k4, shape2) > 0.5).astype(jnp.float32)
    loss2 = jax.block_until_ready(my_bce_loss(inputs2, target2, weight))
    ref2 = _reference(inputs2, target2, weight)
    assert jnp.allclose(loss2, ref2, rtol=1e-5, atol=1e-6), (loss2, ref2)

    print("KERNEL_OK")
</pallas_src>

<mosaic_0001>
module attributes {stable_mosaic.version = 11 : i64} {
  func.func @_bce_partial_kernel(%arg0: i32, %arg1: i32, %arg2: memref<2xi32, #tpu.memory_space<smem>>, %arg3: memref<1xf32, #tpu.memory_space<smem>>, %arg4: memref<2048x128xf32, #tpu.memory_space<vmem>>, %arg5: memref<2048x128xf32, #tpu.memory_space<vmem>>, %arg6: memref<8x128xf32, #tpu.memory_space<vmem>>) attributes {dimension_semantics = [#tpu.dimension_semantics<parallel>, #tpu.dimension_semantics<arbitrary>], iteration_bounds = array<i64: 2, 1>, scalar_prefetch = 2 : i64, scratch_operands = 0 : i64, tpu.core_type = #tpu.core_type<tc>, window_params = [{transform_indices = @transform_0, window_bounds = array<i64: 2048, 128>}, {transform_indices = @transform_1, window_bounds = array<i64: 2048, 128>}, {transform_indices = @transform_2, window_bounds = array<i64: 8, 128>}]} {
    %c0_i32 = arith.constant 0 : i32
    %0 = arith.cmpi eq, %arg1, %c0_i32 : i32
    %1 = arith.extui %0 : i1 to i32
    %c0_i32_0 = arith.constant 0 : i32
    %2 = arith.cmpi ne, %1, %c0_i32_0 : i32
    scf.if %2 {
      %cst_17 = arith.constant 0.000000e+00 : f32
      %49 = vector.broadcast %cst_17 : f32 to vector<8x128xf32>
      %c0_18 = arith.constant 0 : index
      %c0_19 = arith.constant 0 : index
      %50 = vector.load %arg6[%c0_18, %c0_19] : memref<8x128xf32, #tpu.memory_space<vmem>>, vector<8x128xf32>
      tpu.vector_store %arg6[%c0_18, %c0_19], %49 {strides = array<i32>} : memref<8x128xf32, #tpu.memory_space<vmem>>, vector<8x128xf32>,
    } else {
    }
    %c0 = arith.constant 0 : index
    %c0_1 = arith.constant 0 : index
    %3 = vector.load %arg4[%c0, %c0_1] : memref<2048x128xf32, #tpu.memory_space<vmem>>, vector<2048x128xf32>
    %c0_2 = arith.constant 0 : index
    %c0_3 = arith.constant 0 : index
    %4 = vector.load %arg5[%c0_2, %c0_3] : memref<2048x128xf32, #tpu.memory_space<vmem>>, vector<2048x128xf32>
    %c0_4 = arith.constant 0 : index
    %5 = memref.load %arg3[%c0_4] : memref<1xf32, #tpu.memory_space<smem>>
    %cst = arith.constant 1.000000e+00 : f32
    %6 = arith.subf %5, %cst : f32
    %7 = vector.broadcast %6 : f32 to vector<2048x128xf32>
    %8 = arith.mulf %7, %4 : vector<2048x128xf32>
    %cst_5 = arith.constant 1.000000e+00 : f32
    %9 = vector.broadcast %cst_5 : f32 to vector<2048x128xf32>
    %10 = arith.addf %9, %8 : vector<2048x128xf32>
    %11 = arith.mulf %10, %4 : vector<2048x128xf32>
    %cst_6 = arith.constant 1.000000e-24 : f32
    %12 = vector.broadcast %cst_6 : f32 to vector<2048x128xf32>
    %13 = arith.maximumf %3, %12 : vector<2048x128xf32>
    %14 = math.log %13 : vector<2048x128xf32>
    %15 = arith.mulf %11, %14 : vector<2048x128xf32>
    %cst_7 = arith.constant 1.000000e+00 : f32
    %16 = vector.broadcast %cst_7 : f32 to vector<2048x128xf32>
    %17 = arith.subf %16, %4 : vector<2048x128xf32>
    %cst_8 = arith.constant 1.000000e+00 : f32
    %18 = vector.broadcast %cst_8 : f32 to vector<2048x128xf32>
    %19 = arith.subf %18, %3 : vector<2048x128xf32>
    %cst_9 = arith.constant 1.000000e-24 : f32
    %20 = vector.broadcast %cst_9 : f32 to vector<2048x128xf32>
    %21 = arith.maximumf %19, %20 : vector<2048x128xf32>
    %22 = math.log %21 : vector<2048x128xf32>
    %23 = arith.mulf %17, %22 : vector<2048x128xf32>
    %24 = arith.addf %15, %23 : vector<2048x128xf32>
    %c0_10 = arith.constant 0 : index
    %25 = memref.load %arg2[%c0_10] : memref<2xi32, #tpu.memory_space<smem>>
    %c1 = arith.constant 1 : index
    %26 = memref.load %arg2[%c1] : memref<2xi32, #tpu.memory_space<smem>>
    %27 = tpu.iota {dimensions = array<i32: 0>} : vector<2048x128xi32>
    %28 = tpu.iota {dimensions = array<i32: 1>} : vector<2048x128xi32>
    %c1_i32 = arith.constant 1 : i32
    %29 = arith.muli %arg0, %c1_i32 : i32
    %30 = arith.addi %29, %arg1 : i32
    %c2048_i32 = arith.constant 2048 : i32
    %31 = arith.muli %30, %c2048_i32 : i32
    %32 = vector.broadcast %31 : i32 to vector<2048x128xi32>
    %33 = arith.addi %32, %27 : vector<2048x128xi32>
    %34 = vector.broadcast %25 : i32 to vector<2048x128xi32>
    %35 = arith.cmpi slt, %33, %34 : vector<2048x128xi32>
    %36 = vector.broadcast %25 : i32 to vector<2048x128xi32>
    %37 = arith.cmpi eq, %33, %36 : vector<2048x128xi32>
    %38 = vector.broadcast %26 : i32 to vector<2048x128xi32>
    %39 = arith.cmpi slt, %28, %38 : vector<2048x128xi32>
    %40 = arith.andi %37, %39 : vector<2048x128xi1>
    %41 = arith.ori %35, %40 : vector<2048x128xi1>
    %cst_11 = arith.constant 0.000000e+00 : f32
    %42 = vector.broadcast %cst_11 : f32 to vector<2048x128xf32>
    %43 = arith.select %41, %24, %42 : vector<2048x128xi1>, vector<2048x128xf32>
    %c0_12 = arith.constant 0 : index
    %c0_13 = arith.constant 0 : index
    %44 = vector.load %arg6[%c0_12, %c0_13] : memref<8x128xf32, #tpu.memory_space<vmem>>, vector<8x128xf32>
    %45 = vector.shape_cast %43 : vector<2048x128xf32> to vector<256x8x128xf32>
    %cst_14 = arith.constant dense<0.000000e+00> : vector<8x128xf32>
    %46 = vector.multi_reduction <add>, %45, %cst_14 [0] : vector<256x8x128xf32> to vector<8x128xf32>
    %47 = arith.addf %44, %46 : vector<8x128xf32>
    %c0_15 = arith.constant 0 : index
    %c0_16 = arith.constant 0 : index
    %48 = vector.load %arg6[%c0_15, %c0_16] : memref<8x128xf32, #tpu.memory_space<vmem>>, vector<8x128xf32>
    tpu.vector_store %arg6[%c0_15, %c0_16], %47 {strides = array<i32>} : memref<8x128xf32, #tpu.memory_space<vmem>>, vector<8x128xf32>,
    return
  }
  func.func @transform_0(%arg0: i32, %arg1: i32, %arg2: memref<2xi32, #tpu.memory_space<smem>>, %arg3: memref<1xf32, #tpu.memory_space<smem>>) -> (i32, i32) {
    %c1_i32 = arith.constant 1 : i32
    %0 = arith.muli %arg0, %c1_i32 : i32
    %1 = arith.addi %0, %arg1 : i32
    %c0_i32 = arith.constant 0 : i32
    %2 = arith.minsi %1, %c0_i32 : i32
    %c0_i32_0 = arith.constant 0 : i32
    %c0_i32_1 = arith.constant 0 : i32
    return %2, %c0_i32_0 : i32, i32
  }
  func.func @transform_1(%arg0: i32, %arg1: i32, %arg2: memref<2xi32, #tpu.memory_space<smem>>, %arg3: memref<1xf32, #tpu.memory_space<smem>>) -> (i32, i32) {
    %c1_i32 = arith.constant 1 : i32
    %0 = arith.muli %arg0, %c1_i32 : i32
    %1 = arith.addi %0, %arg1 : i32
    %c0_i32 = arith.constant 0 : i32
    %2 = arith.minsi %1, %c0_i32 : i32
    %c0_i32_0 = arith.constant 0 : i32
    %c0_i32_1 = arith.constant 0 : i32
    return %2, %c0_i32_0 : i32, i32
  }
  func.func @transform_2(%arg0: i32, %arg1: i32, %arg2: memref<2xi32, #tpu.memory_space<smem>>, %arg3: memref<1xf32, #tpu.memory_space<smem>>) -> (i32, i32) {
    %c0_i32 = arith.constant 0 : i32
    %c0_i32_0 = arith.constant 0 : i32
    return %arg0, %c0_i32 : i32, i32
  }
}

</mosaic_0001>

<llo_original>
// kernel: tpu_custom_call.1
$region0: #{tpu_custom_call.1}
  #allocation0 [shape = 'u32[]', space=smem, size = 0x4, offset = 0x4, fixed_abs, tag = 'smem constant byte address 0x4 - core index']
  #allocation1 [shape = 'u32[144,128]{1,0:T(1,128)}', space=vmem, size = 0x12000, scoped, tag = 'internal scratch']
  #allocation2 [shape = 's32[1]{0}', space=sflag, size = 0x4, scoped, tag = 'scoped memory for tpu_custom_call.1']
  #allocation3 [shape = 'u8[512]{0}', space=smem, size = 0x200, scoped, tag = 'prefetched SMEM operand 0']
  #allocation4 [shape = 'f32[1]{0:T(128)S(6)}', space=smem, size = 0x200, scoped, tag = 'prefetched SMEM operand 1']
  %s0 = inlined_call_operand.vmem [shape: s32[2], index: 0, kind: input, shape index: {}]
  %s1 = inlined_call_operand.<no memory space> [shape: f32[1], index: 1, kind: input, shape index: {}]
  %s2 = inlined_call_operand.hbm [shape: f32[16,128], index: 2, kind: input, shape index: {}]
  %s3 = inlined_call_operand.hbm [shape: f32[16,128], index: 3, kind: input, shape index: {}]
  %s4 = inlined_call_operand.hbm [shape: f32[16,128], index: 4, kind: output, shape index: {}]
  %s5 = sld [smem:[#allocation0]]
  $region53: #{tpu_custom_call.1} parent=0
    _
  %s7 = ssub.s32 1, %s5
  %s8 = scalar_select 0, %s7, %s5
  %s9 = sshll.u32 %s0, 4
  %s10 = int_to_ptr.vmem [resolvable:$true] %s9
  %12 = dma.vmem_to_smem %s10, 16, [#allocation3], [#allocation2]
  %13 = sst [smem:[#allocation4]] %s1
  %14 = dma.done [#allocation2], 16
  %15 = sfence
  $region1: #{tpu_custom_call.1} parent=0
    #allocation5 [shape = 'u8[2097152]{0}', space=vmem, size = 0x200000, scoped, tag = 'input window, operand 2']
    #allocation6 [shape = 's32[2]{0}', space=sflag, size = 0x8, scoped, tag = 'scoped memory for tpu_custom_call.1']
    #allocation7 [shape = 's32[2]{0}', space=sflag, size = 0x8, scoped, tag = 'scoped memory for tpu_custom_call.1']
    #allocation8 [shape = 'u8[2097152]{0}', space=vmem, size = 0x200000, scoped, tag = 'input window, operand 3']
    #allocation9 [shape = 's32[2]{0}', space=sflag, size = 0x8, scoped, tag = 'scoped memory for tpu_custom_call.1']
    #allocation10 [shape = 'u8[8192]{0}', space=vmem, size = 0x2000, scoped, tag = 'output window, operand 0']
    %16 = vsyncpa [#allocation6], 0
    %s17 = scalar_lea.sflag [#allocation6], 1
    %18 = vsyncpa %s17, 0
    %19 = vsyncpa [#allocation9], 0
    %s20 = scalar_lea.sflag [#allocation9], 1
    %21 = vsyncpa %s20, 0
    %22 = vsyncpa [#allocation7], 0
    %s23 = scalar_lea.sflag [#allocation7], 1
    %24 = vsyncpa %s23, 0
    loop: start=0, step=1, limit=4
    $region2: #{tpu_custom_call.1} parent=1 // loop_pre_header
      _
    $region3: #{tpu_custom_call.1} parent=1 // loop_header
      %s26 = sphi 0, %s30
      %p27 = scmp.ge.s32.totalorder %s26, 4
      %s33 = sphi 0, %s45
      %s34 = sphi 0, %s41
      %s35 = sphi 0, %s33
      %s36 = sphi 0, %s34
      %s37 = sphi 0, %s35
      %s38 = sphi 0, %s36
      %s54 = sphi 0, %s56
      %s57 = sphi 0, %s54
      %s58 = sphi 0, %s57
      %s74 = sphi 0, %s58
      %s86 = sphi 0, %s88
      %s89 = sphi 0, %s86
      %s90 = sphi 0, %s89
      %s106 = sphi 0, %s90
      %s112 = sphi 0, %s114
      %s115 = sphi 0, %s112
      %s116 = sphi 0, %s115
      %s132 = sphi 0, %s116
    $region4: #{tpu_custom_call.1} parent=1 // loop_header_branch
      %29 = sbr.rel (%p27) target = $region8
    $region5: #{tpu_custom_call.1} parent=1 // loop_body
      %s31 = ssub.s32 %s26, 1
      %s32 = ssub.s32 %s26, 2
      %s39 = sadd.s32 1, %s34
      %p40 = scmp.ge.s32.totalorder %s39, 1
      %s41 = scalar_select %p40, 0, %s39
      %s42 = sadd.s32 1, %s33
      %s43 = scalar_select %p40, %s42, %s33
      %p44 = scmp.ge.s32.totalorder %s43, 2
      %s45 = scalar_select %p44, 0, %s43
      %s46 = sadd.s32 %s33, %s34
      %p47 = scmp.lt.s32.totalorder %s46, 0
      %s48 = scalar_select %p47, %s46, 0
      %s49 = sadd.s32 %s45, %s41
      %p50 = scmp.lt.s32.totalorder %s49, 0
      %s51 = scalar_select %p50, %s49, 0
      %s52 = ssub.s32 %s48, %s51
      %p53 = scmp.eq.s32.totalorder %s52, 0
      %s55 = sadd.s32 %s54, 1
      %s56 = scalar_select %p53, %s54, %s55
      %p59 = pneg %p53
      %p60 = scmp.eq.s32.totalorder %s26, 1
      %p61 = por %p59, %p60
      %p62 = scmp.ne.s32.totalorder %s54, %s57
      %p63 = scmp.eq.s32.totalorder %s26, 0
      %p64 = por %p62, %p63
      %p65 = scmp.ne.s32.totalorder %s54, %s57
      %p66 = scmp.eq.s32.totalorder %s31, 1
      %p67 = por %p65, %p66
      %p68 = scmp.ne.s32.totalorder %s57, %s58
      %p69 = scmp.eq.s32.totalorder %s31, 0
      %p70 = por %p68, %p69
      %p71 = scmp.ne.s32.totalorder %s57, %s58
      %p72 = scmp.eq.s32.totalorder %s32, 1
      %p73 = por %p71, %p72
      %p75 = scmp.ne.s32.totalorder %s58, %s74
      %p76 = scmp.eq.s32.totalorder %s32, 0
      %p77 = por %p75, %p76
      %s78 = sadd.s32 %s33, %s34
      %p79 = scmp.lt.s32.totalorder %s78, 0
      %s80 = scalar_select %p79, %s78, 0
      %s81 = sadd.s32 %s45, %s41
      %p82 = scmp.lt.s32.totalorder %s81, 0
      %s83 = scalar_select %p82, %s81, 0
      %s84 = ssub.s32 %s80, %s83
      %p85 = scmp.eq.s32.totalorder %s84, 0
      %s87 = sadd.s32 %s86, 1
      %s88 = scalar_select %p85, %s86, %s87
      %p91 = pneg %p85
      %p92 = scmp.eq.s32.totalorder %s26, 1
      %p93 = por %p91, %p92
      %p94 = scmp.ne.s32.totalorder %s86, %s89
      %p95 = scmp.eq.s32.totalorder %s26, 0
      %p96 = por %p94, %p95
      %p97 = scmp.ne.s32.totalorder %s86, %s89
      %p98 = scmp.eq.s32.totalorder %s31, 1
      %p99 = por %p97, %p98
      %p100 = scmp.ne.s32.totalorder %s89, %s90
      %p101 = scmp.eq.s32.totalorder %s31, 0
      %p102 = por %p100, %p101
      %p103 = scmp.ne.s32.totalorder %s89, %s90
      %p104 = scmp.eq.s32.totalorder %s32, 1
      %p105 = por %p103, %p104
      %p107 = scmp.ne.s32.totalorder %s90, %s106
      %p108 = scmp.eq.s32.totalorder %s32, 0
      %p109 = por %p107, %p108
      %s110 = ssub.s32 %s33, %s45
      %p111 = scmp.eq.s32.totalorder %s110, 0
      %s113 = sadd.s32 %s112, 1
      %s114 = scalar_select %p111, %s112, %s113
      %p117 = pneg %p111
      %p118 = scmp.eq.s32.totalorder %s26, 1
      %p119 = por %p117, %p118
      %p120 = scmp.ne.s32.totalorder %s112, %s115
      %p121 = scmp.eq.s32.totalorder %s26, 0
      %p122 = por %p120, %p121
      %p123 = scmp.ne.s32.totalorder %s112, %s115
      %p124 = scmp.eq.s32.totalorder %s31, 1
      %p125 = por %p123, %p124
      %p126 = scmp.ne.s32.totalorder %s115, %s116
      %p127 = scmp.eq.s32.totalorder %s31, 0
      %p128 = por %p126, %p127
      %p129 = scmp.ne.s32.totalorder %s115, %s116
      %p130 = scmp.eq.s32.totalorder %s32, 1
      %p131 = por %p129, %p130
      %p133 = scmp.ne.s32.totalorder %s116, %s132
      %p134 = scmp.eq.s32.totalorder %s32, 0
      %p135 = por %p133, %p134
      %p136 = scmp.le.s32.totalorder 1, %s26
      %p137 = scmp.lt.s32.totalorder %s26, 3
      %p138 = pnand %p136, %p137
      %p139 = pneg %p138
      // Predicated region
      $region9: #{tpu_custom_call.1} parent=5 // pred_check
        _
      $region10: #{tpu_custom_call.1} parent=5 // pred_check_branch
        %141 = sbr.rel (%p138) target = $region12
      $region11: #{tpu_custom_call.1} parent=5 // pred_region
        %s142 = ssub.s32 %s26, 1
      $region12: #{tpu_custom_call.1} parent=5 // pred_fallthru
        _
      %p143 = scmp.lt.s32.totalorder %s26, 2
      // Predicated region
      $region13: #{tpu_custom_call.1} parent=5 // pred_check
        %p144 = pneg %p143
      $region14: #{tpu_custom_call.1} parent=5 // pred_check_branch
        %146 = sbr.rel (%p144) target = $region16
      $region15: #{tpu_custom_call.1} parent=5 // pred_region
        // Predicated region
        $region17: #{tpu_custom_call.1} parent=15 // pred_check
          %p147 = pneg %p64
        $region18: #{tpu_custom_call.1} parent=15 // pred_check_branch
          %149 = sbr.rel (%p147) target = $region20
        $region19: #{tpu_custom_call.1} parent=15 // pred_region
          %s150 = sand.u32 %s54, 1
          %s151 = scalar_lea.sflag [#allocation6], %s150
          %s152 = sand.u32 %s54, 1
          %s153 = smul.addr %s152, 2048
          %s154 = scalar_lea.vmem [#allocation5], %s153
          %s155 = sadd.s32 %s33, %s34
          %p156 = scmp.lt.s32.totalorder %s155, 0
          %s157 = scalar_select %p156, %s155, 0
          %s158 = smul.u32 256, %s157
          %s159 = ssub.s32 2, %s158
          %s160 = smul.u32 128, %s159
          %s162 = ssub.s32 32768, %s160
          %163 = vsyncadd %s151, %s162
          %p164 = scmp.ne.s32.totalorder 0, %s160
          %s165 = smul.addr %s158, 128
          %s166 = scalar_lea.hbm %s2, %s165
          %s167 = smul.u32 8, %s159
          %s168 = sshll.u32 %s154, 4
          %s169 = int_to_ptr.vmem [resolvable:$true] %s168
          %s170 = sshll.u32 %s167, 4
          %174 = dma.hbm_to_vmem [thread:$0]  (%p164), %s166, %s170, %s169, %s151, 128, 128, 8
        $region20: #{tpu_custom_call.1} parent=15 // pred_fallthru
          _
        // Predicated region
        $region21: #{tpu_custom_call.1} parent=15 // pred_check
          %p175 = pneg %p96
        $region22: #{tpu_custom_call.1} parent=15 // pred_check_branch
          %177 = sbr.rel (%p175) target = $region24
        $region23: #{tpu_custom_call.1} parent=15 // pred_region
          %s178 = sand.u32 %s86, 1
          %s179 = scalar_lea.sflag [#allocation9], %s178
          %s180 = sand.u32 %s86, 1
          %s181 = smul.addr %s180, 2048
          %s182 = scalar_lea.vmem [#allocation8], %s181
          %s183 = sadd.s32 %s33, %s34
          %p184 = scmp.lt.s32.totalorder %s183, 0
          %s185 = scalar_select %p184, %s183, 0
          %s186 = smul.u32 256, %s185
          %s187 = ssub.s32 2, %s186
          %s188 = smul.u32 128, %s187
          %s190 = ssub.s32 32768, %s188
          %191 = vsyncadd %s179, %s190
          %p192 = scmp.ne.s32.totalorder 0, %s188
          %s193 = smul.addr %s186, 128
          %s194 = scalar_lea.hbm %s3, %s193
          %s195 = smul.u32 8, %s187
          %s196 = sshll.u32 %s182, 4
          %s197 = int_to_ptr.vmem [resolvable:$true] %s196
          %s198 = sshll.u32 %s195, 4
          %202 = dma.hbm_to_vmem [thread:$0]  (%p192), %s194, %s198, %s197, %s179, 128, 128, 8
        $region24: #{tpu_custom_call.1} parent=15 // pred_fallthru
          _
      $region16: #{tpu_custom_call.1} parent=5 // pred_fallthru
        _
      %p203 = scmp.le.s32.totalorder 1, %s26
      %p204 = scmp.lt.s32.totalorder %s26, 3
      %p205 = pnand %p203, %p204
      %p206 = pneg %p205
      // Predicated region
      $region25: #{tpu_custom_call.1} parent=5 // pred_check
        _
      $region26: #{tpu_custom_call.1} parent=5 // pred_check_branch
        %208 = sbr.rel (%p205) target = $region28
      $region27: #{tpu_custom_call.1} parent=5 // pred_region
        %s209 = ssub.s32 %s26, 1
        %s210 = sand.u32 %s57, 1
        %s211 = scalar_lea.sflag [#allocation6], %s210
        %s212 = sand.u32 %s57, 1
        %s213 = smul.addr %s212, 2048
        %s214 = scalar_lea.vmem [#allocation5], %s213
        // Predicated region
        $region29: #{tpu_custom_call.1} parent=27 // pred_check
          %p215 = pneg %p70
        $region30: #{tpu_custom_call.1} parent=27 // pred_check_branch
          %217 = sbr.rel (%p215) target = $region32
        $region31: #{tpu_custom_call.1} parent=27 // pred_region
          %218 = dma.done %s211, 32768
        $region32: #{tpu_custom_call.1} parent=27 // pred_fallthru
          _
        %s219 = sand.u32 %s89, 1
        %s220 = scalar_lea.sflag [#allocation9], %s219
        %s221 = sand.u32 %s89, 1
        %s222 = smul.addr %s221, 2048
        %s223 = scalar_lea.vmem [#allocation8], %s222
        // Predicated region
        $region33: #{tpu_custom_call.1} parent=27 // pred_check
          %p224 = pneg %p102
        $region34: #{tpu_custom_call.1} parent=27 // pred_check_branch
          %226 = sbr.rel (%p224) target = $region36
        $region35: #{tpu_custom_call.1} parent=27 // pred_region
          %227 = dma.done %s220, 32768
        $region36: #{tpu_custom_call.1} parent=27 // pred_fallthru
          _
        %s228 = sand.u32 %s57, 1
        %s229 = scalar_lea.sflag [#allocation6], %s228
        %s230 = sand.u32 %s57, 1
        %s231 = smul.addr %s230, 2048
        %s232 = scalar_lea.vmem [#allocation5], %s231
        %p233 = pneg %p70
        %p234 = pneg %p67
        %s235 = sand.u32 %s89, 1
        %s236 = scalar_lea.sflag [#allocation9], %s235
        %s237 = sand.u32 %s89, 1
        %s238 = smul.addr %s237, 2048
        %s239 = scalar_lea.vmem [#allocation8], %s238
        %p240 = pneg %p102
        %p241 = pneg %p99
        %p242 = pneg %p128
        %p243 = pneg %p125
        %s244 = sand.u32 %s115, 1
        %s245 = scalar_lea.sflag [#allocation7], %s244
        %s246 = sand.u32 %s115, 1
        %s247 = smul.addr %s246, 8
        %s248 = scalar_lea.vmem [#allocation10], %s247
        %s249 = sadd.s32 %s35, %s36
        %p250 = scmp.lt.s32.totalorder %s249, 0
        %s251 = scalar_select %p250, %s249, 0
        %s252 = smul.u32 256, %s251
        %s253 = ssub.s32 2, %s252
        %s254 = smul.u32 128, %s253
        %s255 = sadd.s32 %s35, %s36
        %p256 = scmp.lt.s32.totalorder %s255, 0
        %s257 = scalar_select %p256, %s255, 0
        %s258 = smul.u32 256, %s257
        %s259 = ssub.s32 2, %s258
        %s260 = smul.u32 128, %s259
        %p261 = scmp.eq.s32.totalorder %s36, 0
        // Predicated region
        $region37: #{tpu_custom_call.1} parent=27 // pred_check
          %p262 = pneg %p261
        $region38: #{tpu_custom_call.1} parent=27 // pred_check_branch
          %264 = sbr.rel (%p262) target = $region40
        $region39: #{tpu_custom_call.1} parent=27 // pred_region
          %265 = vst [vmem:[%s248] sm:$0xff] 0.0
        $region40: #{tpu_custom_call.1} parent=27 // pred_fallthru
          _
        %v266 = vld [vmem:[%s214] sm:$0xff]
        %v267 = vld [vmem:[%s214 + $0x8] sm:$0xff]
        %v268 = vld [vmem:[%s214 + $0x10] sm:$0xff]
        %v269 = vld [vmem:[%s214 + $0x18] sm:$0xff]
        %v270 = vld [vmem:[%s214 + $0x20] sm:$0xff]
        %v271 = vld [vmem:[%s214 + $0x28] sm:$0xff]
        %v272 = vld [vmem:[%s214 + $0x30] sm:$0xff]
        %v273 = vld [vmem:[%s214 + $0x38] sm:$0xff]
        %v274 = vld [vmem:[%s214 + $0x40] sm:$0xff]
        %v275 = vld [vmem:[%s214 + $0x48] sm:$0xff]
        %v276 = vld [vmem:[%s214 + $0x50] sm:$0xff]
        %v277 = vld [vmem:[%s214 + $0x58] sm:$0xff]
        %v278 = vld [vmem:[%s214 + $0x60] sm:$0xff]
        %v279 = vld [vmem:[%s214 + $0x68] sm:$0xff]
        %v280 = vld [vmem:[%s214 + $0x70] sm:$0xff]
        %v281 = vld [vmem:[%s214 + $0x78] sm:$0xff]
        %v282 = vld [vmem:[%s214 + $0x80] sm:$0xff]
        %v283 = vld [vmem:[%s214 + $0x88] sm:$0xff]
        %v284 = vld [vmem:[%s214 + $0x90] sm:$0xff]
        %v285 = vld [vmem:[%s214 + $0x98] sm:$0xff]
        %v286 = vld [vmem:[%s214 + $0xa0] sm:$0xff]
        %v287 = vld [vmem:[%s214 + $0xa8] sm:$0xff]
        %v288 = vld [vmem:[%s214 + $0xb0] sm:$0xff]
        %v289 = vld [vmem:[%s214 + $0xb8] sm:$0xff]
        %v290 = vld [vmem:[%s214 + $0xc0] sm:$0xff]
        %v291 = vld [vmem:[%s214 + $0xc8] sm:$0xff]
        %v292 = vld [vmem:[%s214 + $0xd0] sm:$0xff]
        %v293 = vld [vmem:[%s214 + $0xd8] sm:$0xff]
        %v294 = vld [vmem:[%s214 + $0xe0] sm:$0xff]
        %v295 = vld [vmem:[%s214 + $0xe8] sm:$0xff]
        %v296 = vld [vmem:[%s214 + $0xf0] sm:$0xff]
        %v297 = vld [vmem:[%s214 + $0xf8] sm:$0xff]
        %v298 = vld [vmem:[%s214 + $0x100] sm:$0xff]
        %v299 = vld [vmem:[%s214 + $0x108] sm:$0xff]
        %v300 = vld [vmem:[%s214 + $0x110] sm:$0xff]
        %v301 = vld [vmem:[%s214 + $0x118] sm:$0xff]
        %v302 = vld [vmem:[%s214 + $0x120] sm:$0xff]
        %v303 = vld [vmem:[%s214 + $0x128] sm:$0xff]
        %v304 = vld [vmem:[%s214 + $0x130] sm:$0xff]
        %v305 = vld [vmem:[%s214 + $0x138] sm:$0xff]
        %v306 = vld [vmem:[%s214 + $0x140] sm:$0xff]
        %v307 = vld [vmem:[%s214 + $0x148] sm:$0xff]
        %v308 = vld [vmem:[%s214 + $0x150] sm:$0xff]
        %v309 = vld [vmem:[%s214 + $0x158] sm:$0xff]
        %v310 = vld [vmem:[%s214 + $0x160] sm:$0xff]
        %v311 = vld [vmem:[%s214 + $0x168] sm:$0xff]
        %v312 = vld [vmem:[%s214 + $0x170] sm:$0xff]
        %v313 = vld [vmem:[%s214 + $0x178] sm:$0xff]
        %v314 = vld [vmem:[%s214 + $0x180] sm:$0xff]
        %v315 = vld [vmem:[%s214 + $0x188] sm:$0xff]
        %v316 = vld [vmem:[%s214 + $0x190] sm:$0xff]
        %v317 = vld [vmem:[%s214 + $0x198] sm:$0xff]
        %v318 = vld [vmem:[%s214 + $0x1a0] sm:$0xff]
        %v319 = vld [vmem:[%s214 + $0x1a8] sm:$0xff]
        %v320 = vld [vmem:[%s214 + $0x1b0] sm:$0xff]
        %v321 = vld [vmem:[%s214 + $0x1b8] sm:$0xff]
        %v322 = vld [vmem:[%s214 + $0x1c0] sm:$0xff]
        %v323 = vld [vmem:[%s214 + $0x1c8] sm:$0xff]
        %v324 = vld [vmem:[%s214 + $0x1d0] sm:$0xff]
        %v325 = vld [vmem:[%s214 + $0x1d8] sm:$0xff]
        %v326 = vld [vmem:[%s214 + $0x1e0] sm:$0xff]
        %v327 = vld [vmem:[%s214 + $0x1e8] sm:$0xff]
        %v328 = vld [vmem:[%s214 + $0x1f0] sm:$0xff]
        %v329 = vld [vmem:[%s214 + $0x1f8] sm:$0xff]
        %v330 = vld [vmem:[%s214 + $0x200] sm:$0xff]
        %v331 = vld [vmem:[%s214 + $0x208] sm:$0xff]
        %v332 = vld [vmem:[%s214 + $0x210] sm:$0xff]
        %v333 = vld [vmem:[%s214 + $0x218] sm:$0xff]
        %v334 = vld [vmem:[%s214 + $0x220] sm:$0xff]
        %v335 = vld [vmem:[%s214 + $0x228] sm:$0xff]
        %v336 = vld [vmem:[%s214 + $0x230] sm:$0xff]
        %v337 = vld [vmem:[%s214 + $0x238] sm:$0xff]
        %v338 = vld [vmem:[%s214 + $0x240] sm:$0xff]
        %v339 = vld [vmem:[%s214 + $0x248] sm:$0xff]
        %v340 = vld [vmem:[%s214 + $0x250] sm:$0xff]
        %v341 = vld [vmem:[%s214 + $0x258] sm:$0xff]
        %v342 = vld [vmem:[%s214 + $0x260] sm:$0xff]
        %v343 = vld [vmem:[%s214 + $0x268] sm:$0xff]
        %v344 = vld [vmem:[%s214 + $0x270] sm:$0xff]
        %v345 = vld [vmem:[%s214 + $0x278] sm:$0xff]
        %v346 = vld [vmem:[%s214 + $0x280] sm:$0xff]
        %v347 = vld [vmem:[%s214 + $0x288] sm:$0xff]
        %v348 = vld [vmem:[%s214 + $0x290] sm:$0xff]
        %v349 = vld [vmem:[%s214 + $0x298] sm:$0xff]
        %v350 = vld [vmem:[%s214 + $0x2a0] sm:$0xff]
        %v351 = vld [vmem:[%s214 + $0x2a8] sm:$0xff]
        %v352 = vld [vmem:[%s214 + $0x2b0] sm:$0xff]
        %v353 = vld [vmem:[%s214 + $0x2b8] sm:$0xff]
        %v354 = vld [vmem:[%s214 + $0x2c0] sm:$0xff]
        %v355 = vld [vmem:[%s214 + $0x2c8] sm:$0xff]
        %v356 = vld [vmem:[%s214 + $0x2d0] sm:$0xff]
        %v357 = vld [vmem:[%s214 + $0x2d8] sm:$0xff]
        %v358 = vld [vmem:[%s214 + $0x2e0] sm:$0xff]
        %v359 = vld [vmem:[%s214 + $0x2e8] sm:$0xff]
        %v360 = vld [vmem:[%s214 + $0x2f0] sm:$0xff]
        %v361 = vld [vmem:[%s214 + $0x2f8] sm:$0xff]
        %v362 = vld [vmem:[%s214 + $0x300] sm:$0xff]
        %v363 = vld [vmem:[%s214 + $0x308] sm:$0xff]
        %v364 = vld [vmem:[%s214 + $0x310] sm:$0xff]
        %v365 = vld [vmem:[%s214 + $0x318] sm:$0xff]
        %v366 = vld [vmem:[%s214 + $0x320] sm:$0xff]
        %v367 = vld [vmem:[%s214 + $0x328] sm:$0xff]
        %v368 = vld [vmem:[%s214 + $0x330] sm:$0xff]
        %v369 = vld [vmem:[%s214 + $0x338] sm:$0xff]
        %v370 = vld [vmem:[%s214 + $0x340] sm:$0xff]
        %v371 = vld [vmem:[%s214 + $0x348] sm:$0xff]
        %v372 = vld [vmem:[%s214 + $0x350] sm:$0xff]
        %v373 = vld [vmem:[%s214 + $0x358] sm:$0xff]
        %v374 = vld [vmem:[%s214 + $0x360] sm:$0xff]
        %v375 = vld [vmem:[%s214 + $0x368] sm:$0xff]
        %v376 = vld [vmem:[%s214 + $0x370] sm:$0xff]
        %v377 = vld [vmem:[%s214 + $0x378] sm:$0xff]
        %v378 = vld [vmem:[%s214 + $0x380] sm:$0xff]
        %v379 = vld [vmem:[%s214 + $0x388] sm:$0xff]
        %v380 = vld [vmem:[%s214 + $0x390] sm:$0xff]
        %v381 = vld [vmem:[%s214 + $0x398] sm:$0xff]
        %v382 = vld [vmem:[%s214 + $0x3a0] sm:$0xff]
        %v383 = vld [vmem:[%s214 + $0x3a8] sm:$0xff]
        %v384 = vld [vmem:[%s214 + $0x3b0] sm:$0xff]
        %v385 = vld [vmem:[%s214 + $0x3b8] sm:$0xff]
        %v386 = vld [vmem:[%s214 + $0x3c0] sm:$0xff]
        %v387 = vld [vmem:[%s214 + $0x3c8] sm:$0xff]
        %v388 = vld [vmem:[%s214 + $0x3d0] sm:$0xff]
        %v389 = vld [vmem:[%s214 + $0x3d8] sm:$0xff]
        %v390 = vld [vmem:[%s214 + $0x3e0] sm:$0xff]
        %v391 = vld [vmem:[%s214 + $0x3e8] sm:$0xff]
        %v392 = vld [vmem:[%s214 + $0x3f0] sm:$0xff]
        %v393 = vld [vmem:[%s214 + $0x3f8] sm:$0xff]
        %v394 = vld [vmem:[%s214 + $0x400] sm:$0xff]
        %v395 = vld [vmem:[%s214 + $0x408] sm:$0xff]
        %v396 = vld [vmem:[%s214 + $0x410] sm:$0xff]
        %v397 = vld [vmem:[%s214 + $0x418] sm:$0xff]
        %v398 = vld [vmem:[%s214 + $0x420] sm:$0xff]
        %v399 = vld [vmem:[%s214 + $0x428] sm:$0xff]
        %v400 = vld [vmem:[%s214 + $0x430] sm:$0xff]
        %v401 = vld [vmem:[%s214 + $0x438] sm:$0xff]
        %v402 = vld [vmem:[%s214 + $0x440] sm:$0xff]
        %v403 = vld [vmem:[%s214 + $0x448] sm:$0xff]
        %v404 = vld [vmem:[%s214 + $0x450] sm:$0xff]
        %v405 = vld [vmem:[%s214 + $0x458] sm:$0xff]
        %v406 = vld [vmem:[%s214 + $0x460] sm:$0xff]
        %v407 = vld [vmem:[%s214 + $0x468] sm:$0xff]
        %v408 = vld [vmem:[%s214 + $0x470] sm:$0xff]
        %v409 = vld [vmem:[%s214 + $0x478] sm:$0xff]
        %v410 = vld [vmem:[%s214 + $0x480] sm:$0xff]
        %v411 = vld [vmem:[%s214 + $0x488] sm:$0xff]
        %v412 = vld [vmem:[%s214 + $0x490] sm:$0xff]
        %v413 = vld [vmem:[%s214 + $0x498] sm:$0xff]
        %v414 = vld [vmem:[%s214 + $0x4a0] sm:$0xff]
        %v415 = vld [vmem:[%s214 + $0x4a8] sm:$0xff]
        %v416 = vld [vmem:[%s214 + $0x4b0] sm:$0xff]
        %v417 = vld [vmem:[%s214 + $0x4b8] sm:$0xff]
        %v418 = vld [vmem:[%s214 + $0x4c0] sm:$0xff]
        %v419 = vld [vmem:[%s214 + $0x4c8] sm:$0xff]
        %v420 = vld [vmem:[%s214 + $0x4d0] sm:$0xff]
        %v421 = vld [vmem:[%s214 + $0x4d8] sm:$0xff]
        %v422 = vld [vmem:[%s214 + $0x4e0] sm:$0xff]
        %v423 = vld [vmem:[%s214 + $0x4e8] sm:$0xff]
        %v424 = vld [vmem:[%s214 + $0x4f0] sm:$0xff]
        %v425 = vld [vmem:[%s214 + $0x4f8] sm:$0xff]
        %v426 = vld [vmem:[%s214 + $0x500] sm:$0xff]
        %v427 = vld [vmem:[%s214 + $0x508] sm:$0xff]
        %v428 = vld [vmem:[%s214 + $0x510] sm:$0xff]
        %v429 = vld [vmem:[%s214 + $0x518] sm:$0xff]
        %v430 = vld [vmem:[%s214 + $0x520] sm:$0xff]
        %v431 = vld [vmem:[%s214 + $0x528] sm:$0xff]
        %v432 = vld [vmem:[%s214 + $0x530] sm:$0xff]
        %v433 = vld [vmem:[%s214 + $0x538] sm:$0xff]
        %v434 = vld [vmem:[%s214 + $0x540] sm:$0xff]
        %v435 = vld [vmem:[%s214 + $0x548] sm:$0xff]
        %v436 = vld [vmem:[%s214 + $0x550] sm:$0xff]
        %v437 = vld [vmem:[%s214 + $0x558] sm:$0xff]
        %v438 = vld [vmem:[%s214 + $0x560] sm:$0xff]
        %v439 = vld [vmem:[%s214 + $0x568] sm:$0xff]
        %v440 = vld [vmem:[%s214 + $0x570] sm:$0xff]
        %v441 = vld [vmem:[%s214 + $0x578] sm:$0xff]
        %v442 = vld [vmem:[%s214 + $0x580] sm:$0xff]
        %v443 = vld [vmem:[%s214 + $0x588] sm:$0xff]
        %v444 = vld [vmem:[%s214 + $0x590] sm:$0xff]
        %v445 = vld [vmem:[%s214 + $0x598] sm:$0xff]
        %v446 = vld [vmem:[%s214 + $0x5a0] sm:$0xff]
        %v447 = vld [vmem:[%s214 + $0x5a8] sm:$0xff]
        %v448 = vld [vmem:[%s214 + $0x5b0] sm:$0xff]
        %v449 = vld [vmem:[%s214 + $0x5b8] sm:$0xff]
        %v450 = vld [vmem:[%s214 + $0x5c0] sm:$0xff]
        %v451 = vld [vmem:[%s214 + $0x5c8] sm:$0xff]
        %v452 = vld [vmem:[%s214 + $0x5d0] sm:$0xff]
        %v453 = vld [vmem:[%s214 + $0x5d8] sm:$0xff]
        %v454 = vld [vmem:[%s214 + $0x5e0] sm:$0xff]
        %v455 = vld [vmem:[%s214 + $0x5e8] sm:$0xff]
        %v456 = vld [vmem:[%s214 + $0x5f0] sm:$0xff]
        %v457 = vld [vmem:[%s214 + $0x5f8] sm:$0xff]
        %v458 = vld [vmem:[%s214 + $0x600] sm:$0xff]
        %v459 = vld [vmem:[%s214 + $0x608] sm:$0xff]
        %v460 = vld [vmem:[%s214 + $0x610] sm:$0xff]
        %v461 = vld [vmem:[%s214 + $0x618] sm:$0xff]
        %v462 = vld [vmem:[%s214 + $0x620] sm:$0xff]
        %v463 = vld [vmem:[%s214 + $0x628] sm:$0xff]
        %v464 = vld [vmem:[%s214 + $0x630] sm:$0xff]
        %v465 = vld [vmem:[%s214 + $0x638] sm:$0xff]
        %v466 = vld [vmem:[%s214 + $0x640] sm:$0xff]
        %v467 = vld [vmem:[%s214 + $0x648] sm:$0xff]
        %v468 = vld [vmem:[%s214 + $0x650] sm:$0xff]
        %v469 = vld [vmem:[%s214 + $0x658] sm:$0xff]
        %v470 = vld [vmem:[%s214 + $0x660] sm:$0xff]
        %v471 = vld [vmem:[%s214 + $0x668] sm:$0xff]
        %v472 = vld [vmem:[%s214 + $0x670] sm:$0xff]
        %v473 = vld [vmem:[%s214 + $0x678] sm:$0xff]
        %v474 = vld [vmem:[%s214 + $0x680] sm:$0xff]
        %v475 = vld [vmem:[%s214 + $0x688] sm:$0xff]
        %v476 = vld [vmem:[%s214 + $0x690] sm:$0xff]
        %v477 = vld [vmem:[%s214 + $0x698] sm:$0xff]
        %v478 = vld [vmem:[%s214 + $0x6a0] sm:$0xff]
        %v479 = vld [vmem:[%s214 + $0x6a8] sm:$0xff]
        %v480 = vld [vmem:[%s214 + $0x6b0] sm:$0xff]
        %v481 = vld [vmem:[%s214 + $0x6b8] sm:$0xff]
        %v482 = vld [vmem:[%s214 + $0x6c0] sm:$0xff]
        %v483 = vld [vmem:[%s214 + $0x6c8] sm:$0xff]
        %v484 = vld [vmem:[%s214 + $0x6d0] sm:$0xff]
        %v485 = vld [vmem:[%s214 + $0x6d8] sm:$0xff]
        %v486 = vld [vmem:[%s214 + $0x6e0] sm:$0xff]
        %v487 = vld [vmem:[%s214 + $0x6e8] sm:$0xff]
        %v488 = vld [vmem:[%s214 + $0x6f0] sm:$0xff]
        %v489 = vld [vmem:[%s214 + $0x6f8] sm:$0xff]
        %v490 = vld [vmem:[%s214 + $0x700] sm:$0xff]
        %v491 = vld [vmem:[%s214 + $0x708] sm:$0xff]
        %v492 = vld [vmem:[%s214 + $0x710] sm:$0xff]
        %v493 = vld [vmem:[%s214 + $0x718] sm:$0xff]
        %v494 = vld [vmem:[%s214 + $0x720] sm:$0xff]
        %v495 = vld [vmem:[%s214 + $0x728] sm:$0xff]
        %v496 = vld [vmem:[%s214 + $0x730] sm:$0xff]
        %v497 = vld [vmem:[%s214 + $0x738] sm:$0xff]
        %v498 = vld [vmem:[%s214 + $0x740] sm:$0xff]
        %v499 = vld [vmem:[%s214 + $0x748] sm:$0xff]
        %v500 = vld [vmem:[%s214 + $0x750] sm:$0xff]
        %v501 = vld [vmem:[%s214 + $0x758] sm:$0xff]
        %v502 = vld [vmem:[%s214 + $0x760] sm:$0xff]
        %v503 = vld [vmem:[%s214 + $0x768] sm:$0xff]
        %v504 = vld [vmem:[%s214 + $0x770] sm:$0xff]
        %v505 = vld [vmem:[%s214 + $0x778] sm:$0xff]
        %v506 = vld [vmem:[%s214 + $0x780] sm:$0xff]
        %v507 = vld [vmem:[%s214 + $0x788] sm:$0xff]
        %v508 = vld [vmem:[%s214 + $0x790] sm:$0xff]
        %v509 = vld [vmem:[%s214 + $0x798] sm:$0xff]
        %v510 = vld [vmem:[%s214 + $0x7a0] sm:$0xff]
        %v511 = vld [vmem:[%s214 + $0x7a8] sm:$0xff]
        %v512 = vld [vmem:[%s214 + $0x7b0] sm:$0xff]
        %v513 = vld [vmem:[%s214 + $0x7b8] sm:$0xff]
        %v514 = vld [vmem:[%s214 + $0x7c0] sm:$0xff]
        %v515 = vld [vmem:[%s214 + $0x7c8] sm:$0xff]
        %v516 = vld [vmem:[%s214 + $0x7d0] sm:$0xff]
        %v517 = vld [vmem:[%s214 + $0x7d8] sm:$0xff]
        %v518 = vld [vmem:[%s214 + $0x7e0] sm:$0xff]
        %v519 = vld [vmem:[%s214 + $0x7e8] sm:$0xff]
        %v520 = vld [vmem:[%s214 + $0x7f0] sm:$0xff]
        %v521 = vld [vmem:[%s214 + $0x7f8] sm:$0xff]
        %v522 = vld [vmem:[%s223] sm:$0xff]
        %v523 = vld [vmem:[%s223 + $0x8] sm:$0xff]
        %v524 = vld [vmem:[%s223 + $0x10] sm:$0xff]
        %v525 = vld [vmem:[%s223 + $0x18] sm:$0xff]
        %v526 = vld [vmem:[%s223 + $0x20] sm:$0xff]
        %v527 = vld [vmem:[%s223 + $0x28] sm:$0xff]
        %v528 = vld [vmem:[%s223 + $0x30] sm:$0xff]
        %v529 = vld [vmem:[%s223 + $0x38] sm:$0xff]
        %v530 = vld [vmem:[%s223 + $0x40] sm:$0xff]
        %v531 = vld [vmem:[%s223 + $0x48] sm:$0xff]
        %v532 = vld [vmem:[%s223 + $0x50] sm:$0xff]
        %v533 = vld [vmem:[%s223 + $0x58] sm:$0xff]
        %v534 = vld [vmem:[%s223 + $0x60] sm:$0xff]
        %v535 = vld [vmem:[%s223 + $0x68] sm:$0xff]
        %v536 = vld [vmem:[%s223 + $0x70] sm:$0xff]
        %v537 = vld [vmem:[%s223 + $0x78] sm:$0xff]
        %v538 = vld [vmem:[%s223 + $0x80] sm:$0xff]
        %v539 = vld [vmem:[%s223 + $0x88] sm:$0xff]
        %v540 = vld [vmem:[%s223 + $0x90] sm:$0xff]
        %v541 = vld [vmem:[%s223 + $0x98] sm:$0xff]
        %v542 = vld [vmem:[%s223 + $0xa0] sm:$0xff]
        %v543 = vld [vmem:[%s223 + $0xa8] sm:$0xff]
        %v544 = vld [vmem:[%s223 + $0xb0] sm:$0xff]
        %v545 = vld [vmem:[%s223 + $0xb8] sm:$0xff]
        %v546 = vld [vmem:[%s223 + $0xc0] sm:$0xff]
        %v547 = vld [vmem:[%s223 + $0xc8] sm:$0xff]
        %v548 = vld [vmem:[%s223 + $0xd0] sm:$0xff]
        %v549 = vld [vmem:[%s223 + $0xd8] sm:$0xff]
        %v550 = vld [vmem:[%s223 + $0xe0] sm:$0xff]
        %v551 = vld [vmem:[%s223 + $0xe8] sm:$0xff]
        %v552 = vld [vmem:[%s223 + $0xf0] sm:$0xff]
        %v553 = vld [vmem:[%s223 + $0xf8] sm:$0xff]
        %v554 = vld [vmem:[%s223 + $0x100] sm:$0xff]
        %v555 = vld [vmem:[%s223 + $0x108] sm:$0xff]
        %v556 = vld [vmem:[%s223 + $0x110] sm:$0xff]
        %v557 = vld [vmem:[%s223 + $0x118] sm:$0xff]
        %v558 = vld [vmem:[%s223 + $0x120] sm:$0xff]
        %v559 = vld [vmem:[%s223 + $0x128] sm:$0xff]
        %v560 = vld [vmem:[%s223 + $0x130] sm:$0xff]
        %v561 = vld [vmem:[%s223 + $0x138] sm:$0xff]
        %v562 = vld [vmem:[%s223 + $0x140] sm:$0xff]
        %v563 = vld [vmem:[%s223 + $0x148] sm:$0xff]
        %v564 = vld [vmem:[%s223 + $0x150] sm:$0xff]
        %v565 = vld [vmem:[%s223 + $0x158] sm:$0xff]
        %v566 = vld [vmem:[%s223 + $0x160] sm:$0xff]
        %v567 = vld [vmem:[%s223 + $0x168] sm:$0xff]
        %v568 = vld [vmem:[%s223 + $0x170] sm:$0xff]
        %v569 = vld [vmem:[%s223 + $0x178] sm:$0xff]
        %v570 = vld [vmem:[%s223 + $0x180] sm:$0xff]
        %v571 = vld [vmem:[%s223 + $0x188] sm:$0xff]
        %v572 = vld [vmem:[%s223 + $0x190] sm:$0xff]
        %v573 = vld [vmem:[%s223 + $0x198] sm:$0xff]
        %v574 = vld [vmem:[%s223 + $0x1a0] sm:$0xff]
        %v575 = vld [vmem:[%s223 + $0x1a8] sm:$0xff]
        %v576 = vld [vmem:[%s223 + $0x1b0] sm:$0xff]
        %v577 = vld [vmem:[%s223 + $0x1b8] sm:$0xff]
        %v578 = vld [vmem:[%s223 + $0x1c0] sm:$0xff]
        %v579 = vld [vmem:[%s223 + $0x1c8] sm:$0xff]
        %v580 = vld [vmem:[%s223 + $0x1d0] sm:$0xff]
        %v581 = vld [vmem:[%s223 + $0x1d8] sm:$0xff]
        %v582 = vld [vmem:[%s223 + $0x1e0] sm:$0xff]
        %v583 = vld [vmem:[%s223 + $0x1e8] sm:$0xff]
        %v584 = vld [vmem:[%s223 + $0x1f0] sm:$0xff]
        %v585 = vld [vmem:[%s223 + $0x1f8] sm:$0xff]
        %v586 = vld [vmem:[%s223 + $0x200] sm:$0xff]
        %v587 = vld [vmem:[%s223 + $0x208] sm:$0xff]
        %v588 = vld [vmem:[%s223 + $0x210] sm:$0xff]
        %v589 = vld [vmem:[%s223 + $0x218] sm:$0xff]
        %v590 = vld [vmem:[%s223 + $0x220] sm:$0xff]
        %v591 = vld [vmem:[%s223 + $0x228] sm:$0xff]
        %v592 = vld [vmem:[%s223 + $0x230] sm:$0xff]
        %v593 = vld [vmem:[%s223 + $0x238] sm:$0xff]
        %v594 = vld [vmem:[%s223 + $0x240] sm:$0xff]
        %v595 = vld [vmem:[%s223 + $0x248] sm:$0xff]
        %v596 = vld [vmem:[%s223 + $0x250] sm:$0xff]
        %v597 = vld [vmem:[%s223 + $0x258] sm:$0xff]
        %v598 = vld [vmem:[%s223 + $0x260] sm:$0xff]
        %v599 = vld [vmem:[%s223 + $0x268] sm:$0xff]
        %v600 = vld [vmem:[%s223 + $0x270] sm:$0xff]
        %v601 = vld [vmem:[%s223 + $0x278] sm:$0xff]
        %v602 = vld [vmem:[%s223 + $0x280] sm:$0xff]
        %v603 = vld [vmem:[%s223 + $0x288] sm:$0xff]
        %v604 = vld [vmem:[%s223 + $0x290] sm:$0xff]
        %v605 = vld [vmem:[%s223 + $0x298] sm:$0xff]
        %v606 = vld [vmem:[%s223 + $0x2a0] sm:$0xff]
        %v607 = vld [vmem:[%s223 + $0x2a8] sm:$0xff]
        %v608 = vld [vmem:[%s223 + $0x2b0] sm:$0xff]
        %v609 = vld [vmem:[%s223 + $0x2b8] sm:$0xff]
        %v610 = vld [vmem:[%s223 + $0x2c0] sm:$0xff]
        %v611 = vld [vmem:[%s223 + $0x2c8] sm:$0xff]
        %v612 = vld [vmem:[%s223 + $0x2d0] sm:$0xff]
        %v613 = vld [vmem:[%s223 + $0x2d8] sm:$0xff]
        %v614 = vld [vmem:[%s223 + $0x2e0] sm:$0xff]
        %v615 = vld [vmem:[%s223 + $0x2e8] sm:$0xff]
        %v616 = vld [vmem:[%s223 + $0x2f0] sm:$0xff]
        %v617 = vld [vmem:[%s223 + $0x2f8] sm:$0xff]
        %v618 = vld [vmem:[%s223 + $0x300] sm:$0xff]
        %v619 = vld [vmem:[%s223 + $0x308] sm:$0xff]
        %v620 = vld [vmem:[%s223 + $0x310] sm:$0xff]
        %v621 = vld [vmem:[%s223 + $0x318] sm:$0xff]
        %v622 = vld [vmem:[%s223 + $0x320] sm:$0xff]
        %v623 = vld [vmem:[%s223 + $0x328] sm:$0xff]
        %v624 = vld [vmem:[%s223 + $0x330] sm:$0xff]
        %v625 = vld [vmem:[%s223 + $0x338] sm:$0xff]
        %v626 = vld [vmem:[%s223 + $0x340] sm:$0xff]
        %v627 = vld [vmem:[%s223 + $0x348] sm:$0xff]
        %v628 = vld [vmem:[%s223 + $0x350] sm:$0xff]
        %v629 = vld [vmem:[%s223 + $0x358] sm:$0xff]
        %v630 = vld [vmem:[%s223 + $0x360] sm:$0xff]
        %v631 = vld [vmem:[%s223 + $0x368] sm:$0xff]
        %v632 = vld [vmem:[%s223 + $0x370] sm:$0xff]
        %v633 = vld [vmem:[%s223 + $0x378] sm:$0xff]
        %v634 = vld [vmem:[%s223 + $0x380] sm:$0xff]
        %v635 = vld [vmem:[%s223 + $0x388] sm:$0xff]
        %v636 = vld [vmem:[%s223 + $0x390] sm:$0xff]
        %v637 = vld [vmem:[%s223 + $0x398] sm:$0xff]
        %v638 = vld [vmem:[%s223 + $0x3a0] sm:$0xff]
        %v639 = vld [vmem:[%s223 + $0x3a8] sm:$0xff]
        %v640 = vld [vmem:[%s223 + $0x3b0] sm:$0xff]
        %v641 = vld [vmem:[%s223 + $0x3b8] sm:$0xff]
        %v642 = vld [vmem:[%s223 + $0x3c0] sm:$0xff]
        %v643 = vld [vmem:[%s223 + $0x3c8] sm:$0xff]
        %v644 = vld [vmem:[%s223 + $0x3d0] sm:$0xff]
        %v645 = vld [vmem:[%s223 + $0x3d8] sm:$0xff]
        %v646 = vld [vmem:[%s223 + $0x3e0] sm:$0xff]
        %v647 = vld [vmem:[%s223 + $0x3e8] sm:$0xff]
        %v648 = vld [vmem:[%s223 + $0x3f0] sm:$0xff]
        %v649 = vld [vmem:[%s223 + $0x3f8] sm:$0xff]
        %v650 = vld [vmem:[%s223 + $0x400] sm:$0xff]
        %v651 = vld [vmem:[%s223 + $0x408] sm:$0xff]
        %v652 = vld [vmem:[%s223 + $0x410] sm:$0xff]
        %v653 = vld [vmem:[%s223 + $0x418] sm:$0xff]
        %v654 = vld [vmem:[%s223 + $0x420] sm:$0xff]
        %v655 = vld [vmem:[%s223 + $0x428] sm:$0xff]
        %v656 = vld [vmem:[%s223 + $0x430] sm:$0xff]
        %v657 = vld [vmem:[%s223 + $0x438] sm:$0xff]
        %v658 = vld [vmem:[%s223 + $0x440] sm:$0xff]
        %v659 = vld [vmem:[%s223 + $0x448] sm:$0xff]
        %v660 = vld [vmem:[%s223 + $0x450] sm:$0xff]
        %v661 = vld [vmem:[%s223 + $0x458] sm:$0xff]
        %v662 = vld [vmem:[%s223 + $0x460] sm:$0xff]
        %v663 = vld [vmem:[%s223 + $0x468] sm:$0xff]
        %v664 = vld [vmem:[%s223 + $0x470] sm:$0xff]
        %v665 = vld [vmem:[%s223 + $0x478] sm:$0xff]
        %v666 = vld [vmem:[%s223 + $0x480] sm:$0xff]
        %v667 = vld [vmem:[%s223 + $0x488] sm:$0xff]
        %v668 = vld [vmem:[%s223 + $0x490] sm:$0xff]
        %v669 = vld [vmem:[%s223 + $0x498] sm:$0xff]
        %v670 = vld [vmem:[%s223 + $0x4a0] sm:$0xff]
        %v671 = vld [vmem:[%s223 + $0x4a8] sm:$0xff]
        %v672 = vld [vmem:[%s223 + $0x4b0] sm:$0xff]
        %v673 = vld [vmem:[%s223 + $0x4b8] sm:$0xff]
        %v674 = vld [vmem:[%s223 + $0x4c0] sm:$0xff]
        %v675 = vld [vmem:[%s223 + $0x4c8] sm:$0xff]
        %v676 = vld [vmem:[%s223 + $0x4d0] sm:$0xff]
        %v677 = vld [vmem:[%s223 + $0x4d8] sm:$0xff]
        %v678 = vld [vmem:[%s223 + $0x4e0] sm:$0xff]
        %v679 = vld [vmem:[%s223 + $0x4e8] sm:$0xff]
        %v680 = vld [vmem:[%s223 + $0x4f0] sm:$0xff]
        %v681 = vld [vmem:[%s223 + $0x4f8] sm:$0xff]
        %v682 = vld [vmem:[%s223 + $0x500] sm:$0xff]
        %v683 = vld [vmem:[%s223 + $0x508] sm:$0xff]
        %v684 = vld [vmem:[%s223 + $0x510] sm:$0xff]
        %v685 = vld [vmem:[%s223 + $0x518] sm:$0xff]
        %v686 = vld [vmem:[%s223 + $0x520] sm:$0xff]
        %v687 = vld [vmem:[%s223 + $0x528] sm:$0xff]
        %v688 = vld [vmem:[%s223 + $0x530] sm:$0xff]
        %v689 = vld [vmem:[%s223 + $0x538] sm:$0xff]
        %v690 = vld [vmem:[%s223 + $0x540] sm:$0xff]
        %v691 = vld [vmem:[%s223 + $0x548] sm:$0xff]
        %v692 = vld [vmem:[%s223 + $0x550] sm:$0xff]
        %v693 = vld [vmem:[%s223 + $0x558] sm:$0xff]
        %v694 = vld [vmem:[%s223 + $0x560] sm:$0xff]
        %v695 = vld [vmem:[%s223 + $0x568] sm:$0xff]
        %v696 = vld [vmem:[%s223 + $0x570] sm:$0xff]
        %v697 = vld [vmem:[%s223 + $0x578] sm:$0xff]
        %v698 = vld [vmem:[%s223 + $0x580] sm:$0xff]
        %v699 = vld [vmem:[%s223 + $0x588] sm:$0xff]
        %v700 = vld [vmem:[%s223 + $0x590] sm:$0xff]
        %v701 = vld [vmem:[%s223 + $0x598] sm:$0xff]
        %v702 = vld [vmem:[%s223 + $0x5a0] sm:$0xff]
        %v703 = vld [vmem:[%s223 + $0x5a8] sm:$0xff]
        %v704 = vld [vmem:[%s223 + $0x5b0] sm:$0xff]
        %v705 = vld [vmem:[%s223 + $0x5b8] sm:$0xff]
        %v706 = vld [vmem:[%s223 + $0x5c0] sm:$0xff]
        %v707 = vld [vmem:[%s223 + $0x5c8] sm:$0xff]
        %v708 = vld [vmem:[%s223 + $0x5d0] sm:$0xff]
        %v709 = vld [vmem:[%s223 + $0x5d8] sm:$0xff]
        %v710 = vld [vmem:[%s223 + $0x5e0] sm:$0xff]
        %v711 = vld [vmem:[%s223 + $0x5e8] sm:$0xff]
        %v712 = vld [vmem:[%s223 + $0x5f0] sm:$0xff]
        %v713 = vld [vmem:[%s223 + $0x5f8] sm:$0xff]
        %v714 = vld [vmem:[%s223 + $0x600] sm:$0xff]
        %v715 = vld [vmem:[%s223 + $0x608] sm:$0xff]
        %v716 = vld [vmem:[%s223 + $0x610] sm:$0xff]
        %v717 = vld [vmem:[%s223 + $0x618] sm:$0xff]
        %v718 = vld [vmem:[%s223 + $0x620] sm:$0xff]
        %v719 = vld [vmem:[%s223 + $0x628] sm:$0xff]
        %v720 = vld [vmem:[%s223 + $0x630] sm:$0xff]
        %v721 = vld [vmem:[%s223 + $0x638] sm:$0xff]
        %v722 = vld [vmem:[%s223 + $0x640] sm:$0xff]
        %v723 = vld [vmem:[%s223 + $0x648] sm:$0xff]
        %v724 = vld [vmem:[%s223 + $0x650] sm:$0xff]
        %v725 = vld [vmem:[%s223 + $0x658] sm:$0xff]
        %v726 = vld [vmem:[%s223 + $0x660] sm:$0xff]
        %v727 = vld [vmem:[%s223 + $0x668] sm:$0xff]
        %v728 = vld [vmem:[%s223 + $0x670] sm:$0xff]
        %v729 = vld [vmem:[%s223 + $0x678] sm:$0xff]
        %v730 = vld [vmem:[%s223 + $0x680] sm:$0xff]
        %v731 = vld [vmem:[%s223 + $0x688] sm:$0xff]
        %v732 = vld [vmem:[%s223 + $0x690] sm:$0xff]
        %v733 = vld [vmem:[%s223 + $0x698] sm:$0xff]
        %v734 = vld [vmem:[%s223 + $0x6a0] sm:$0xff]
        %v735 = vld [vmem:[%s223 + $0x6a8] sm:$0xff]
        %v736 = vld [vmem:[%s223 + $0x6b0] sm:$0xff]
        %v737 = vld [vmem:[%s223 + $0x6b8] sm:$0xff]
        %v738 = vld [vmem:[%s223 + $0x6c0] sm:$0xff]
        %v739 = vld [vmem:[%s223 + $0x6c8] sm:$0xff]
        %v740 = vld [vmem:[%s223 + $0x6d0] sm:$0xff]
        %v741 = vld [vmem:[%s223 + $0x6d8] sm:$0xff]
        %v742 = vld [vmem:[%s223 + $0x6e0] sm:$0xff]
        %v743 = vld [vmem:[%s223 + $0x6e8] sm:$0xff]
        %v744 = vld [vmem:[%s223 + $0x6f0] sm:$0xff]
        %v745 = vld [vmem:[%s223 + $0x6f8] sm:$0xff]
        %v746 = vld [vmem:[%s223 + $0x700] sm:$0xff]
        %v747 = vld [vmem:[%s223 + $0x708] sm:$0xff]
        %v748 = vld [vmem:[%s223 + $0x710] sm:$0xff]
        %v749 = vld [vmem:[%s223 + $0x718] sm:$0xff]
        %v750 = vld [vmem:[%s223 + $0x720] sm:$0xff]
        %v751 = vld [vmem:[%s223 + $0x728] sm:$0xff]
        %v752 = vld [vmem:[%s223 + $0x730] sm:$0xff]
        %v753 = vld [vmem:[%s223 + $0x738] sm:$0xff]
        %v754 = vld [vmem:[%s223 + $0x740] sm:$0xff]
        %v755 = vld [vmem:[%s223 + $0x748] sm:$0xff]
        %v756 = vld [vmem:[%s223 + $0x750] sm:$0xff]
        %v757 = vld [vmem:[%s223 + $0x758] sm:$0xff]
        %v758 = vld [vmem:[%s223 + $0x760] sm:$0xff]
        %v759 = vld [vmem:[%s223 + $0x768] sm:$0xff]
        %v760 = vld [vmem:[%s223 + $0x770] sm:$0xff]
        %v761 = vld [vmem:[%s223 + $0x778] sm:$0xff]
        %v762 = vld [vmem:[%s223 + $0x780] sm:$0xff]
        %v763 = vld [vmem:[%s223 + $0x788] sm:$0xff]
        %v764 = vld [vmem:[%s223 + $0x790] sm:$0xff]
        %v765 = vld [vmem:[%s223 + $0x798] sm:$0xff]
        %v766 = vld [vmem:[%s223 + $0x7a0] sm:$0xff]
        %v767 = vld [vmem:[%s223 + $0x7a8] sm:$0xff]
        %v768 = vld [vmem:[%s223 + $0x7b0] sm:$0xff]
        %v769 = vld [vmem:[%s223 + $0x7b8] sm:$0xff]
        %v770 = vld [vmem:[%s223 + $0x7c0] sm:$0xff]
        %v771 = vld [vmem:[%s223 + $0x7c8] sm:$0xff]
        %v772 = vld [vmem:[%s223 + $0x7d0] sm:$0xff]
        %v773 = vld [vmem:[%s223 + $0x7d8] sm:$0xff]
        %v774 = vld [vmem:[%s223 + $0x7e0] sm:$0xff]
        %v775 = vld [vmem:[%s223 + $0x7e8] sm:$0xff]
        %v776 = vld [vmem:[%s223 + $0x7f0] sm:$0xff]
        %v777 = vld [vmem:[%s223 + $0x7f8] sm:$0xff]
        %s778 = sld [smem:[#allocation4]]
        %s779 = ssub.f32 %s778, 1.0
        %v780 = vstv %s779
        %v781 = vmul.f32 %v780, %v522
        %v782 = vmul.f32 %v780, %v523
        %v783 = vmul.f32 %v780, %v524
        %v784 = vmul.f32 %v780, %v525
        %v785 = vmul.f32 %v780, %v526
        %v786 = vmul.f32 %v780, %v527
        %v787 = vmul.f32 %v780, %v528
        %v788 = vmul.f32 %v780, %v529
        %v789 = vmul.f32 %v780, %v530
        %v790 = vmul.f32 %v780, %v531
        %v791 = vmul.f32 %v780, %v532
        %v792 = vmul.f32 %v780, %v533
        %v793 = vmul.f32 %v780, %v534
        %v794 = vmul.f32 %v780, %v535
        %v795 = vmul.f32 %v780, %v536
        %v796 = vmul.f32 %v780, %v537
        %v797 = vmul.f32 %v780, %v538
        %v798 = vmul.f32 %v780, %v539
        %v799 = vmul.f32 %v780, %v540
        %v800 = vmul.f32 %v780, %v541
        %v801 = vmul.f32 %v780, %v542
        %v802 = vmul.f32 %v780, %v543
        %v803 = vmul.f32 %v780, %v544
        %v804 = vmul.f32 %v780, %v545
        %v805 = vmul.f32 %v780, %v546
        %v806 = vmul.f32 %v780, %v547
        %v807 = vmul.f32 %v780, %v548
        %v808 = vmul.f32 %v780, %v549
        %v809 = vmul.f32 %v780, %v550
        %v810 = vmul.f32 %v780, %v551
        %v811 = vmul.f32 %v780, %v552
        %v812 = vmul.f32 %v780, %v553
        %v813 = vmul.f32 %v780, %v554
        %v814 = vmul.f32 %v780, %v555
        %v815 = vmul.f32 %v780, %v556
        %v816 = vmul.f32 %v780, %v557
        %v817 = vmul.f32 %v780, %v558
        %v818 = vmul.f32 %v780, %v559
        %v819 = vmul.f32 %v780, %v560
        %v820 = vmul.f32 %v780, %v561
        %v821 = vmul.f32 %v780, %v562
        %v822 = vmul.f32 %v780, %v563
        %v823 = vmul.f32 %v780, %v564
        %v824 = vmul.f32 %v780, %v565
        %v825 = vmul.f32 %v780, %v566
        %v826 = vmul.f32 %v780, %v567
        %v827 = vmul.f32 %v780, %v568
        %v828 = vmul.f32 %v780, %v569
        %v829 = vmul.f32 %v780, %v570
        %v830 = vmul.f32 %v780, %v571
        %v831 = vmul.f32 %v780, %v572
        %v832 = vmul.f32 %v780, %v573
        %v833 = vmul.f32 %v780, %v574
        %v834 = vmul.f32 %v780, %v575
        %v835 = vmul.f32 %v780, %v576
        %v836 = vmul.f32 %v780, %v577
        %v837 = vmul.f32 %v780, %v578
        %v838 = vmul.f32 %v780, %v579
        %v839 = vmul.f32 %v780, %v580
        %v840 = vmul.f32 %v780, %v581
        %v841 = vmul.f32 %v780, %v582
        %v842 = vmul.f32 %v780, %v583
        %v843 = vmul.f32 %v780, %v584
        %v844 = vmul.f32 %v780, %v585
        %v845 = vmul.f32 %v780, %v586
        %v846 = vmul.f32 %v780, %v587
        %v847 = vmul.f32 %v780, %v588
        %v848 = vmul.f32 %v780, %v589
        %v849 = vmul.f32 %v780, %v590
        %v850 = vmul.f32 %v780, %v591
        %v851 = vmul.f32 %v780, %v592
        %v852 = vmul.f32 %v780, %v593
        %v853 = vmul.f32 %v780, %v594
        %v854 = vmul.f32 %v780, %v595
        %v855 = vmul.f32 %v780, %v596
        %v856 = vmul.f32 %v780, %v597
        %v857 = vmul.f32 %v780, %v598
        %v858 = vmul.f32 %v780, %v599
        %v859 = vmul.f32 %v780, %v600
        %v860 = vmul.f32 %v780, %v601
        %v861 = vmul.f32 %v780, %v602
        %v862 = vmul.f32 %v780, %v603
        %v863 = vmul.f32 %v780, %v604
        %v864 = vmul.f32 %v780, %v605
        %v865 = vmul.f32 %v780, %v606
        %v866 = vmul.f32 %v780, %v607
        %v867 = vmul.f32 %v780, %v608
        %v868 = vmul.f32 %v780, %v609
        %v869 = vmul.f32 %v780, %v610
        %v870 = vmul.f32 %v780, %v611
        %v871 = vmul.f32 %v780, %v612
        %v872 = vmul.f32 %v780, %v613
        %v873 = vmul.f32 %v780, %v614
        %v874 = vmul.f32 %v780, %v615
        %v875 = vmul.f32 %v780, %v616
        %v876 = vmul.f32 %v780, %v617
        %v877 = vmul.f32 %v780, %v618
        %v878 = vmul.f32 %v780, %v619
        %v879 = vmul.f32 %v780, %v620
        %v880 = vmul.f32 %v780, %v621
        %v881 = vmul.f32 %v780, %v622
        %v882 = vmul.f32 %v780, %v623
        %v883 = vmul.f32 %v780, %v624
        %v884 = vmul.f32 %v780, %v625
        %v885 = vmul.f32 %v780, %v626
        %v886 = vmul.f32 %v780, %v627
        %v887 = vmul.f32 %v780, %v628
        %v888 = vmul.f32 %v780, %v629
        %v889 = vmul.f32 %v780, %v630
        %v890 = vmul.f32 %v780, %v631
        %v891 = vmul.f32 %v780, %v632
        %v892 = vmul.f32 %v780, %v633
        %v893 = vmul.f32 %v780, %v634
        %v894 = vmul.f32 %v780, %v635
        %v895 = vmul.f32 %v780, %v636
        %v896 = vmul.f32 %v780, %v637
        %v897 = vmul.f32 %v780, %v638
        %v898 = vmul.f32 %v780, %v639
        %v899 = vmul.f32 %v780, %v640
        %v900 = vmul.f32 %v780, %v641
        %v901 = vmul.f32 %v780, %v642
        %v902 = vmul.f32 %v780, %v643
        %v903 = vmul.f32 %v780, %v644
        %v904 = vmul.f32 %v780, %v645
        %v905 = vmul.f32 %v780, %v646
        %v906 = vmul.f32 %v780, %v647
        %v907 = vmul.f32 %v780, %v648
        %v908 = vmul.f32 %v780, %v649
        %v909 = vmul.f32 %v780, %v650
        %v910 = vmul.f32 %v780, %v651
        %v911 = vmul.f32 %v780, %v652
        %v912 = vmul.f32 %v780, %v653
        %v913 = vmul.f32 %v780, %v654
        %v914 = vmul.f32 %v780, %v655
        %v915 = vmul.f32 %v780, %v656
        %v916 = vmul.f32 %v780, %v657
        %v917 = vmul.f32 %v780, %v658
        %v918 = vmul.f32 %v780, %v659
        %v919 = vmul.f32 %v780, %v660
        %v920 = vmul.f32 %v780, %v661
        %v921 = vmul.f32 %v780, %v662
        %v922 = vmul.f32 %v780, %v663
        %v923 = vmul.f32 %v780, %v664
        %v924 = vmul.f32 %v780, %v665
        %v925 = vmul.f32 %v780, %v666
        %v926 = vmul.f32 %v780, %v667
        %v927 = vmul.f32 %v780, %v668
        %v928 = vmul.f32 %v780, %v669
        %v929 = vmul.f32 %v780, %v670
        %v930 = vmul.f32 %v780, %v671
        %v931 = vmul.f32 %v780, %v672
        %v932 = vmul.f32 %v780, %v673
        %v933 = vmul.f32 %v780, %v674
        %v934 = vmul.f32 %v780, %v675
        %v935 = vmul.f32 %v780, %v676
        %v936 = vmul.f32 %v780, %v677
        %v937 = vmul.f32 %v780, %v678
        %v938 = vmul.f32 %v780, %v679
        %v939 = vmul.f32 %v780, %v680
        %v940 = vmul.f32 %v780, %v681
        %v941 = vmul.f32 %v780, %v682
        %v942 = vmul.f32 %v780, %v683
        %v943 = vmul.f32 %v780, %v684
        %v944 = vmul.f32 %v780, %v685
        %v945 = vmul.f32 %v780, %v686
        %v946 = vmul.f32 %v780, %v687
        %v947 = vmul.f32 %v780, %v688
        %v948 = vmul.f32 %v780, %v689
        %v949 = vmul.f32 %v780, %v690
        %v950 = vmul.f32 %v780, %v691
        %v951 = vmul.f32 %v780, %v692
        %v952 = vmul.f32 %v780, %v693
        %v953 = vmul.f32 %v780, %v694
        %v954 = vmul.f32 %v780, %v695
        %v955 = vmul.f32 %v780, %v696
        %v956 = vmul.f32 %v780, %v697
        %v957 = vmul.f32 %v780, %v698
        %v958 = vmul.f32 %v780, %v699
        %v959 = vmul.f32 %v780, %v700
        %v960 = vmul.f32 %v780, %v701
        %v961 = vmul.f32 %v780, %v702
        %v962 = vmul.f32 %v780, %v703
        %v963 = vmul.f32 %v780, %v704
        %v964 = vmul.f32 %v780, %v705
        %v965 = vmul.f32 %v780, %v706
        %v966 = vmul.f32 %v780, %v707
        %v967 = vmul.f32 %v780, %v708
        %v968 = vmul.f32 %v780, %v709
        %v969 = vmul.f32 %v780, %v710
        %v970 = vmul.f32 %v780, %v711
        %v971 = vmul.f32 %v780, %v712
        %v972 = vmul.f32 %v780, %v713
        %v973 = vmul.f32 %v780, %v714
        %v974 = vmul.f32 %v780, %v715
        %v975 = vmul.f32 %v780, %v716
        %v976 = vmul.f32 %v780, %v717
        %v977 = vmul.f32 %v780, %v718
        %v978 = vmul.f32 %v780, %v719
        %v979 = vmul.f32 %v780, %v720
        %v980 = vmul.f32 %v780, %v721
        %v981 = vmul.f32 %v780, %v722
        %v982 = vmul.f32 %v780, %v723
        %v983 = vmul.f32 %v780, %v724
        %v984 = vmul.f32 %v780, %v725
        %v985 = vmul.f32 %v780, %v726
        %v986 = vmul.f32 %v780, %v727
        %v987 = vmul.f32 %v780, %v728
        %v988 = vmul.f32 %v780, %v729
        %v989 = vmul.f32 %v780, %v730
        %v990 = vmul.f32 %v780, %v731
        %v991 = vmul.f32 %v780, %v732
        %v992 = vmul.f32 %v780, %v733
        %v993 = vmul.f32 %v780, %v734
        %v994 = vmul.f32 %v780, %v735
        %v995 = vmul.f32 %v780, %v736
        %v996 = vmul.f32 %v780, %v737
        %v997 = vmul.f32 %v780, %v738
        %v998 = vmul.f32 %v780, %v739
        %v999 = vmul.f32 %v780, %v740
        %v1000 = vmul.f32 %v780, %v741
        %v1001 = vmul.f32 %v780, %v742
        %v1002 = vmul.f32 %v780, %v743
        %v1003 = vmul.f32 %v780, %v744
        %v1004 = vmul.f32 %v780, %v745
        %v1005 = vmul.f32 %v780, %v746
        %v1006 = vmul.f32 %v780, %v747
        %v1007 = vmul.f32 %v780, %v748
        %v1008 = vmul.f32 %v780, %v749
        %v1009 = vmul.f32 %v780, %v750
        %v1010 = vmul.f32 %v780, %v751
        %v1011 = vmul.f32 %v780, %v752
        %v1012 = vmul.f32 %v780, %v753
        %v1013 = vmul.f32 %v780, %v754
        %v1014 = vmul.f32 %v780, %v755
        %v1015 = vmul.f32 %v780, %v756
        %v1016 = vmul.f32 %v780, %v757
        %v1017 = vmul.f32 %v780, %v758
        %v1018 = vmul.f32 %v780, %v759
        %v1019 = vmul.f32 %v780, %v760
        %v1020 = vmul.f32 %v780, %v761
        %v1021 = vmul.f32 %v780, %v762
        %v1022 = vmul.f32 %v780, %v763
        %v1023 = vmul.f32 %v780, %v764
        %v1024 = vmul.f32 %v780, %v765
        %v1025 = vmul.f32 %v780, %v766
        %v1026 = vmul.f32 %v780, %v767
        %v1027 = vmul.f32 %v780, %v768
        %v1028 = vmul.f32 %v780, %v769
        %v1029 = vmul.f32 %v780, %v770
        %v1030 = vmul.f32 %v780, %v771
        %v1031 = vmul.f32 %v780, %v772
        %v1032 = vmul.f32 %v780, %v773
        %v1033 = vmul.f32 %v780, %v774
        %v1034 = vmul.f32 %v780, %v775
        %v1035 = vmul.f32 %v780, %v776
        %v1036 = vmul.f32 %v780, %v777
        %v1037 = vadd.f32 %v781, 1.0
        %v1038 = vadd.f32 %v782, 1.0
        %v1039 = vadd.f32 %v783, 1.0
        %v1040 = vadd.f32 %v784, 1.0
        %v1041 = vadd.f32 %v785, 1.0
        %v1042 = vadd.f32 %v786, 1.0
        %v1043 = vadd.f32 %v787, 1.0
        %v1044 = vadd.f32 %v788, 1.0
        %v1045 = vadd.f32 %v789, 1.0
        %v1046 = vadd.f32 %v790, 1.0
        %v1047 = vadd.f32 %v791, 1.0
        %v1048 = vadd.f32 %v792, 1.0
        %v1049 = vadd.f32 %v793, 1.0
        %v1050 = vadd.f32 %v794, 1.0
        %v1051 = vadd.f32 %v795, 1.0
        %v1052 = vadd.f32 %v796, 1.0
        %v1053 = vadd.f32 %v797, 1.0
        %v1054 = vadd.f32 %v798, 1.0
        %v1055 = vadd.f32 %v799, 1.0
        %v1056 = vadd.f32 %v800, 1.0
        %v1057 = vadd.f32 %v801, 1.0
        %v1058 = vadd.f32 %v802, 1.0
        %v1059 = vadd.f32 %v803, 1.0
        %v1060 = vadd.f32 %v804, 1.0
        %v1061 = vadd.f32 %v805, 1.0
        %v1062 = vadd.f32 %v806, 1.0
        %v1063 = vadd.f32 %v807, 1.0
        %v1064 = vadd.f32 %v808, 1.0
        %v1065 = vadd.f32 %v809, 1.0
        %v1066 = vadd.f32 %v810, 1.0
        %v1067 = vadd.f32 %v811, 1.0
        %v1068 = vadd.f32 %v812, 1.0
        %v1069 = vadd.f32 %v813, 1.0
        %v1070 = vadd.f32 %v814, 1.0
        %v1071 = vadd.f32 %v815, 1.0
        %v1072 = vadd.f32 %v816, 1.0
        %v1073 = vadd.f32 %v817, 1.0
        %v1074 = vadd.f32 %v818, 1.0
        %v1075 = vadd.f32 %v819, 1.0
        %v1076 = vadd.f32 %v820, 1.0
        %v1077 = vadd.f32 %v821, 1.0
        %v1078 = vadd.f32 %v822, 1.0
        %v1079 = vadd.f32 %v823, 1.0
        %v1080 = vadd.f32 %v824, 1.0
        %v1081 = vadd.f32 %v825, 1.0
        %v1082 = vadd.f32 %v826, 1.0
        %v1083 = vadd.f32 %v827, 1.0
        %v1084 = vadd.f32 %v828, 1.0
        %v1085 = vadd.f32 %v829, 1.0
        %v1086 = vadd.f32 %v830, 1.0
        %v1087 = vadd.f32 %v831, 1.0
        %v1088 = vadd.f32 %v832, 1.0
        %v1089 = vadd.f32 %v833, 1.0
        %v1090 = vadd.f32 %v834, 1.0
        %v1091 = vadd.f32 %v835, 1.0
        %v1092 = vadd.f32 %v836, 1.0
        %v1093 = vadd.f32 %v837, 1.0
        %v1094 = vadd.f32 %v838, 1.0
        %v1095 = vadd.f32 %v839, 1.0
        %v1096 = vadd.f32 %v840, 1.0
        %v1097 = vadd.f32 %v841, 1.0
        %v1098 = vadd.f32 %v842, 1.0
        %v1099 = vadd.f32 %v843, 1.0
        %v1100 = vadd.f32 %v844, 1.0
        %v1101 = vadd.f32 %v845, 1.0
        %v1102 = vadd.f32 %v846, 1.0
        %v1103 = vadd.f32 %v847, 1.0
        %v1104 = vadd.f32 %v848, 1.0
        %v1105 = vadd.f32 %v849, 1.0
        %v1106 = vadd.f32 %v850, 1.0
        %v1107 = vadd.f32 %v851, 1.0
        %v1108 = vadd.f32 %v852, 1.0
        %v1109 = vadd.f32 %v853, 1.0
        %v1110 = vadd.f32 %v854, 1.0
        %v1111 = vadd.f32 %v855, 1.0
        %v1112 = vadd.f32 %v856, 1.0
        %v1113 = vadd.f32 %v857, 1.0
        %v1114 = vadd.f32 %v858, 1.0
        %v1115 = vadd.f32 %v859, 1.0
        %v1116 = vadd.f32 %v860, 1.0
        %v1117 = vadd.f32 %v861, 1.0
        %v1118 = vadd.f32 %v862, 1.0
        %v1119 = vadd.f32 %v863, 1.0
        %v1120 = vadd.f32 %v864, 1.0
        %v1121 = vadd.f32 %v865, 1.0
        %v1122 = vadd.f32 %v866, 1.0
        %v1123 = vadd.f32 %v867, 1.0
        %v1124 = vadd.f32 %v868, 1.0
        %v1125 = vadd.f32 %v869, 1.0
        %v1126 = vadd.f32 %v870, 1.0
        %v1127 = vadd.f32 %v871, 1.0
        %v1128 = vadd.f32 %v872, 1.0
        %v1129 = vadd.f32 %v873, 1.0
        %v1130 = vadd.f32 %v874, 1.0
        %v1131 = vadd.f32 %v875, 1.0
        %v1132 = vadd.f32 %v876, 1.0
        %v1133 = vadd.f32 %v877, 1.0
        %v1134 = vadd.f32 %v878, 1.0
        %v1135 = vadd.f32 %v879, 1.0
        %v1136 = vadd.f32 %v880, 1.0
        %v1137 = vadd.f32 %v881, 1.0
        %v1138 = vadd.f32 %v882, 1.0
        %v1139 = vadd.f32 %v883, 1.0
        %v1140 = vadd.f32 %v884, 1.0
        %v1141 = vadd.f32 %v885, 1.0
        %v1142 = vadd.f32 %v886, 1.0
        %v1143 = vadd.f32 %v887, 1.0
        %v1144 = vadd.f32 %v888, 1.0
        %v1145 = vadd.f32 %v889, 1.0
        %v1146 = vadd.f32 %v890, 1.0
        %v1147 = vadd.f32 %v891, 1.0
        %v1148 = vadd.f32 %v892, 1.0
        %v1149 = vadd.f32 %v893, 1.0
        %v1150 = vadd.f32 %v894, 1.0
        %v1151 = vadd.f32 %v895, 1.0
        %v1152 = vadd.f32 %v896, 1.0
        %v1153 = vadd.f32 %v897, 1.0
        %v1154 = vadd.f32 %v898, 1.0
        %v1155 = vadd.f32 %v899, 1.0
        %v1156 = vadd.f32 %v900, 1.0
        %v1157 = vadd.f32 %v901, 1.0
        %v1158 = vadd.f32 %v902, 1.0
        %v1159 = vadd.f32 %v903, 1.0
        %v1160 = vadd.f32 %v904, 1.0
        %v1161 = vadd.f32 %v905, 1.0
        %v1162 = vadd.f32 %v906, 1.0
        %v1163 = vadd.f32 %v907, 1.0
        %v1164 = vadd.f32 %v908, 1.0
        %v1165 = vadd.f32 %v909, 1.0
        %v1166 = vadd.f32 %v910, 1.0
        %v1167 = vadd.f32 %v911, 1.0
        %v1168 = vadd.f32 %v912, 1.0
        %v1169 = vadd.f32 %v913, 1.0
        %v1170 = vadd.f32 %v914, 1.0
        %v1171 = vadd.f32 %v915, 1.0
        %v1172 = vadd.f32 %v916, 1.0
        %v1173 = vadd.f32 %v917, 1.0
        %v1174 = vadd.f32 %v918, 1.0
        %v1175 = vadd.f32 %v919, 1.0
        %v1176 = vadd.f32 %v920, 1.0
        %v1177 = vadd.f32 %v921, 1.0
        %v1178 = vadd.f32 %v922, 1.0
        %v1179 = vadd.f32 %v923, 1.0
        %v1180 = vadd.f32 %v924, 1.0
        %v1181 = vadd.f32 %v925, 1.0
        %v1182 = vadd.f32 %v926, 1.0
        %v1183 = vadd.f32 %v927, 1.0
        %v1184 = vadd.f32 %v928, 1.0
        %v1185 = vadd.f32 %v929, 1.0
        %v1186 = vadd.f32 %v930, 1.0
        %v1187 = vadd.f32 %v931, 1.0
        %v1188 = vadd.f32 %v932, 1.0
        %v1189 = vadd.f32 %v933, 1.0
        %v1190 = vadd.f32 %v934, 1.0
        %v1191 = vadd.f32 %v935, 1.0
        %v1192 = vadd.f32 %v936, 1.0
        %v1193 = vadd.f32 %v937, 1.0
        %v1194 = vadd.f32 %v938, 1.0
        %v1195 = vadd.f32 %v939, 1.0
        %v1196 = vadd.f32 %v940, 1.0
        %v1197 = vadd.f32 %v941, 1.0
        %v1198 = vadd.f32 %v942, 1.0
        %v1199 = vadd.f32 %v943, 1.0
        %v1200 = vadd.f32 %v944, 1.0
        %v1201 = vadd.f32 %v945, 1.0
        %v1202 = vadd.f32 %v946, 1.0
        %v1203 = vadd.f32 %v947, 1.0
        %v1204 = vadd.f32 %v948, 1.0
        %v1205 = vadd.f32 %v949, 1.0
        %v1206 = vadd.f32 %v950, 1.0
        %v1207 = vadd.f32 %v951, 1.0
        %v1208 = vadd.f32 %v952, 1.0
        %v1209 = vadd.f32 %v953, 1.0
        %v1210 = vadd.f32 %v954, 1.0
        %v1211 = vadd.f32 %v955, 1.0
        %v1212 = vadd.f32 %v956, 1.0
        %v1213 = vadd.f32 %v957, 1.0
        %v1214 = vadd.f32 %v958, 1.0
        %v1215 = vadd.f32 %v959, 1.0
        %v1216 = vadd.f32 %v960, 1.0
        %v1217 = vadd.f32 %v961, 1.0
        %v1218 = vadd.f32 %v962, 1.0
        %v1219 = vadd.f32 %v963, 1.0
        %v1220 = vadd.f32 %v964, 1.0
        %v1221 = vadd.f32 %v965, 1.0
        %v1222 = vadd.f32 %v966, 1.0
        %v1223 = vadd.f32 %v967, 1.0
        %v1224 = vadd.f32 %v968, 1.0
        %v1225 = vadd.f32 %v969, 1.0
        %v1226 = vadd.f32 %v970, 1.0
        %v1227 = vadd.f32 %v971, 1.0
        %v1228 = vadd.f32 %v972, 1.0
        %v1229 = vadd.f32 %v973, 1.0
        %v1230 = vadd.f32 %v974, 1.0
        %v1231 = vadd.f32 %v975, 1.0
        %v1232 = vadd.f32 %v976, 1.0
        %v1233 = vadd.f32 %v977, 1.0
        %v1234 = vadd.f32 %v978, 1.0
        %v1235 = vadd.f32 %v979, 1.0
        %v1236 = vadd.f32 %v980, 1.0
        %v1237 = vadd.f32 %v981, 1.0
        %v1238 = vadd.f32 %v982, 1.0
        %v1239 = vadd.f32 %v983, 1.0
        %v1240 = vadd.f32 %v984, 1.0
        %v1241 = vadd.f32 %v985, 1.0
        %v1242 = vadd.f32 %v986, 1.0
        %v1243 = vadd.f32 %v987, 1.0
        %v1244 = vadd.f32 %v988, 1.0
        %v1245 = vadd.f32 %v989, 1.0
        %v1246 = vadd.f32 %v990, 1.0
        %v1247 = vadd.f32 %v991, 1.0
        %v1248 = vadd.f32 %v992, 1.0
        %v1249 = vadd.f32 %v993, 1.0
        %v1250 = vadd.f32 %v994, 1.0
        %v1251 = vadd.f32 %v995, 1.0
        %v1252 = vadd.f32 %v996, 1.0
        %v1253 = vadd.f32 %v997, 1.0
        %v1254 = vadd.f32 %v998, 1.0
        %v1255 = vadd.f32 %v999, 1.0
        %v1256 = vadd.f32 %v1000, 1.0
        %v1257 = vadd.f32 %v1001, 1.0
        %v1258 = vadd.f32 %v1002, 1.0
        %v1259 = vadd.f32 %v1003, 1.0
        %v1260 = vadd.f32 %v1004, 1.0
        %v1261 = vadd.f32 %v1005, 1.0
        %v1262 = vadd.f32 %v1006, 1.0
        %v1263 = vadd.f32 %v1007, 1.0
        %v1264 = vadd.f32 %v1008, 1.0
        %v1265 = vadd.f32 %v1009, 1.0
        %v1266 = vadd.f32 %v1010, 1.0
        %v1267 = vadd.f32 %v1011, 1.0
        %v1268 = vadd.f32 %v1012, 1.0
        %v1269 = vadd.f32 %v1013, 1.0
        %v1270 = vadd.f32 %v1014, 1.0
        %v1271 = vadd.f32 %v1015, 1.0
        %v1272 = vadd.f32 %v1016, 1.0
        %v1273 = vadd.f32 %v1017, 1.0
        %v1274 = vadd.f32 %v1018, 1.0
        %v1275 = vadd.f32 %v1019, 1.0
        %v1276 = vadd.f32 %v1020, 1.0
        %v1277 = vadd.f32 %v1021, 1.0
        %v1278 = vadd.f32 %v1022, 1.0
        %v1279 = vadd.f32 %v1023, 1.0
        %v1280 = vadd.f32 %v1024, 1.0
        %v1281 = vadd.f32 %v1025, 1.0
        %v1282 = vadd.f32 %v1026, 1.0
        %v1283 = vadd.f32 %v1027, 1.0
        %v1284 = vadd.f32 %v1028, 1.0
        %v1285 = vadd.f32 %v1029, 1.0
        %v1286 = vadd.f32 %v1030, 1.0
        %v1287 = vadd.f32 %v1031, 1.0
        %v1288 = vadd.f32 %v1032, 1.0
        %v1289 = vadd.f32 %v1033, 1.0
        %v1290 = vadd.f32 %v1034, 1.0
        %v1291 = vadd.f32 %v1035, 1.0
        %v1292 = vadd.f32 %v1036, 1.0
        %v1293 = vmul.f32 %v1037, %v522
        %v1294 = vmul.f32 %v1038, %v523
        %v1295 = vmul.f32 %v1039, %v524
        %v1296 = vmul.f32 %v1040, %v525
        %v1297 = vmul.f32 %v1041, %v526
        %v1298 = vmul.f32 %v1042, %v527
        %v1299 = vmul.f32 %v1043, %v528
        %v1300 = vmul.f32 %v1044, %v529
        %v1301 = vmul.f32 %v1045, %v530
        %v1302 = vmul.f32 %v1046, %v531
        %v1303 = vmul.f32 %v1047, %v532
        %v1304 = vmul.f32 %v1048, %v533
        %v1305 = vmul.f32 %v1049, %v534
        %v1306 = vmul.f32 %v1050, %v535
        %v1307 = vmul.f32 %v1051, %v536
        %v1308 = vmul.f32 %v1052, %v537
        %v1309 = vmul.f32 %v1053, %v538
        %v1310 = vmul.f32 %v1054, %v539
        %v1311 = vmul.f32 %v1055, %v540
        %v1312 = vmul.f32 %v1056, %v541
        %v1313 = vmul.f32 %v1057, %v542
        %v1314 = vmul.f32 %v1058, %v543
        %v1315 = vmul.f32 %v1059, %v544
        %v1316 = vmul.f32 %v1060, %v545
        %v1317 = vmul.f32 %v1061, %v546
        %v1318 = vmul.f32 %v1062, %v547
        %v1319 = vmul.f32 %v1063, %v548
        %v1320 = vmul.f32 %v1064, %v549
        %v1321 = vmul.f32 %v1065, %v550
        %v1322 = vmul.f32 %v1066, %v551
        %v1323 = vmul.f32 %v1067, %v552
        %v1324 = vmul.f32 %v1068, %v553
        %v1325 = vmul.f32 %v1069, %v554
        %v1326 = vmul.f32 %v1070, %v555
        %v1327 = vmul.f32 %v1071, %v556
        %v1328 = vmul.f32 %v1072, %v557
        %v1329 = vmul.f32 %v1073, %v558
        %v1330 = vmul.f32 %v1074, %v559
        %v1331 = vmul.f32 %v1075, %v560
        %v1332 = vmul.f32 %v1076, %v561
        %v1333 = vmul.f32 %v1077, %v562
        %v1334 = vmul.f32 %v1078, %v563
        %v1335 = vmul.f32 %v1079, %v564
        %v1336 = vmul.f32 %v1080, %v565
        %v1337 = vmul.f32 %v1081, %v566
        %v1338 = vmul.f32 %v1082, %v567
        %v1339 = vmul.f32 %v1083, %v568
        %v1340 = vmul.f32 %v1084, %v569
        %v1341 = vmul.f32 %v1085, %v570
        %v1342 = vmul.f32 %v1086, %v571
        %v1343 = vmul.f32 %v1087, %v572
        %v1344 = vmul.f32 %v1088, %v573
        %v1345 = vmul.f32 %v1089, %v574
        %v1346 = vmul.f32 %v1090, %v575
        %v1347 = vmul.f32 %v1091, %v576
        %v1348 = vmul.f32 %v1092, %v577
        %v1349 = vmul.f32 %v1093, %v578
        %v1350 = vmul.f32 %v1094, %v579
        %v1351 = vmul.f32 %v1095, %v580
        %v1352 = vmul.f32 %v1096, %v581
        %v1353 = vmul.f32 %v1097, %v582
        %v1354 = vmul.f32 %v1098, %v583
        %v1355 = vmul.f32 %v1099, %v584
        %v1356 = vmul.f32 %v1100, %v585
        %v1357 = vmul.f32 %v1101, %v586
        %v1358 = vmul.f32 %v1102, %v587
        %v1359 = vmul.f32 %v1103, %v588
        %v1360 = vmul.f32 %v1104, %v589
        %v1361 = vmul.f32 %v1105, %v590
        %v1362 = vmul.f32 %v1106, %v591
        %v1363 = vmul.f32 %v1107, %v592
        %v1364 = vmul.f32 %v1108, %v593
        %v1365 = vmul.f32 %v1109, %v594
        %v1366 = vmul.f32 %v1110, %v595
        %v1367 = vmul.f32 %v1111, %v596
        %v1368 = vmul.f32 %v1112, %v597
        %v1369 = vmul.f32 %v1113, %v598
        %v1370 = vmul.f32 %v1114, %v599
        %v1371 = vmul.f32 %v1115, %v600
        %v1372 = vmul.f32 %v1116, %v601
        %v1373 = vmul.f32 %v1117, %v602
        %v1374 = vmul.f32 %v1118, %v603
        %v1375 = vmul.f32 %v1119, %v604
        %v1376 = vmul.f32 %v1120, %v605
        %v1377 = vmul.f32 %v1121, %v606
        %v1378 = vmul.f32 %v1122, %v607
        %v1379 = vmul.f32 %v1123, %v608
        %v1380 = vmul.f32 %v1124, %v609
        %v1381 = vmul.f32 %v1125, %v610
        %v1382 = vmul.f32 %v1126, %v611
        %v1383 = vmul.f32 %v1127, %v612
        %v1384 = vmul.f32 %v1128, %v613
        %v1385 = vmul.f32 %v1129, %v614
        %v1386 = vmul.f32 %v1130, %v615
        %v1387 = vmul.f32 %v1131, %v616
        %v1388 = vmul.f32 %v1132, %v617
        %v1389 = vmul.f32 %v1133, %v618
        %v1390 = vmul.f32 %v1134, %v619
        %v1391 = vmul.f32 %v1135, %v620
        %v1392 = vmul.f32 %v1136, %v621
        %v1393 = vmul.f32 %v1137, %v622
        %v1394 = vmul.f32 %v1138, %v623
        %v1395 = vmul.f32 %v1139, %v624
        %v1396 = vmul.f32 %v1140, %v625
        %v1397 = vmul.f32 %v1141, %v626
        %v1398 = vmul.f32 %v1142, %v627
        %v1399 = vmul.f32 %v1143, %v628
        %v1400 = vmul.f32 %v1144, %v629
        %v1401 = vmul.f32 %v1145, %v630
        %v1402 = vmul.f32 %v1146, %v631
        %v1403 = vmul.f32 %v1147, %v632
        %v1404 = vmul.f32 %v1148, %v633
        %v1405 = vmul.f32 %v1149, %v634
        %v1406 = vmul.f32 %v1150, %v635
        %v1407 = vmul.f32 %v1151, %v636
        %v1408 = vmul.f32 %v1152, %v637
        %v1409 = vmul.f32 %v1153, %v638
        %v1410 = vmul.f32 %v1154, %v639
        %v1411 = vmul.f32 %v1155, %v640
        %v1412 = vmul.f32 %v1156, %v641
        %v1413 = vmul.f32 %v1157, %v642
        %v1414 = vmul.f32 %v1158, %v643
        %v1415 = vmul.f32 %v1159, %v644
        %v1416 = vmul.f32 %v1160, %v645
        %v1417 = vmul.f32 %v1161, %v646
        %v1418 = vmul.f32 %v1162, %v647
        %v1419 = vmul.f32 %v1163, %v648
        %v1420 = vmul.f32 %v1164, %v649
        %v1421 = vmul.f32 %v1165, %v650
        %v1422 = vmul.f32 %v1166, %v651
        %v1423 = vmul.f32 %v1167, %v652
        %v1424 = vmul.f32 %v1168, %v653
        %v1425 = vmul.f32 %v1169, %v654
        %v1426 = vmul.f32 %v1170, %v655
        %v1427 = vmul.f32 %v1171, %v656
        %v1428 = vmul.f32 %v1172, %v657
        %v1429 = vmul.f32 %v1173, %v658
        %v1430 = vmul.f32 %v1174, %v659
        %v1431 = vmul.f32 %v1175, %v660
        %v1432 = vmul.f32 %v1176, %v661
        %v1433 = vmul.f32 %v1177, %v662
        %v1434 = vmul.f32 %v1178, %v663
        %v1435 = vmul.f32 %v1179, %v664
        %v1436 = vmul.f32 %v1180, %v665
        %v1437 = vmul.f32 %v1181, %v666
        %v1438 = vmul.f32 %v1182, %v667
        %v1439 = vmul.f32 %v1183, %v668
        %v1440 = vmul.f32 %v1184, %v669
        %v1441 = vmul.f32 %v1185, %v670
        %v1442 = vmul.f32 %v1186, %v671
        %v1443 = vmul.f32 %v1187, %v672
        %v1444 = vmul.f32 %v1188, %v673
        %v1445 = vmul.f32 %v1189, %v674
        %v1446 = vmul.f32 %v1190, %v675
        %v1447 = vmul.f32 %v1191, %v676
        %v1448 = vmul.f32 %v1192, %v677
        %v1449 = vmul.f32 %v1193, %v678
        %v1450 = vmul.f32 %v1194, %v679
        %v1451 = vmul.f32 %v1195, %v680
        %v1452 = vmul.f32 %v1196, %v681
        %v1453 = vmul.f32 %v1197, %v682
        %v1454 = vmul.f32 %v1198, %v683
        %v1455 = vmul.f32 %v1199, %v684
        %v1456 = vmul.f32 %v1200, %v685
        %v1457 = vmul.f32 %v1201, %v686
        %v1458 = vmul.f32 %v1202, %v687
        %v1459 = vmul.f32 %v1203, %v688
        %v1460 = vmul.f32 %v1204, %v689
        %v1461 = vmul.f32 %v1205, %v690
        %v1462 = vmul.f32 %v1206, %v691
        %v1463 = vmul.f32 %v1207, %v692
        %v1464 = vmul.f32 %v1208, %v693
        %v1465 = vmul.f32 %v1209, %v694
        %v1466 = vmul.f32 %v1210, %v695
        %v1467 = vmul.f32 %v1211, %v696
        %v1468 = vmul.f32 %v1212, %v697
        %v1469 = vmul.f32 %v1213, %v698
        %v1470 = vmul.f32 %v1214, %v699
        %v1471 = vmul.f32 %v1215, %v700
        %v1472 = vmul.f32 %v1216, %v701
        %v1473 = vmul.f32 %v1217, %v702
        %v1474 = vmul.f32 %v1218, %v703
        %v1475 = vmul.f32 %v1219, %v704
        %v1476 = vmul.f32 %v1220, %v705
        %v1477 = vmul.f32 %v1221, %v706
        %v1478 = vmul.f32 %v1222, %v707
        %v1479 = vmul.f32 %v1223, %v708
        %v1480 = vmul.f32 %v1224, %v709
        %v1481 = vmul.f32 %v1225, %v710
        %v1482 = vmul.f32 %v1226, %v711
        %v1483 = vmul.f32 %v1227, %v712
        %v1484 = vmul.f32 %v1228, %v713
        %v1485 = vmul.f32 %v1229, %v714
        %v1486 = vmul.f32 %v1230, %v715
        %v1487 = vmul.f32 %v1231, %v716
        %v1488 = vmul.f32 %v1232, %v717
        %v1489 = vmul.f32 %v1233, %v718
        %v1490 = vmul.f32 %v1234, %v719
        %v1491 = vmul.f32 %v1235, %v720
        %v1492 = vmul.f32 %v1236, %v721
        %v1493 = vmul.f32 %v1237, %v722
        %v1494 = vmul.f32 %v1238, %v723
        %v1495 = vmul.f32 %v1239, %v724
        %v1496 = vmul.f32 %v1240, %v725
        %v1497 = vmul.f32 %v1241, %v726
        %v1498 = vmul.f32 %v1242, %v727
        %v1499 = vmul.f32 %v1243, %v728
        %v1500 = vmul.f32 %v1244, %v729
        %v1501 = vmul.f32 %v1245, %v730
        %v1502 = vmul.f32 %v1246, %v731
        %v1503 = vmul.f32 %v1247, %v732
        %v1504 = vmul.f32 %v1248, %v733
        %v1505 = vmul.f32 %v1249, %v734
        %v1506 = vmul.f32 %v1250, %v735
        %v1507 = vmul.f32 %v1251, %v736
        %v1508 = vmul.f32 %v1252, %v737
        %v1509 = vmul.f32 %v1253, %v738
        %v1510 = vmul.f32 %v1254, %v739
        %v1511 = vmul.f32 %v1255, %v740
        %v1512 = vmul.f32 %v1256, %v741
        %v1513 = vmul.f32 %v1257, %v742
        %v1514 = vmul.f32 %v1258, %v743
        %v1515 = vmul.f32 %v1259, %v744
        %v1516 = vmul.f32 %v1260, %v745
        %v1517 = vmul.f32 %v1261, %v746
        %v1518 = vmul.f32 %v1262, %v747
        %v1519 = vmul.f32 %v1263, %v748
        %v1520 = vmul.f32 %v1264, %v749
        %v1521 = vmul.f32 %v1265, %v750
        %v1522 = vmul.f32 %v1266, %v751
        %v1523 = vmul.f32 %v1267, %v752
        %v1524 = vmul.f32 %v1268, %v753
        %v1525 = vmul.f32 %v1269, %v754
        %v1526 = vmul.f32 %v1270, %v755
        %v1527 = vmul.f32 %v1271, %v756
        %v1528 = vmul.f32 %v1272, %v757
        %v1529 = vmul.f32 %v1273, %v758
        %v1530 = vmul.f32 %v1274, %v759
        %v1531 = vmul.f32 %v1275, %v760
        %v1532 = vmul.f32 %v1276, %v761
        %v1533 = vmul.f32 %v1277, %v762
        %v1534 = vmul.f32 %v1278, %v763
        %v1535 = vmul.f32 %v1279, %v764
        %v1536 = vmul.f32 %v1280, %v765
        %v1537 = vmul.f32 %v1281, %v766
        %v1538 = vmul.f32 %v1282, %v767
        %v1539 = vmul.f32 %v1283, %v768
        %v1540 = vmul.f32 %v1284, %v769
        %v1541 = vmul.f32 %v1285, %v770
        %v1542 = vmul.f32 %v1286, %v771
        %v1543 = vmul.f32 %v1287, %v772
        %v1544 = vmul.f32 %v1288, %v773
        %v1545 = vmul.f32 %v1289, %v774
        %v1546 = vmul.f32 %v1290, %v775
        %v1547 = vmul.f32 %v1291, %v776
        %v1548 = vmul.f32 %v1292, %v777
        %v1549 = vmax.f32 %v266, 1e-24
        %v1550 = vmax.f32 %v267, 1e-24
        %v1551 = vmax.f32 %v268, 1e-24
        %v1552 = vmax.f32 %v269, 1e-24
        %v1553 = vmax.f32 %v270, 1e-24
        %v1554 = vmax.f32 %v271, 1e-24
        %v1555 = vmax.f32 %v272, 1e-24
        %v1556 = vmax.f32 %v273, 1e-24
        %v1557 = vmax.f32 %v274, 1e-24
        %v1558 = vmax.f32 %v275, 1e-24
        %v1559 = vmax.f32 %v276, 1e-24
        %v1560 = vmax.f32 %v277, 1e-24
        %v1561 = vmax.f32 %v278, 1e-24
        %v1562 = vmax.f32 %v279, 1e-24
        %v1563 = vmax.f32 %v280, 1e-24
        %v1564 = vmax.f32 %v281, 1e-24
        %v1565 = vmax.f32 %v282, 1e-24
        %v1566 = vmax.f32 %v283, 1e-24
        %v1567 = vmax.f32 %v284, 1e-24
        %v1568 = vmax.f32 %v285, 1e-24
        %v1569 = vmax.f32 %v286, 1e-24
        %v1570 = vmax.f32 %v287, 1e-24
        %v1571 = vmax.f32 %v288, 1e-24
        %v1572 = vmax.f32 %v289, 1e-24
        %v1573 = vmax.f32 %v290, 1e-24
        %v1574 = vmax.f32 %v291, 1e-24
        %v1575 = vmax.f32 %v292, 1e-24
        %v1576 = vmax.f32 %v293, 1e-24
        %v1577 = vmax.f32 %v294, 1e-24
        %v1578 = vmax.f32 %v295, 1e-24
        %v1579 = vmax.f32 %v296, 1e-24
        %v1580 = vmax.f32 %v297, 1e-24
        %v1581 = vmax.f32 %v298, 1e-24
        %v1582 = vmax.f32 %v299, 1e-24
        %v1583 = vmax.f32 %v300, 1e-24
        %v1584 = vmax.f32 %v301, 1e-24
        %v1585 = vmax.f32 %v302, 1e-24
        %v1586 = vmax.f32 %v303, 1e-24
        %v1587 = vmax.f32 %v304, 1e-24
        %v1588 = vmax.f32 %v305, 1e-24
        %v1589 = vmax.f32 %v306, 1e-24
        %v1590 = vmax.f32 %v307, 1e-24
        %v1591 = vmax.f32 %v308, 1e-24
        %v1592 = vmax.f32 %v309, 1e-24
        %v1593 = vmax.f32 %v310, 1e-24
        %v1594 = vmax.f32 %v311, 1e-24
        %v1595 = vmax.f32 %v312, 1e-24
        %v1596 = vmax.f32 %v313, 1e-24
        %v1597 = vmax.f32 %v314, 1e-24
        %v1598 = vmax.f32 %v315, 1e-24
        %v1599 = vmax.f32 %v316, 1e-24
        %v1600 = vmax.f32 %v317, 1e-24
        %v1601 = vmax.f32 %v318, 1e-24
        %v1602 = vmax.f32 %v319, 1e-24
        %v1603 = vmax.f32 %v320, 1e-24
        %v1604 = vmax.f32 %v321, 1e-24
        %v1605 = vmax.f32 %v322, 1e-24
        %v1606 = vmax.f32 %v323, 1e-24
        %v1607 = vmax.f32 %v324, 1e-24
        %v1608 = vmax.f32 %v325, 1e-24
        %v1609 = vmax.f32 %v326, 1e-24
        %v1610 = vmax.f32 %v327, 1e-24
        %v1611 = vmax.f32 %v328, 1e-24
        %v1612 = vmax.f32 %v329, 1e-24
        %v1613 = vmax.f32 %v330, 1e-24
        %v1614 = vmax.f32 %v331, 1e-24
        %v1615 = vmax.f32 %v332, 1e-24
        %v1616 = vmax.f32 %v333, 1e-24
        %v1617 = vmax.f32 %v334, 1e-24
        %v1618 = vmax.f32 %v335, 1e-24
        %v1619 = vmax.f32 %v336, 1e-24
        %v1620 = vmax.f32 %v337, 1e-24
        %v1621 = vmax.f32 %v338, 1e-24
        %v1622 = vmax.f32 %v339, 1e-24
        %v1623 = vmax.f32 %v340, 1e-24
        %v1624 = vmax.f32 %v341, 1e-24
        %v1625 = vmax.f32 %v342, 1e-24
        %v1626 = vmax.f32 %v343, 1e-24
        %v1627 = vmax.f32 %v344, 1e-24
        %v1628 = vmax.f32 %v345, 1e-24
        %v1629 = vmax.f32 %v346, 1e-24
        %v1630 = vmax.f32 %v347, 1e-24
        %v1631 = vmax.f32 %v348, 1e-24
        %v1632 = vmax.f32 %v349, 1e-24
        %v1633 = vmax.f32 %v350, 1e-24
        %v1634 = vmax.f32 %v351, 1e-24
        %v1635 = vmax.f32 %v352, 1e-24
        %v1636 = vmax.f32 %v353, 1e-24
        %v1637 = vmax.f32 %v354, 1e-24
        %v1638 = vmax.f32 %v355, 1e-24
        %v1639 = vmax.f32 %v356, 1e-24
        %v1640 = vmax.f32 %v357, 1e-24
        %v1641 = vmax.f32 %v358, 1e-24
        %v1642 = vmax.f32 %v359, 1e-24
        %v1643 = vmax.f32 %v360, 1e-24
        %v1644 = vmax.f32 %v361, 1e-24
        %v1645 = vmax.f32 %v362, 1e-24
        %v1646 = vmax.f32 %v363, 1e-24
        %v1647 = vmax.f32 %v364, 1e-24
        %v1648 = vmax.f32 %v365, 1e-24
        %v1649 = vmax.f32 %v366, 1e-24
        %v1650 = vmax.f32 %v367, 1e-24
        %v1651 = vmax.f32 %v368, 1e-24
        %v1652 = vmax.f32 %v369, 1e-24
        %v1653 = vmax.f32 %v370, 1e-24
        %v1654 = vmax.f32 %v371, 1e-24
        %v1655 = vmax.f32 %v372, 1e-24
        %v1656 = vmax.f32 %v373, 1e-24
        %v1657 = vmax.f32 %v374, 1e-24
        %v1658 = vmax.f32 %v375, 1e-24
        %v1659 = vmax.f32 %v376, 1e-24
        %v1660 = vmax.f32 %v377, 1e-24
        %v1661 = vmax.f32 %v378, 1e-24
        %v1662 = vmax.f32 %v379, 1e-24
        %v1663 = vmax.f32 %v380, 1e-24
        %v1664 = vmax.f32 %v381, 1e-24
        %v1665 = vmax.f32 %v382, 1e-24
        %v1666 = vmax.f32 %v383, 1e-24
        %v1667 = vmax.f32 %v384, 1e-24
        %v1668 = vmax.f32 %v385, 1e-24
        %v1669 = vmax.f32 %v386, 1e-24
        %v1670 = vmax.f32 %v387, 1e-24
        %v1671 = vmax.f32 %v388, 1e-24
        %v1672 = vmax.f32 %v389, 1e-24
        %v1673 = vmax.f32 %v390, 1e-24
        %v1674 = vmax.f32 %v391, 1e-24
        %v1675 = vmax.f32 %v392, 1e-24
        %v1676 = vmax.f32 %v393, 1e-24
        %v1677 = vmax.f32 %v394, 1e-24
        %v1678 = vmax.f32 %v395, 1e-24
        %v1679 = vmax.f32 %v396, 1e-24
        %v1680 = vmax.f32 %v397, 1e-24
        %v1681 = vmax.f32 %v398, 1e-24
        %v1682 = vmax.f32 %v399, 1e-24
        %v1683 = vmax.f32 %v400, 1e-24
        %v1684 = vmax.f32 %v401, 1e-24
        %v1685 = vmax.f32 %v402, 1e-24
        %v1686 = vmax.f32 %v403, 1e-24
        %v1687 = vmax.f32 %v404, 1e-24
        %v1688 = vmax.f32 %v405, 1e-24
        %v1689 = vmax.f32 %v406, 1e-24
        %v1690 = vmax.f32 %v407, 1e-24
        %v1691 = vmax.f32 %v408, 1e-24
        %v1692 = vmax.f32 %v409, 1e-24
        %v1693 = vmax.f32 %v410, 1e-24
        %v1694 = vmax.f32 %v411, 1e-24
        %v1695 = vmax.f32 %v412, 1e-24
        %v1696 = vmax.f32 %v413, 1e-24
        %v1697 = vmax.f32 %v414, 1e-24
        %v1698 = vmax.f32 %v415, 1e-24
        %v1699 = vmax.f32 %v416, 1e-24
        %v1700 = vmax.f32 %v417, 1e-24
        %v1701 = vmax.f32 %v418, 1e-24
        %v1702 = vmax.f32 %v419, 1e-24
        %v1703 = vmax.f32 %v420, 1e-24
        %v1704 = vmax.f32 %v421, 1e-24
        %v1705 = vmax.f32 %v422, 1e-24
        %v1706 = vmax.f32 %v423, 1e-24
        %v1707 = vmax.f32 %v424, 1e-24
        %v1708 = vmax.f32 %v425, 1e-24
        %v1709 = vmax.f32 %v426, 1e-24
        %v1710 = vmax.f32 %v427, 1e-24
        %v1711 = vmax.f32 %v428, 1e-24
        %v1712 = vmax.f32 %v429, 1e-24
        %v1713 = vmax.f32 %v430, 1e-24
        %v1714 = vmax.f32 %v431, 1e-24
        %v1715 = vmax.f32 %v432, 1e-24
        %v1716 = vmax.f32 %v433, 1e-24
        %v1717 = vmax.f32 %v434, 1e-24
        %v1718 = vmax.f32 %v435, 1e-24
        %v1719 = vmax.f32 %v436, 1e-24
        %v1720 = vmax.f32 %v437, 1e-24
        %v1721 = vmax.f32 %v438, 1e-24
        %v1722 = vmax.f32 %v439, 1e-24
        %v1723 = vmax.f32 %v440, 1e-24
        %v1724 = vmax.f32 %v441, 1e-24
        %v1725 = vmax.f32 %v442, 1e-24
        %v1726 = vmax.f32 %v443, 1e-24
        %v1727 = vmax.f32 %v444, 1e-24
        %v1728 = vmax.f32 %v445, 1e-24
        %v1729 = vmax.f32 %v446, 1e-24
        %v1730 = vmax.f32 %v447, 1e-24
        %v1731 = vmax.f32 %v448, 1e-24
        %v1732 = vmax.f32 %v449, 1e-24
        %v1733 = vmax.f32 %v450, 1e-24
        %v1734 = vmax.f32 %v451, 1e-24
        %v1735 = vmax.f32 %v452, 1e-24
        %v1736 = vmax.f32 %v453, 1e-24
        %v1737 = vmax.f32 %v454, 1e-24
        %v1738 = vmax.f32 %v455, 1e-24
        %v1739 = vmax.f32 %v456, 1e-24
        %v1740 = vmax.f32 %v457, 1e-24
        %v1741 = vmax.f32 %v458, 1e-24
        %v1742 = vmax.f32 %v459, 1e-24
        %v1743 = vmax.f32 %v460, 1e-24
        %v1744 = vmax.f32 %v461, 1e-24
        %v1745 = vmax.f32 %v462, 1e-24
        %v1746 = vmax.f32 %v463, 1e-24
        %v1747 = vmax.f32 %v464, 1e-24
        %v1748 = vmax.f32 %v465, 1e-24
        %v1749 = vmax.f32 %v466, 1e-24
        %v1750 = vmax.f32 %v467, 1e-24
        %v1751 = vmax.f32 %v468, 1e-24
        %v1752 = vmax.f32 %v469, 1e-24
        %v1753 = vmax.f32 %v470, 1e-24
        %v1754 = vmax.f32 %v471, 1e-24
        %v1755 = vmax.f32 %v472, 1e-24
        %v1756 = vmax.f32 %v473, 1e-24
        %v1757 = vmax.f32 %v474, 1e-24
        %v1758 = vmax.f32 %v475, 1e-24
        %v1759 = vmax.f32 %v476, 1e-24
        %v1760 = vmax.f32 %v477, 1e-24
        %v1761 = vmax.f32 %v478, 1e-24
        %v1762 = vmax.f32 %v479, 1e-24
        %v1763 = vmax.f32 %v480, 1e-24
        %v1764 = vmax.f32 %v481, 1e-24
        %v1765 = vmax.f32 %v482, 1e-24
        %v1766 = vmax.f32 %v483, 1e-24
        %v1767 = vmax.f32 %v484, 1e-24
        %v1768 = vmax.f32 %v485, 1e-24
        %v1769 = vmax.f32 %v486, 1e-24
        %v1770 = vmax.f32 %v487, 1e-24
        %v1771 = vmax.f32 %v488, 1e-24
        %v1772 = vmax.f32 %v489, 1e-24
        %v1773 = vmax.f32 %v490, 1e-24
        %v1774 = vmax.f32 %v491, 1e-24
        %v1775 = vmax.f32 %v492, 1e-24
        %v1776 = vmax.f32 %v493, 1e-24
        %v1777 = vmax.f32 %v494, 1e-24
        %v1778 = vmax.f32 %v495, 1e-24
        %v1779 = vmax.f32 %v496, 1e-24
        %v1780 = vmax.f32 %v497, 1e-24
        %v1781 = vmax.f32 %v498, 1e-24
        %v1782 = vmax.f32 %v499, 1e-24
        %v1783 = vmax.f32 %v500, 1e-24
        %v1784 = vmax.f32 %v501, 1e-24
        %v1785 = vmax.f32 %v502, 1e-24
        %v1786 = vmax.f32 %v503, 1e-24
        %v1787 = vmax.f32 %v504, 1e-24
        %v1788 = vmax.f32 %v505, 1e-24
        %v1789 = vmax.f32 %v506, 1e-24
        %v1790 = vmax.f32 %v507, 1e-24
        %v1791 = vmax.f32 %v508, 1e-24
        %v1792 = vmax.f32 %v509, 1e-24
        %v1793 = vmax.f32 %v510, 1e-24
        %v1794 = vmax.f32 %v511, 1e-24
        %v1795 = vmax.f32 %v512, 1e-24
        %v1796 = vmax.f32 %v513, 1e-24
        %v1797 = vmax.f32 %v514, 1e-24
        %v1798 = vmax.f32 %v515, 1e-24
        %v1799 = vmax.f32 %v516, 1e-24
        %v1800 = vmax.f32 %v517, 1e-24
        %v1801 = vmax.f32 %v518, 1e-24
        %v1802 = vmax.f32 %v519, 1e-24
        %v1803 = vmax.f32 %v520, 1e-24
        %v1804 = vmax.f32 %v521, 1e-24
        %v1805 = vlog2.pop %v1549
        %v1806 = vmul.f32 %v1805, 0.6931472
        %v1807 = vlog2.pop %v1550
        %v1808 = vmul.f32 %v1807, 0.6931472
        %v1809 = vlog2.pop %v1551
        %v1810 = vmul.f32 %v1809, 0.6931472
        %v1811 = vlog2.pop %v1552
        %v1812 = vmul.f32 %v1811, 0.6931472
        %v1813 = vlog2.pop %v1553
        %v1814 = vmul.f32 %v1813, 0.6931472
        %v1815 = vlog2.pop %v1554
        %v1816 = vmul.f32 %v1815, 0.6931472
        %v1817 = vlog2.pop %v1555
        %v1818 = vmul.f32 %v1817, 0.6931472
        %v1819 = vlog2.pop %v1556
        %v1820 = vmul.f32 %v1819, 0.6931472
        %v1821 = vlog2.pop %v1557
        %v1822 = vmul.f32 %v1821, 0.6931472
        %v1823 = vlog2.pop %v1558
        %v1824 = vmul.f32 %v1823, 0.6931472
        %v1825 = vlog2.pop %v1559
        %v1826 = vmul.f32 %v1825, 0.6931472
        %v1827 = vlog2.pop %v1560
        %v1828 = vmul.f32 %v1827, 0.6931472
        %v1829 = vlog2.pop %v1561
        %v1830 = vmul.f32 %v1829, 0.6931472
        %v1831 = vlog2.pop %v1562
        %v1832 = vmul.f32 %v1831, 0.6931472
        %v1833 = vlog2.pop %v1563
        %v1834 = vmul.f32 %v1833, 0.6931472
        %v1835 = vlog2.pop %v1564
        %v1836 = vmul.f32 %v1835, 0.6931472
        %v1837 = vlog2.pop %v1565
        %v1838 = vmul.f32 %v1837, 0.6931472
        %v1839 = vlog2.pop %v1566
        %v1840 = vmul.f32 %v1839, 0.6931472
        %v1841 = vlog2.pop %v1567
        %v1842 = vmul.f32 %v1841, 0.6931472
        %v1843 = vlog2.pop %v1568
        %v1844 = vmul.f32 %v1843, 0.6931472
        %v1845 = vlog2.pop %v1569
        %v1846 = vmul.f32 %v1845, 0.6931472
        %v1847 = vlog2.pop %v1570
        %v1848 = vmul.f32 %v1847, 0.6931472
        %v1849 = vlog2.pop %v1571
        %v1850 = vmul.f32 %v1849, 0.6931472
        %v1851 = vlog2.pop %v1572
        %v1852 = vmul.f32 %v1851, 0.6931472
        %v1853 = vlog2.pop %v1573
        %v1854 = vmul.f32 %v1853, 0.6931472
        %v1855 = vlog2.pop %v1574
        %v1856 = vmul.f32 %v1855, 0.6931472
        %v1857 = vlog2.pop %v1575
        %v1858 = vmul.f32 %v1857, 0.6931472
        %v1859 = vlog2.pop %v1576
        %v1860 = vmul.f32 %v1859, 0.6931472
        %v1861 = vlog2.pop %v1577
        %v1862 = vmul.f32 %v1861, 0.6931472
        %v1863 = vlog2.pop %v1578
        %v1864 = vmul.f32 %v1863, 0.6931472
        %v1865 = vlog2.pop %v1579
        %v1866 = vmul.f32 %v1865, 0.6931472
        %v1867 = vlog2.pop %v1580
        %v1868 = vmul.f32 %v1867, 0.6931472
        %v1869 = vlog2.pop %v1581
        %v1870 = vmul.f32 %v1869, 0.6931472
        %v1871 = vlog2.pop %v1582
        %v1872 = vmul.f32 %v1871, 0.6931472
        %v1873 = vlog2.pop %v1583
        %v1874 = vmul.f32 %v1873, 0.6931472
        %v1875 = vlog2.pop %v1584
        %v1876 = vmul.f32 %v1875, 0.6931472
        %v1877 = vlog2.pop %v1585
        %v1878 = vmul.f32 %v1877, 0.6931472
        %v1879 = vlog2.pop %v1586
        %v1880 = vmul.f32 %v1879, 0.6931472
        %v1881 = vlog2.pop %v1587
        %v1882 = vmul.f32 %v1881, 0.6931472
        %v1883 = vlog2.pop %v1588
        %v1884 = vmul.f32 %v1883, 0.6931472
        %v1885 = vlog2.pop %v1589
        %v1886 = vmul.f32 %v1885, 0.6931472
        %v1887 = vlog2.pop %v1590
        %v1888 = vmul.f32 %v1887, 0.6931472
        %v1889 = vlog2.pop %v1591
        %v1890 = vmul.f32 %v1889, 0.6931472
        %v1891 = vlog2.pop %v1592
        %v1892 = vmul.f32 %v1891, 0.6931472
        %v1893 = vlog2.pop %v1593
        %v1894 = vmul.f32 %v1893, 0.6931472
        %v1895 = vlog2.pop %v1594
        %v1896 = vmul.f32 %v1895, 0.6931472
        %v1897 = vlog2.pop %v1595
        %v1898 = vmul.f32 %v1897, 0.6931472
        %v1899 = vlog2.pop %v1596
        %v1900 = vmul.f32 %v1899, 0.6931472
        %v1901 = vlog2.pop %v1597
        %v1902 = vmul.f32 %v1901, 0.6931472
        %v1903 = vlog2.pop %v1598
        %v1904 = vmul.f32 %v1903, 0.6931472
        %v1905 = vlog2.pop %v1599
        %v1906 = vmul.f32 %v1905, 0.6931472
        %v1907 = vlog2.pop %v1600
        %v1908 = vmul.f32 %v1907, 0.6931472
        %v1909 = vlog2.pop %v1601
        %v1910 = vmul.f32 %v1909, 0.6931472
        %v1911 = vlog2.pop %v1602
        %v1912 = vmul.f32 %v1911, 0.6931472
        %v1913 = vlog2.pop %v1603
        %v1914 = vmul.f32 %v1913, 0.6931472
        %v1915 = vlog2.pop %v1604
        %v1916 = vmul.f32 %v1915, 0.6931472
        %v1917 = vlog2.pop %v1605
        %v1918 = vmul.f32 %v1917, 0.6931472
        %v1919 = vlog2.pop %v1606
        %v1920 = vmul.f32 %v1919, 0.6931472
        %v1921 = vlog2.pop %v1607
        %v1922 = vmul.f32 %v1921, 0.6931472
        %v1923 = vlog2.pop %v1608
        %v1924 = vmul.f32 %v1923, 0.6931472
        %v1925 = vlog2.pop %v1609
        %v1926 = vmul.f32 %v1925, 0.6931472
        %v1927 = vlog2.pop %v1610
        %v1928 = vmul.f32 %v1927, 0.6931472
        %v1929 = vlog2.pop %v1611
        %v1930 = vmul.f32 %v1929, 0.6931472
        %v1931 = vlog2.pop %v1612
        %v1932 = vmul.f32 %v1931, 0.6931472
        %v1933 = vlog2.pop %v1613
        %v1934 = vmul.f32 %v1933, 0.6931472
        %v1935 = vlog2.pop %v1614
        %v1936 = vmul.f32 %v1935, 0.6931472
        %v1937 = vlog2.pop %v1615
        %v1938 = vmul.f32 %v1937, 0.6931472
        %v1939 = vlog2.pop %v1616
        %v1940 = vmul.f32 %v1939, 0.6931472
        %v1941 = vlog2.pop %v1617
        %v1942 = vmul.f32 %v1941, 0.6931472
        %v1943 = vlog2.pop %v1618
        %v1944 = vmul.f32 %v1943, 0.6931472
        %v1945 = vlog2.pop %v1619
        %v1946 = vmul.f32 %v1945, 0.6931472
        %v1947 = vlog2.pop %v1620
        %v1948 = vmul.f32 %v1947, 0.6931472
        %v1949 = vlog2.pop %v1621
        %v1950 = vmul.f32 %v1949, 0.6931472
        %v1951 = vlog2.pop %v1622
        %v1952 = vmul.f32 %v1951, 0.6931472
        %v1953 = vlog2.pop %v1623
        %v1954 = vmul.f32 %v1953, 0.6931472
        %v1955 = vlog2.pop %v1624
        %v1956 = vmul.f32 %v1955, 0.6931472
        %v1957 = vlog2.pop %v1625
        %v1958 = vmul.f32 %v1957, 0.6931472
        %v1959 = vlog2.pop %v1626
        %v1960 = vmul.f32 %v1959, 0.6931472
        %v1961 = vlog2.pop %v1627
        %v1962 = vmul.f32 %v1961, 0.6931472
        %v1963 = vlog2.pop %v1628
        %v1964 = vmul.f32 %v1963, 0.6931472
        %v1965 = vlog2.pop %v1629
        %v1966 = vmul.f32 %v1965, 0.6931472
        %v1967 = vlog2.pop %v1630
        %v1968 = vmul.f32 %v1967, 0.6931472
        %v1969 = vlog2.pop %v1631
        %v1970 = vmul.f32 %v1969, 0.6931472
        %v1971 = vlog2.pop %v1632
        %v1972 = vmul.f32 %v1971, 0.6931472
        %v1973 = vlog2.pop %v1633
        %v1974 = vmul.f32 %v1973, 0.6931472
        %v1975 = vlog2.pop %v1634
        %v1976 = vmul.f32 %v1975, 0.6931472
        %v1977 = vlog2.pop %v1635
        %v1978 = vmul.f32 %v1977, 0.6931472
        %v1979 = vlog2.pop %v1636
        %v1980 = vmul.f32 %v1979, 0.6931472
        %v1981 = vlog2.pop %v1637
        %v1982 = vmul.f32 %v1981, 0.6931472
        %v1983 = vlog2.pop %v1638
        %v1984 = vmul.f32 %v1983, 0.6931472
        %v1985 = vlog2.pop %v1639
        %v1986 = vmul.f32 %v1985, 0.6931472
        %v1987 = vlog2.pop %v1640
        %v1988 = vmul.f32 %v1987, 0.6931472
        %v1989 = vlog2.pop %v1641
        %v1990 = vmul.f32 %v1989, 0.6931472
        %v1991 = vlog2.pop %v1642
        %v1992 = vmul.f32 %v1991, 0.6931472
        %v1993 = vlog2.pop %v1643
        %v1994 = vmul.f32 %v1993, 0.6931472
        %v1995 = vlog2.pop %v1644
        %v1996 = vmul.f32 %v1995, 0.6931472
        %v1997 = vlog2.pop %v1645
        %v1998 = vmul.f32 %v1997, 0.6931472
        %v1999 = vlog2.pop %v1646
        %v2000 = vmul.f32 %v1999, 0.6931472
        %v2001 = vlog2.pop %v1647
        %v2002 = vmul.f32 %v2001, 0.6931472
        %v2003 = vlog2.pop %v1648
        %v2004 = vmul.f32 %v2003, 0.6931472
        %v2005 = vlog2.pop %v1649
        %v2006 = vmul.f32 %v2005, 0.6931472
        %v2007 = vlog2.pop %v1650
        %v2008 = vmul.f32 %v2007, 0.6931472
        %v2009 = vlog2.pop %v1651
        %v2010 = vmul.f32 %v2009, 0.6931472
        %v2011 = vlog2.pop %v1652
        %v2012 = vmul.f32 %v2011, 0.6931472
        %v2013 = vlog2.pop %v1653
        %v2014 = vmul.f32 %v2013, 0.6931472
        %v2015 = vlog2.pop %v1654
        %v2016 = vmul.f32 %v2015, 0.6931472
        %v2017 = vlog2.pop %v1655
        %v2018 = vmul.f32 %v2017, 0.6931472
        %v2019 = vlog2.pop %v1656
        %v2020 = vmul.f32 %v2019, 0.6931472
        %v2021 = vlog2.pop %v1657
        %v2022 = vmul.f32 %v2021, 0.6931472
        %v2023 = vlog2.pop %v1658
        %v2024 = vmul.f32 %v2023, 0.6931472
        %v2025 = vlog2.pop %v1659
        %v2026 = vmul.f32 %v2025, 0.6931472
        %v2027 = vlog2.pop %v1660
        %v2028 = vmul.f32 %v2027, 0.6931472
        %v2029 = vlog2.pop %v1661
        %v2030 = vmul.f32 %v2029, 0.6931472
        %v2031 = vlog2.pop %v1662
        %v2032 = vmul.f32 %v2031, 0.6931472
        %v2033 = vlog2.pop %v1663
        %v2034 = vmul.f32 %v2033, 0.6931472
        %v2035 = vlog2.pop %v1664
        %v2036 = vmul.f32 %v2035, 0.6931472
        %v2037 = vlog2.pop %v1665
        %v2038 = vmul.f32 %v2037, 0.6931472
        %v2039 = vlog2.pop %v1666
        %v2040 = vmul.f32 %v2039, 0.6931472
        %v2041 = vlog2.pop %v1667
        %v2042 = vmul.f32 %v2041, 0.6931472
        %v2043 = vlog2.pop %v1668
        %v2044 = vmul.f32 %v2043, 0.6931472
        %v2045 = vlog2.pop %v1669
        %v2046 = vmul.f32 %v2045, 0.6931472
        %v2047 = vlog2.pop %v1670
        %v2048 = vmul.f32 %v2047, 0.6931472
        %v2049 = vlog2.pop %v1671
        %v2050 = vmul.f32 %v2049, 0.6931472
        %v2051 = vlog2.pop %v1672
        %v2052 = vmul.f32 %v2051, 0.6931472
        %v2053 = vlog2.pop %v1673
        %v2054 = vmul.f32 %v2053, 0.6931472
        %v2055 = vlog2.pop %v1674
        %v2056 = vmul.f32 %v2055, 0.6931472
        %v2057 = vlog2.pop %v1675
        %v2058 = vmul.f32 %v2057, 0.6931472
        %v2059 = vlog2.pop %v1676
        %v2060 = vmul.f32 %v2059, 0.6931472
        %v2061 = vlog2.pop %v1677
        %v2062 = vmul.f32 %v2061, 0.6931472
        %v2063 = vlog2.pop %v1678
        %v2064 = vmul.f32 %v2063, 0.6931472
        %v2065 = vlog2.pop %v1679
        %v2066 = vmul.f32 %v2065, 0.6931472
        %v2067 = vlog2.pop %v1680
        %v2068 = vmul.f32 %v2067, 0.6931472
        %v2069 = vlog2.pop %v1681
        %v2070 = vmul.f32 %v2069, 0.6931472
        %v2071 = vlog2.pop %v1682
        %v2072 = vmul.f32 %v2071, 0.6931472
        %v2073 = vlog2.pop %v1683
        %v2074 = vmul.f32 %v2073, 0.6931472
        %v2075 = vlog2.pop %v1684
        %v2076 = vmul.f32 %v2075, 0.6931472
        %v2077 = vlog2.pop %v1685
        %v2078 = vmul.f32 %v2077, 0.6931472
        %v2079 = vlog2.pop %v1686
        %v2080 = vmul.f32 %v2079, 0.6931472
        %v2081 = vlog2.pop %v1687
        %v2082 = vmul.f32 %v2081, 0.6931472
        %v2083 = vlog2.pop %v1688
        %v2084 = vmul.f32 %v2083, 0.6931472
        %v2085 = vlog2.pop %v1689
        %v2086 = vmul.f32 %v2085, 0.6931472
        %v2087 = vlog2.pop %v1690
        %v2088 = vmul.f32 %v2087, 0.6931472
        %v2089 = vlog2.pop %v1691
        %v2090 = vmul.f32 %v2089, 0.6931472
        %v2091 = vlog2.pop %v1692
        %v2092 = vmul.f32 %v2091, 0.6931472
        %v2093 = vlog2.pop %v1693
        %v2094 = vmul.f32 %v2093, 0.6931472
        %v2095 = vlog2.pop %v1694
        %v2096 = vmul.f32 %v2095, 0.6931472
        %v2097 = vlog2.pop %v1695
        %v2098 = vmul.f32 %v2097, 0.6931472
        %v2099 = vlog2.pop %v1696
        %v2100 = vmul.f32 %v2099, 0.6931472
        %v2101 = vlog2.pop %v1697
        %v2102 = vmul.f32 %v2101, 0.6931472
        %v2103 = vlog2.pop %v1698
        %v2104 = vmul.f32 %v2103, 0.6931472
        %v2105 = vlog2.pop %v1699
        %v2106 = vmul.f32 %v2105, 0.6931472
        %v2107 = vlog2.pop %v1700
        %v2108 = vmul.f32 %v2107, 0.6931472
        %v2109 = vlog2.pop %v1701
        %v2110 = vmul.f32 %v2109, 0.6931472
        %v2111 = vlog2.pop %v1702
        %v2112 = vmul.f32 %v2111, 0.6931472
        %v2113 = vlog2.pop %v1703
        %v2114 = vmul.f32 %v2113, 0.6931472
        %v2115 = vlog2.pop %v1704
        %v2116 = vmul.f32 %v2115, 0.6931472
        %v2117 = vlog2.pop %v1705
        %v2118 = vmul.f32 %v2117, 0.6931472
        %v2119 = vlog2.pop %v1706
        %v2120 = vmul.f32 %v2119, 0.6931472
        %v2121 = vlog2.pop %v1707
        %v2122 = vmul.f32 %v2121, 0.6931472
        %v2123 = vlog2.pop %v1708
        %v2124 = vmul.f32 %v2123, 0.6931472
        %v2125 = vlog2.pop %v1709
        %v2126 = vmul.f32 %v2125, 0.6931472
        %v2127 = vlog2.pop %v1710
        %v2128 = vmul.f32 %v2127, 0.6931472
        %v2129 = vlog2.pop %v1711
        %v2130 = vmul.f32 %v2129, 0.6931472
        %v2131 = vlog2.pop %v1712
        %v2132 = vmul.f32 %v2131, 0.6931472
        %v2133 = vlog2.pop %v1713
        %v2134 = vmul.f32 %v2133, 0.6931472
        %v2135 = vlog2.pop %v1714
        %v2136 = vmul.f32 %v2135, 0.6931472
        %v2137 = vlog2.pop %v1715
        %v2138 = vmul.f32 %v2137, 0.6931472
        %v2139 = vlog2.pop %v1716
        %v2140 = vmul.f32 %v2139, 0.6931472
        %v2141 = vlog2.pop %v1717
        %v2142 = vmul.f32 %v2141, 0.6931472
        %v2143 = vlog2.pop %v1718
        %v2144 = vmul.f32 %v2143, 0.6931472
        %v2145 = vlog2.pop %v1719
        %v2146 = vmul.f32 %v2145, 0.6931472
        %v2147 = vlog2.pop %v1720
        %v2148 = vmul.f32 %v2147, 0.6931472
        %v2149 = vlog2.pop %v1721
        %v2150 = vmul.f32 %v2149, 0.6931472
        %v2151 = vlog2.pop %v1722
        %v2152 = vmul.f32 %v2151, 0.6931472
        %v2153 = vlog2.pop %v1723
        %v2154 = vmul.f32 %v2153, 0.6931472
        %v2155 = vlog2.pop %v1724
        %v2156 = vmul.f32 %v2155, 0.6931472
        %v2157 = vlog2.pop %v1725
        %v2158 = vmul.f32 %v2157, 0.6931472
        %v2159 = vlog2.pop %v1726
        %v2160 = vmul.f32 %v2159, 0.6931472
        %v2161 = vlog2.pop %v1727
        %v2162 = vmul.f32 %v2161, 0.6931472
        %v2163 = vlog2.pop %v1728
        %v2164 = vmul.f32 %v2163, 0.6931472
        %v2165 = vlog2.pop %v1729
        %v2166 = vmul.f32 %v2165, 0.6931472
        %v2167 = vlog2.pop %v1730
        %v2168 = vmul.f32 %v2167, 0.6931472
        %v2169 = vlog2.pop %v1731
        %v2170 = vmul.f32 %v2169, 0.6931472
        %v2171 = vlog2.pop %v1732
        %v2172 = vmul.f32 %v2171, 0.6931472
        %v2173 = vlog2.pop %v1733
        %v2174 = vmul.f32 %v2173, 0.6931472
        %v2175 = vlog2.pop %v1734
        %v2176 = vmul.f32 %v2175, 0.6931472
        %v2177 = vlog2.pop %v1735
        %v2178 = vmul.f32 %v2177, 0.6931472
        %v2179 = vlog2.pop %v1736
        %v2180 = vmul.f32 %v2179, 0.6931472
        %v2181 = vlog2.pop %v1737
        %v2182 = vmul.f32 %v2181, 0.6931472
        %v2183 = vlog2.pop %v1738
        %v2184 = vmul.f32 %v2183, 0.6931472
        %v2185 = vlog2.pop %v1739
        %v2186 = vmul.f32 %v2185, 0.6931472
        %v2187 = vlog2.pop %v1740
        %v2188 = vmul.f32 %v2187, 0.6931472
        %v2189 = vlog2.pop %v1741
        %v2190 = vmul.f32 %v2189, 0.6931472
        %v2191 = vlog2.pop %v1742
        %v2192 = vmul.f32 %v2191, 0.6931472
        %v2193 = vlog2.pop %v1743
        %v2194 = vmul.f32 %v2193, 0.6931472
        %v2195 = vlog2.pop %v1744
        %v2196 = vmul.f32 %v2195, 0.6931472
        %v2197 = vlog2.pop %v1745
        %v2198 = vmul.f32 %v2197, 0.6931472
        %v2199 = vlog2.pop %v1746
        %v2200 = vmul.f32 %v2199, 0.6931472
        %v2201 = vlog2.pop %v1747
        %v2202 = vmul.f32 %v2201, 0.6931472
        %v2203 = vlog2.pop %v1748
        %v2204 = vmul.f32 %v2203, 0.6931472
        %v2205 = vlog2.pop %v1749
        %v2206 = vmul.f32 %v2205, 0.6931472
        %v2207 = vlog2.pop %v1750
        %v2208 = vmul.f32 %v2207, 0.6931472
        %v2209 = vlog2.pop %v1751
        %v2210 = vmul.f32 %v2209, 0.6931472
        %v2211 = vlog2.pop %v1752
        %v2212 = vmul.f32 %v2211, 0.6931472
        %v2213 = vlog2.pop %v1753
        %v2214 = vmul.f32 %v2213, 0.6931472
        %v2215 = vlog2.pop %v1754
        %v2216 = vmul.f32 %v2215, 0.6931472
        %v2217 = vlog2.pop %v1755
        %v2218 = vmul.f32 %v2217, 0.6931472
        %v2219 = vlog2.pop %v1756
        %v2220 = vmul.f32 %v2219, 0.6931472
        %v2221 = vlog2.pop %v1757
        %v2222 = vmul.f32 %v2221, 0.6931472
        %v2223 = vlog2.pop %v1758
        %v2224 = vmul.f32 %v2223, 0.6931472
        %v2225 = vlog2.pop %v1759
        %v2226 = vmul.f32 %v2225, 0.6931472
        %v2227 = vlog2.pop %v1760
        %v2228 = vmul.f32 %v2227, 0.6931472
        %v2229 = vlog2.pop %v1761
        %v2230 = vmul.f32 %v2229, 0.6931472
        %v2231 = vlog2.pop %v1762
        %v2232 = vmul.f32 %v2231, 0.6931472
        %v2233 = vlog2.pop %v1763
        %v2234 = vmul.f32 %v2233, 0.6931472
        %v2235 = vlog2.pop %v1764
        %v2236 = vmul.f32 %v2235, 0.6931472
        %v2237 = vlog2.pop %v1765
        %v2238 = vmul.f32 %v2237, 0.6931472
        %v2239 = vlog2.pop %v1766
        %v2240 = vmul.f32 %v2239, 0.6931472
        %v2241 = vlog2.pop %v1767
        %v2242 = vmul.f32 %v2241, 0.6931472
        %v2243 = vlog2.pop %v1768
        %v2244 = vmul.f32 %v2243, 0.6931472
        %v2245 = vlog2.pop %v1769
        %v2246 = vmul.f32 %v2245, 0.6931472
        %v2247 = vlog2.pop %v1770
        %v2248 = vmul.f32 %v2247, 0.6931472
        %v2249 = vlog2.pop %v1771
        %v2250 = vmul.f32 %v2249, 0.6931472
        %v2251 = vlog2.pop %v1772
        %v2252 = vmul.f32 %v2251, 0.6931472
        %v2253 = vlog2.pop %v1773
        %v2254 = vmul.f32 %v2253, 0.6931472
        %v2255 = vlog2.pop %v1774
        %v2256 = vmul.f32 %v2255, 0.6931472
        %v2257 = vlog2.pop %v1775
        %v2258 = vmul.f32 %v2257, 0.6931472
        %v2259 = vlog2.pop %v1776
        %v2260 = vmul.f32 %v2259, 0.6931472
        %v2261 = vlog2.pop %v1777
        %v2262 = vmul.f32 %v2261, 0.6931472
        %v2263 = vlog2.pop %v1778
        %v2264 = vmul.f32 %v2263, 0.6931472
        %v2265 = vlog2.pop %v1779
        %v2266 = vmul.f32 %v2265, 0.6931472
        %v2267 = vlog2.pop %v1780
        %v2268 = vmul.f32 %v2267, 0.6931472
        %v2269 = vlog2.pop %v1781
        %v2270 = vmul.f32 %v2269, 0.6931472
        %v2271 = vlog2.pop %v1782
        %v2272 = vmul.f32 %v2271, 0.6931472
        %v2273 = vlog2.pop %v1783
        %v2274 = vmul.f32 %v2273, 0.6931472
        %v2275 = vlog2.pop %v1784
        %v2276 = vmul.f32 %v2275, 0.6931472
        %v2277 = vlog2.pop %v1785
        %v2278 = vmul.f32 %v2277, 0.6931472
        %v2279 = vlog2.pop %v1786
        %v2280 = vmul.f32 %v2279, 0.6931472
        %v2281 = vlog2.pop %v1787
        %v2282 = vmul.f32 %v2281, 0.6931472
        %v2283 = vlog2.pop %v1788
        %v2284 = vmul.f32 %v2283, 0.6931472
        %v2285 = vlog2.pop %v1789
        %v2286 = vmul.f32 %v2285, 0.6931472
        %v2287 = vlog2.pop %v1790
        %v2288 = vmul.f32 %v2287, 0.6931472
        %v2289 = vlog2.pop %v1791
        %v2290 = vmul.f32 %v2289, 0.6931472
        %v2291 = vlog2.pop %v1792
        %v2292 = vmul.f32 %v2291, 0.6931472
        %v2293 = vlog2.pop %v1793
        %v2294 = vmul.f32 %v2293, 0.6931472
        %v2295 = vlog2.pop %v1794
        %v2296 = vmul.f32 %v2295, 0.6931472
        %v2297 = vlog2.pop %v1795
        %v2298 = vmul.f32 %v2297, 0.6931472
        %v2299 = vlog2.pop %v1796
        %v2300 = vmul.f32 %v2299, 0.6931472
        %v2301 = vlog2.pop %v1797
        %v2302 = vmul.f32 %v2301, 0.6931472
        %v2303 = vlog2.pop %v1798
        %v2304 = vmul.f32 %v2303, 0.6931472
        %v2305 = vlog2.pop %v1799
        %v2306 = vmul.f32 %v2305, 0.6931472
        %v2307 = vlog2.pop %v1800
        %v2308 = vmul.f32 %v2307, 0.6931472
        %v2309 = vlog2.pop %v1801
        %v2310 = vmul.f32 %v2309, 0.6931472
        %v2311 = vlog2.pop %v1802
        %v2312 = vmul.f32 %v2311, 0.6931472
        %v2313 = vlog2.pop %v1803
        %v2314 = vmul.f32 %v2313, 0.6931472
        %v2315 = vlog2.pop %v1804
        %v2316 = vmul.f32 %v2315, 0.6931472
        %v2317 = vmul.f32 %v1293, %v1806
        %v2318 = vmul.f32 %v1294, %v1808
        %v2319 = vmul.f32 %v1295, %v1810
        %v2320 = vmul.f32 %v1296, %v1812
        %v2321 = vmul.f32 %v1297, %v1814
        %v2322 = vmul.f32 %v1298, %v1816
        %v2323 = vmul.f32 %v1299, %v1818
        %v2324 = vmul.f32 %v1300, %v1820
        %v2325 = vmul.f32 %v1301, %v1822
        %v2326 = vmul.f32 %v1302, %v1824
        %v2327 = vmul.f32 %v1303, %v1826
        %v2328 = vmul.f32 %v1304, %v1828
        %v2329 = vmul.f32 %v1305, %v1830
        %v2330 = vmul.f32 %v1306, %v1832
        %v2331 = vmul.f32 %v1307, %v1834
        %v2332 = vmul.f32 %v1308, %v1836
        %v2333 = vmul.f32 %v1309, %v1838
        %v2334 = vmul.f32 %v1310, %v1840
        %v2335 = vmul.f32 %v1311, %v1842
        %v2336 = vmul.f32 %v1312, %v1844
        %v2337 = vmul.f32 %v1313, %v1846
        %v2338 = vmul.f32 %v1314, %v1848
        %v2339 = vmul.f32 %v1315, %v1850
        %v2340 = vmul.f32 %v1316, %v1852
        %v2341 = vmul.f32 %v1317, %v1854
        %v2342 = vmul.f32 %v1318, %v1856
        %v2343 = vmul.f32 %v1319, %v1858
        %v2344 = vmul.f32 %v1320, %v1860
        %v2345 = vmul.f32 %v1321, %v1862
        %v2346 = vmul.f32 %v1322, %v1864
        %v2347 = vmul.f32 %v1323, %v1866
        %v2348 = vmul.f32 %v1324, %v1868
        %v2349 = vmul.f32 %v1325, %v1870
        %v2350 = vmul.f32 %v1326, %v1872
        %v2351 = vmul.f32 %v1327, %v1874
        %v2352 = vmul.f32 %v1328, %v1876
        %v2353 = vmul.f32 %v1329, %v1878
        %v2354 = vmul.f32 %v1330, %v1880
        %v2355 = vmul.f32 %v1331, %v1882
        %v2356 = vmul.f32 %v1332, %v1884
        %v2357 = vmul.f32 %v1333, %v1886
        %v2358 = vmul.f32 %v1334, %v1888
        %v2359 = vmul.f32 %v1335, %v1890
        %v2360 = vmul.f32 %v1336, %v1892
        %v2361 = vmul.f32 %v1337, %v1894
        %v2362 = vmul.f32 %v1338, %v1896
        %v2363 = vmul.f32 %v1339, %v1898
        %v2364 = vmul.f32 %v1340, %v1900
        %v2365 = vmul.f32 %v1341, %v1902
        %v2366 = vmul.f32 %v1342, %v1904
        %v2367 = vmul.f32 %v1343, %v1906
        %v2368 = vmul.f32 %v1344, %v1908
        %v2369 = vmul.f32 %v1345, %v1910
        %v2370 = vmul.f32 %v1346, %v1912
        %v2371 = vmul.f32 %v1347, %v1914
        %v2372 = vmul.f32 %v1348, %v1916
        %v2373 = vmul.f32 %v1349, %v1918
        %v2374 = vmul.f32 %v1350, %v1920
        %v2375 = vmul.f32 %v1351, %v1922
        %v2376 = vmul.f32 %v1352, %v1924
        %v2377 = vmul.f32 %v1353, %v1926
        %v2378 = vmul.f32 %v1354, %v1928
        %v2379 = vmul.f32 %v1355, %v1930
        %v2380 = vmul.f32 %v1356, %v1932
        %v2381 = vmul.f32 %v1357, %v1934
        %v2382 = vmul.f32 %v1358, %v1936
        %v2383 = vmul.f32 %v1359, %v1938
        %v2384 = vmul.f32 %v1360, %v1940
        %v2385 = vmul.f32 %v1361, %v1942
        %v2386 = vmul.f32 %v1362, %v1944
        %v2387 = vmul.f32 %v1363, %v1946
        %v2388 = vmul.f32 %v1364, %v1948
        %v2389 = vmul.f32 %v1365, %v1950
        %v2390 = vmul.f32 %v1366, %v1952
        %v2391 = vmul.f32 %v1367, %v1954
        %v2392 = vmul.f32 %v1368, %v1956
        %v2393 = vmul.f32 %v1369, %v1958
        %v2394 = vmul.f32 %v1370, %v1960
        %v2395 = vmul.f32 %v1371, %v1962
        %v2396 = vmul.f32 %v1372, %v1964
        %v2397 = vmul.f32 %v1373, %v1966
        %v2398 = vmul.f32 %v1374, %v1968
        %v2399 = vmul.f32 %v1375, %v1970
        %v2400 = vmul.f32 %v1376, %v1972
        %v2401 = vmul.f32 %v1377, %v1974
        %v2402 = vmul.f32 %v1378, %v1976
        %v2403 = vmul.f32 %v1379, %v1978
        %v2404 = vmul.f32 %v1380, %v1980
        %v2405 = vmul.f32 %v1381, %v1982
        %v2406 = vmul.f32 %v1382, %v1984
        %v2407 = vmul.f32 %v1383, %v1986
        %v2408 = vmul.f32 %v1384, %v1988
        %v2409 = vmul.f32 %v1385, %v1990
        %v2410 = vmul.f32 %v1386, %v1992
        %v2411 = vmul.f32 %v1387, %v1994
        %v2412 = vmul.f32 %v1388, %v1996
        %v2413 = vmul.f32 %v1389, %v1998
        %v2414 = vmul.f32 %v1390, %v2000
        %v2415 = vmul.f32 %v1391, %v2002
        %v2416 = vmul.f32 %v1392, %v2004
        %v2417 = vmul.f32 %v1393, %v2006
        %v2418 = vmul.f32 %v1394, %v2008
        %v2419 = vmul.f32 %v1395, %v2010
        %v2420 = vmul.f32 %v1396, %v2012
        %v2421 = vmul.f32 %v1397, %v2014
        %v2422 = vmul.f32 %v1398, %v2016
        %v2423 = vmul.f32 %v1399, %v2018
        %v2424 = vmul.f32 %v1400, %v2020
        %v2425 = vmul.f32 %v1401, %v2022
        %v2426 = vmul.f32 %v1402, %v2024
        %v2427 = vmul.f32 %v1403, %v2026
        %v2428 = vmul.f32 %v1404, %v2028
        %v2429 = vmul.f32 %v1405, %v2030
        %v2430 = vmul.f32 %v1406, %v2032
        %v2431 = vmul.f32 %v1407, %v2034
        %v2432 = vmul.f32 %v1408, %v2036
        %v2433 = vmul.f32 %v1409, %v2038
        %v2434 = vmul.f32 %v1410, %v2040
        %v2435 = vmul.f32 %v1411, %v2042
        %v2436 = vmul.f32 %v1412, %v2044
        %v2437 = vmul.f32 %v1413, %v2046
        %v2438 = vmul.f32 %v1414, %v2048
        %v2439 = vmul.f32 %v1415, %v2050
        %v2440 = vmul.f32 %v1416, %v2052
        %v2441 = vmul.f32 %v1417, %v2054
        %v2442 = vmul.f32 %v1418, %v2056
        %v2443 = vmul.f32 %v1419, %v2058
        %v2444 = vmul.f32 %v1420, %v2060
        %v2445 = vmul.f32 %v1421, %v2062
        %v2446 = vmul.f32 %v1422, %v2064
        %v2447 = vmul.f32 %v1423, %v2066
        %v2448 = vmul.f32 %v1424, %v2068
        %v2449 = vmul.f32 %v1425, %v2070
        %v2450 = vmul.f32 %v1426, %v2072
        %v2451 = vmul.f32 %v1427, %v2074
        %v2452 = vmul.f32 %v1428, %v2076
        %v2453 = vmul.f32 %v1429, %v2078
        %v2454 = vmul.f32 %v1430, %v2080
        %v2455 = vmul.f32 %v1431, %v2082
        %v2456 = vmul.f32 %v1432, %v2084
        %v2457 = vmul.f32 %v1433, %v2086
        %v2458 = vmul.f32 %v1434, %v2088
        %v2459 = vmul.f32 %v1435, %v2090
        %v2460 = vmul.f32 %v1436, %v2092
        %v2461 = vmul.f32 %v1437, %v2094
        %v2462 = vmul.f32 %v1438, %v2096
        %v2463 = vmul.f32 %v1439, %v2098
        %v2464 = vmul.f32 %v1440, %v2100
        %v2465 = vmul.f32 %v1441, %v2102
        %v2466 = vmul.f32 %v1442, %v2104
        %v2467 = vmul.f32 %v1443, %v2106
        %v2468 = vmul.f32 %v1444, %v2108
        %v2469 = vmul.f32 %v1445, %v2110
        %v2470 = vmul.f32 %v1446, %v2112
        %v2471 = vmul.f32 %v1447, %v2114
        %v2472 = vmul.f32 %v1448, %v2116
        %v2473 = vmul.f32 %v1449, %v2118
        %v2474 = vmul.f32 %v1450, %v2120
        %v2475 = vmul.f32 %v1451, %v2122
        %v2476 = vmul.f32 %v1452, %v2124
        %v2477 = vmul.f32 %v1453, %v2126
        %v2478 = vmul.f32 %v1454, %v2128
        %v2479 = vmul.f32 %v1455, %v2130
        %v2480 = vmul.f32 %v1456, %v2132
        %v2481 = vmul.f32 %v1457, %v2134
        %v2482 = vmul.f32 %v1458, %v2136
        %v2483 = vmul.f32 %v1459, %v2138
        %v2484 = vmul.f32 %v1460, %v2140
        %v2485 = vmul.f32 %v1461, %v2142
        %v2486 = vmul.f32 %v1462, %v2144
        %v2487 = vmul.f32 %v1463, %v2146
        %v2488 = vmul.f32 %v1464, %v2148
        %v2489 = vmul.f32 %v1465, %v2150
        %v2490 = vmul.f32 %v1466, %v2152
        %v2491 = vmul.f32 %v1467, %v2154
        %v2492 = vmul.f32 %v1468, %v2156
        %v2493 = vmul.f32 %v1469, %v2158
        %v2494 = vmul.f32 %v1470, %v2160
        %v2495 = vmul.f32 %v1471, %v2162
        %v2496 = vmul.f32 %v1472, %v2164
        %v2497 = vmul.f32 %v1473, %v2166
        %v2498 = vmul.f32 %v1474, %v2168
        %v2499 = vmul.f32 %v1475, %v2170
        %v2500 = vmul.f32 %v1476, %v2172
        %v2501 = vmul.f32 %v1477, %v2174
        %v2502 = vmul.f32 %v1478, %v2176
        %v2503 = vmul.f32 %v1479, %v2178
        %v2504 = vmul.f32 %v1480, %v2180
        %v2505 = vmul.f32 %v1481, %v2182
        %v2506 = vmul.f32 %v1482, %v2184
        %v2507 = vmul.f32 %v1483, %v2186
        %v2508 = vmul.f32 %v1484, %v2188
        %v2509 = vmul.f32 %v1485, %v2190
        %v2510 = vmul.f32 %v1486, %v2192
        %v2511 = vmul.f32 %v1487, %v2194
        %v2512 = vmul.f32 %v1488, %v2196
        %v2513 = vmul.f32 %v1489, %v2198
        %v2514 = vmul.f32 %v1490, %v2200
        %v2515 = vmul.f32 %v1491, %v2202
        %v2516 = vmul.f32 %v1492, %v2204
        %v2517 = vmul.f32 %v1493, %v2206
        %v2518 = vmul.f32 %v1494, %v2208
        %v2519 = vmul.f32 %v1495, %v2210
        %v2520 = vmul.f32 %v1496, %v2212
        %v2521 = vmul.f32 %v1497, %v2214
        %v2522 = vmul.f32 %v1498, %v2216
        %v2523 = vmul.f32 %v1499, %v2218
        %v2524 = vmul.f32 %v1500, %v2220
        %v2525 = vmul.f32 %v1501, %v2222
        %v2526 = vmul.f32 %v1502, %v2224
        %v2527 = vmul.f32 %v1503, %v2226
        %v2528 = vmul.f32 %v1504, %v2228
        %v2529 = vmul.f32 %v1505, %v2230
        %v2530 = vmul.f32 %v1506, %v2232
        %v2531 = vmul.f32 %v1507, %v2234
        %v2532 = vmul.f32 %v1508, %v2236
        %v2533 = vmul.f32 %v1509, %v2238
        %v2534 = vmul.f32 %v1510, %v2240
        %v2535 = vmul.f32 %v1511, %v2242
        %v2536 = vmul.f32 %v1512, %v2244
        %v2537 = vmul.f32 %v1513, %v2246
        %v2538 = vmul.f32 %v1514, %v2248
        %v2539 = vmul.f32 %v1515, %v2250
        %v2540 = vmul.f32 %v1516, %v2252
        %v2541 = vmul.f32 %v1517, %v2254
        %v2542 = vmul.f32 %v1518, %v2256
        %v2543 = vmul.f32 %v1519, %v2258
        %v2544 = vmul.f32 %v1520, %v2260
        %v2545 = vmul.f32 %v1521, %v2262
        %v2546 = vmul.f32 %v1522, %v2264
        %v2547 = vmul.f32 %v1523, %v2266
        %v2548 = vmul.f32 %v1524, %v2268
        %v2549 = vmul.f32 %v1525, %v2270
        %v2550 = vmul.f32 %v1526, %v2272
        %v2551 = vmul.f32 %v1527, %v2274
        %v2552 = vmul.f32 %v1528, %v2276
        %v2553 = vmul.f32 %v1529, %v2278
        %v2554 = vmul.f32 %v1530, %v2280
        %v2555 = vmul.f32 %v1531, %v2282
        %v2556 = vmul.f32 %v1532, %v2284
        %v2557 = vmul.f32 %v1533, %v2286
        %v2558 = vmul.f32 %v1534, %v2288
        %v2559 = vmul.f32 %v1535, %v2290
        %v2560 = vmul.f32 %v1536, %v2292
        %v2561 = vmul.f32 %v1537, %v2294
        %v2562 = vmul.f32 %v1538, %v2296
        %v2563 = vmul.f32 %v1539, %v2298
        %v2564 = vmul.f32 %v1540, %v2300
        %v2565 = vmul.f32 %v1541, %v2302
        %v2566 = vmul.f32 %v1542, %v2304
        %v2567 = vmul.f32 %v1543, %v2306
        %v2568 = vmul.f32 %v1544, %v2308
        %v2569 = vmul.f32 %v1545, %v2310
        %v2570 = vmul.f32 %v1546, %v2312
        %v2571 = vmul.f32 %v1547, %v2314
        %v2572 = vmul.f32 %v1548, %v2316
        %v2573 = vsub.f32 1.0, %v522
        %v2574 = vsub.f32 1.0, %v523
        %v2575 = vsub.f32 1.0, %v524
        %v2576 = vsub.f32 1.0, %v525
        %v2577 = vsub.f32 1.0, %v526
        %v2578 = vsub.f32 1.0, %v527
        %v2579 = vsub.f32 1.0, %v528
        %v2580 = vsub.f32 1.0, %v529
        %v2581 = vsub.f32 1.0, %v530
        %v2582 = vsub.f32 1.0, %v531
        %v2583 = vsub.f32 1.0, %v532
        %v2584 = vsub.f32 1.0, %v533
        %v2585 = vsub.f32 1.0, %v534
        %v2586 = vsub.f32 1.0, %v535
        %v2587 = vsub.f32 1.0, %v536
        %v2588 = vsub.f32 1.0, %v537
        %v2589 = vsub.f32 1.0, %v538
        %v2590 = vsub.f32 1.0, %v539
        %v2591 = vsub.f32 1.0, %v540
        %v2592 = vsub.f32 1.0, %v541
        %v2593 = vsub.f32 1.0, %v542
        %v2594 = vsub.f32 1.0, %v543
        %v2595 = vsub.f32 1.0, %v544
        %v2596 = vsub.f32 1.0, %v545
        %v2597 = vsub.f32 1.0, %v546
        %v2598 = vsub.f32 1.0, %v547
        %v2599 = vsub.f32 1.0, %v548
        %v2600 = vsub.f32 1.0, %v549
        %v2601 = vsub.f32 1.0, %v550
        %v2602 = vsub.f32 1.0, %v551
        %v2603 = vsub.f32 1.0, %v552
        %v2604 = vsub.f32 1.0, %v553
        %v2605 = vsub.f32 1.0, %v554
        %v2606 = vsub.f32 1.0, %v555
        %v2607 = vsub.f32 1.0, %v556
        %v2608 = vsub.f32 1.0, %v557
        %v2609 = vsub.f32 1.0, %v558
        %v2610 = vsub.f32 1.0, %v559
        %v2611 = vsub.f32 1.0, %v560
        %v2612 = vsub.f32 1.0, %v561
        %v2613 = vsub.f32 1.0, %v562
        %v2614 = vsub.f32 1.0, %v563
        %v2615 = vsub.f32 1.0, %v564
        %v2616 = vsub.f32 1.0, %v565
        %v2617 = vsub.f32 1.0, %v566
        %v2618 = vsub.f32 1.0, %v567
        %v2619 = vsub.f32 1.0, %v568
        %v2620 = vsub.f32 1.0, %v569
        %v2621 = vsub.f32 1.0, %v570
        %v2622 = vsub.f32 1.0, %v571
        %v2623 = vsub.f32 1.0, %v572
        %v2624 = vsub.f32 1.0, %v573
        %v2625 = vsub.f32 1.0, %v574
        %v2626 = vsub.f32 1.0, %v575
        %v2627 = vsub.f32 1.0, %v576
        %v2628 = vsub.f32 1.0, %v577
        %v2629 = vsub.f32 1.0, %v578
        %v2630 = vsub.f32 1.0, %v579
        %v2631 = vsub.f32 1.0, %v580
        %v2632 = vsub.f32 1.0, %v581
        %v2633 = vsub.f32 1.0, %v582
        %v2634 = vsub.f32 1.0, %v583
        %v2635 = vsub.f32 1.0, %v584
        %v2636 = vsub.f32 1.0, %v585
        %v2637 = vsub.f32 1.0, %v586
        %v2638 = vsub.f32 1.0, %v587
        %v2639 = vsub.f32 1.0, %v588
        %v2640 = vsub.f32 1.0, %v589
        %v2641 = vsub.f32 1.0, %v590
        %v2642 = vsub.f32 1.0, %v591
        %v2643 = vsub.f32 1.0, %v592
        %v2644 = vsub.f32 1.0, %v593
        %v2645 = vsub.f32 1.0, %v594
        %v2646 = vsub.f32 1.0, %v595
        %v2647 = vsub.f32 1.0, %v596
        %v2648 = vsub.f32 1.0, %v597
        %v2649 = vsub.f32 1.0, %v598
        %v2650 = vsub.f32 1.0, %v599
        %v2651 = vsub.f32 1.0, %v600
        %v2652 = vsub.f32 1.0, %v601
        %v2653 = vsub.f32 1.0, %v602
        %v2654 = vsub.f32 1.0, %v603
        %v2655 = vsub.f32 1.0, %v604
        %v2656 = vsub.f32 1.0, %v605
        %v2657 = vsub.f32 1.0, %v606
        %v2658 = vsub.f32 1.0, %v607
        %v2659 = vsub.f32 1.0, %v608
        %v2660 = vsub.f32 1.0, %v609
        %v2661 = vsub.f32 1.0, %v610
        %v2662 = vsub.f32 1.0, %v611
        %v2663 = vsub.f32 1.0, %v612
        %v2664 = vsub.f32 1.0, %v613
        %v2665 = vsub.f32 1.0, %v614
        %v2666 = vsub.f32 1.0, %v615
        %v2667 = vsub.f32 1.0, %v616
        %v2668 = vsub.f32 1.0, %v617
        %v2669 = vsub.f32 1.0, %v618
        %v2670 = vsub.f32 1.0, %v619
        %v2671 = vsub.f32 1.0, %v620
        %v2672 = vsub.f32 1.0, %v621
        %v2673 = vsub.f32 1.0, %v622
        %v2674 = vsub.f32 1.0, %v623
        %v2675 = vsub.f32 1.0, %v624
        %v2676 = vsub.f32 1.0, %v625
        %v2677 = vsub.f32 1.0, %v626
        %v2678 = vsub.f32 1.0, %v627
        %v2679 = vsub.f32 1.0, %v628
        %v2680 = vsub.f32 1.0, %v629
        %v2681 = vsub.f32 1.0, %v630
        %v2682 = vsub.f32 1.0, %v631
        %v2683 = vsub.f32 1.0, %v632
        %v2684 = vsub.f32 1.0, %v633
        %v2685 = vsub.f32 1.0, %v634
        %v2686 = vsub.f32 1.0, %v635
        %v2687 = vsub.f32 1.0, %v636
        %v2688 = vsub.f32 1.0, %v637
        %v2689 = vsub.f32 1.0, %v638
        %v2690 = vsub.f32 1.0, %v639
        %v2691 = vsub.f32 1.0, %v640
        %v2692 = vsub.f32 1.0, %v641
        %v2693 = vsub.f32 1.0, %v642
        %v2694 = vsub.f32 1.0, %v643
        %v2695 = vsub.f32 1.0, %v644
        %v2696 = vsub.f32 1.0, %v645
        %v2697 = vsub.f32 1.0, %v646
        %v2698 = vsub.f32 1.0, %v647
        %v2699 = vsub.f32 1.0, %v648
        %v2700 = vsub.f32 1.0, %v649
        %v2701 = vsub.f32 1.0, %v650
        %v2702 = vsub.f32 1.0, %v651
        %v2703 = vsub.f32 1.0, %v652
        %v2704 = vsub.f32 1.0, %v653
        %v2705 = vsub.f32 1.0, %v654
        %v2706 = vsub.f32 1.0, %v655
        %v2707 = vsub.f32 1.0, %v656
        %v2708 = vsub.f32 1.0, %v657
        %v2709 = vsub.f32 1.0, %v658
        %v2710 = vsub.f32 1.0, %v659
        %v2711 = vsub.f32 1.0, %v660
        %v2712 = vsub.f32 1.0, %v661
        %v2713 = vsub.f32 1.0, %v662
        %v2714 = vsub.f32 1.0, %v663
        %v2715 = vsub.f32 1.0, %v664
        %v2716 = vsub.f32 1.0, %v665
        %v2717 = vsub.f32 1.0, %v666
        %v2718 = vsub.f32 1.0, %v667
        %v2719 = vsub.f32 1.0, %v668
        %v2720 = vsub.f32 1.0, %v669
        %v2721 = vsub.f32 1.0, %v670
        %v2722 = vsub.f32 1.0, %v671
        %v2723 = vsub.f32 1.0, %v672
        %v2724 = vsub.f32 1.0, %v673
        %v2725 = vsub.f32 1.0, %v674
        %v2726 = vsub.f32 1.0, %v675
        %v2727 = vsub.f32 1.0, %v676
        %v2728 = vsub.f32 1.0, %v677
        %v2729 = vsub.f32 1.0, %v678
        %v2730 = vsub.f32 1.0, %v679
        %v2731 = vsub.f32 1.0, %v680
        %v2732 = vsub.f32 1.0, %v681
        %v2733 = vsub.f32 1.0, %v682
        %v2734 = vsub.f32 1.0, %v683
        %v2735 = vsub.f32 1.0, %v684
        %v2736 = vsub.f32 1.0, %v685
        %v2737 = vsub.f32 1.0, %v686
        %v2738 = vsub.f32 1.0, %v687
        %v2739 = vsub.f32 1.0, %v688
        %v2740 = vsub.f32 1.0, %v689
        %v2741 = vsub.f32 1.0, %v690
        %v2742 = vsub.f32 1.0, %v691
        %v2743 = vsub.f32 1.0, %v692
        %v2744 = vsub.f32 1.0, %v693
        %v2745 = vsub.f32 1.0, %v694
        %v2746 = vsub.f32 1.0, %v695
        %v2747 = vsub.f32 1.0, %v696
        %v2748 = vsub.f32 1.0, %v697
        %v2749 = vsub.f32 1.0, %v698
        %v2750 = vsub.f32 1.0, %v699
        %v2751 = vsub.f32 1.0, %v700
        %v2752 = vsub.f32 1.0, %v701
        %v2753 = vsub.f32 1.0, %v702
        %v2754 = vsub.f32 1.0, %v703
        %v2755 = vsub.f32 1.0, %v704
        %v2756 = vsub.f32 1.0, %v705
        %v2757 = vsub.f32 1.0, %v706
        %v2758 = vsub.f32 1.0, %v707
        %v2759 = vsub.f32 1.0, %v708
        %v2760 = vsub.f32 1.0, %v709
        %v2761 = vsub.f32 1.0, %v710
        %v2762 = vsub.f32 1.0, %v711
        %v2763 = vsub.f32 1.0, %v712
        %v2764 = vsub.f32 1.0, %v713
        %v2765 = vsub.f32 1.0, %v714
        %v2766 = vsub.f32 1.0, %v715
        %v2767 = vsub.f32 1.0, %v716
        %v2768 = vsub.f32 1.0, %v717
        %v2769 = vsub.f32 1.0, %v718
        %v2770 = vsub.f32 1.0, %v719
        %v2771 = vsub.f32 1.0, %v720
        %v2772 = vsub.f32 1.0, %v721
        %v2773 = vsub.f32 1.0, %v722
        %v2774 = vsub.f32 1.0, %v723
        %v2775 = vsub.f32 1.0, %v724
        %v2776 = vsub.f32 1.0, %v725
        %v2777 = vsub.f32 1.0, %v726
        %v2778 = vsub.f32 1.0, %v727
        %v2779 = vsub.f32 1.0, %v728
        %v2780 = vsub.f32 1.0, %v729
        %v2781 = vsub.f32 1.0, %v730
        %v2782 = vsub.f32 1.0, %v731
        %v2783 = vsub.f32 1.0, %v732
        %v2784 = vsub.f32 1.0, %v733
        %v2785 = vsub.f32 1.0, %v734
        %v2786 = vsub.f32 1.0, %v735
        %v2787 = vsub.f32 1.0, %v736
        %v2788 = vsub.f32 1.0, %v737
        %v2789 = vsub.f32 1.0, %v738
        %v2790 = vsub.f32 1.0, %v739
        %v2791 = vsub.f32 1.0, %v740
        %v2792 = vsub.f32 1.0, %v741
        %v2793 = vsub.f32 1.0, %v742
        %v2794 = vsub.f32 1.0, %v743
        %v2795 = vsub.f32 1.0, %v744
        %v2796 = vsub.f32 1.0, %v745
        %v2797 = vsub.f32 1.0, %v746
        %v2798 = vsub.f32 1.0, %v747
        %v2799 = vsub.f32 1.0, %v748
        %v2800 = vsub.f32 1.0, %v749
        %v2801 = vsub.f32 1.0, %v750
        %v2802 = vsub.f32 1.0, %v751
        %v2803 = vsub.f32 1.0, %v752
        %v2804 = vsub.f32 1.0, %v753
        %v2805 = vsub.f32 1.0, %v754
        %v2806 = vsub.f32 1.0, %v755
        %v2807 = vsub.f32 1.0, %v756
        %v2808 = vsub.f32 1.0, %v757
        %v2809 = vsub.f32 1.0, %v758
        %v2810 = vsub.f32 1.0, %v759
        %v2811 = vsub.f32 1.0, %v760
        %v2812 = vsub.f32 1.0, %v761
        %v2813 = vsub.f32 1.0, %v762
        %v2814 = vsub.f32 1.0, %v763
        %v2815 = vsub.f32 1.0, %v764
        %v2816 = vsub.f32 1.0, %v765
        %v2817 = vsub.f32 1.0, %v766
        %v2818 = vsub.f32 1.0, %v767
        %v2819 = vsub.f32 1.0, %v768
        %v2820 = vsub.f32 1.0, %v769
        %v2821 = vsub.f32 1.0, %v770
        %v2822 = vsub.f32 1.0, %v771
        %v2823 = vsub.f32 1.0, %v772
        %v2824 = vsub.f32 1.0, %v773
        %v2825 = vsub.f32 1.0, %v774
        %v2826 = vsub.f32 1.0, %v775
        %v2827 = vsub.f32 1.0, %v776
        %v2828 = vsub.f32 1.0, %v777
        %v2829 = vsub.f32 1.0, %v266
        %v2830 = vsub.f32 1.0, %v267
        %v2831 = vsub.f32 1.0, %v268
        %v2832 = vsub.f32 1.0, %v269
        %v2833 = vsub.f32 1.0, %v270
        %v2834 = vsub.f32 1.0, %v271
        %v2835 = vsub.f32 1.0, %v272
        %v2836 = vsub.f32 1.0, %v273
        %v2837 = vsub.f32 1.0, %v274
        %v2838 = vsub.f32 1.0, %v275
        %v2839 = vsub.f32 1.0, %v276
        %v2840 = vsub.f32 1.0, %v277
        %v2841 = vsub.f32 1.0, %v278
        %v2842 = vsub.f32 1.0, %v279
        %v2843 = vsub.f32 1.0, %v280
        %v2844 = vsub.f32 1.0, %v281
        %v2845 = vsub.f32 1.0, %v282
        %v2846 = vsub.f32 1.0, %v283
        %v2847 = vsub.f32 1.0, %v284
        %v2848 = vsub.f32 1.0, %v285
        %v2849 = vsub.f32 1.0, %v286
        %v2850 = vsub.f32 1.0, %v287
        %v2851 = vsub.f32 1.0, %v288
        %v2852 = vsub.f32 1.0, %v289
        %v2853 = vsub.f32 1.0, %v290
        %v2854 = vsub.f32 1.0, %v291
        %v2855 = vsub.f32 1.0, %v292
        %v2856 = vsub.f32 1.0, %v293
        %v2857 = vsub.f32 1.0, %v294
        %v2858 = vsub.f32 1.0, %v295
        %v2859 = vsub.f32 1.0, %v296
        %v2860 = vsub.f32 1.0, %v297
        %v2861 = vsub.f32 1.0, %v298
        %v2862 = vsub.f32 1.0, %v299
        %v2863 = vsub.f32 1.0, %v300
        %v2864 = vsub.f32 1.0, %v301
        %v2865 = vsub.f32 1.0, %v302
        %v2866 = vsub.f32 1.0, %v303
        %v2867 = vsub.f32 1.0, %v304
        %v2868 = vsub.f32 1.0, %v305
        %v2869 = vsub.f32 1.0, %v306
        %v2870 = vsub.f32 1.0, %v307
        %v2871 = vsub.f32 1.0, %v308
        %v2872 = vsub.f32 1.0, %v309
        %v2873 = vsub.f32 1.0, %v310
        %v2874 = vsub.f32 1.0, %v311
        %v2875 = vsub.f32 1.0, %v312
        %v2876 = vsub.f32 1.0, %v313
        %v2877 = vsub.f32 1.0, %v314
        %v2878 = vsub.f32 1.0, %v315
        %v2879 = vsub.f32 1.0, %v316
        %v2880 = vsub.f32 1.0, %v317
        %v2881 = vsub.f32 1.0, %v318
        %v2882 = vsub.f32 1.0, %v319
        %v2883 = vsub.f32 1.0, %v320
        %v2884 = vsub.f32 1.0, %v321
        %v2885 = vsub.f32 1.0, %v322
        %v2886 = vsub.f32 1.0, %v323
        %v2887 = vsub.f32 1.0, %v324
        %v2888 = vsub.f32 1.0, %v325
        %v2889 = vsub.f32 1.0, %v326
        %v2890 = vsub.f32 1.0, %v327
        %v2891 = vsub.f32 1.0, %v328
        %v2892 = vsub.f32 1.0, %v329
        %v2893 = vsub.f32 1.0, %v330
        %v2894 = vsub.f32 1.0, %v331
        %v2895 = vsub.f32 1.0, %v332
        %v2896 = vsub.f32 1.0, %v333
        %v2897 = vsub.f32 1.0, %v334
        %v2898 = vsub.f32 1.0, %v335
        %v2899 = vsub.f32 1.0, %v336
        %v2900 = vsub.f32 1.0, %v337
        %v2901 = vsub.f32 1.0, %v338
        %v2902 = vsub.f32 1.0, %v339
        %v2903 = vsub.f32 1.0, %v340
        %v2904 = vsub.f32 1.0, %v341
        %v2905 = vsub.f32 1.0, %v342
        %v2906 = vsub.f32 1.0, %v343
        %v2907 = vsub.f32 1.0, %v344
        %v2908 = vsub.f32 1.0, %v345
        %v2909 = vsub.f32 1.0, %v346
        %v2910 = vsub.f32 1.0, %v347
        %v2911 = vsub.f32 1.0, %v348
        %v2912 = vsub.f32 1.0, %v349
        %v2913 = vsub.f32 1.0, %v350
        %v2914 = vsub.f32 1.0, %v351
        %v2915 = vsub.f32 1.0, %v352
        %v2916 = vsub.f32 1.0, %v353
        %v2917 = vsub.f32 1.0, %v354
        %v2918 = vsub.f32 1.0, %v355
        %v2919 = vsub.f32 1.0, %v356
        %v2920 = vsub.f32 1.0, %v357
        %v2921 = vsub.f32 1.0, %v358
        %v2922 = vsub.f32 1.0, %v359
        %v2923 = vsub.f32 1.0, %v360
        %v2924 = vsub.f32 1.0, %v361
        %v2925 = vsub.f32 1.0, %v362
        %v2926 = vsub.f32 1.0, %v363
        %v2927 = vsub.f32 1.0, %v364
        %v2928 = vsub.f32 1.0, %v365
        %v2929 = vsub.f32 1.0, %v366
        %v2930 = vsub.f32 1.0, %v367
        %v2931 = vsub.f32 1.0, %v368
        %v2932 = vsub.f32 1.0, %v369
        %v2933 = vsub.f32 1.0, %v370
        %v2934 = vsub.f32 1.0, %v371
        %v2935 = vsub.f32 1.0, %v372
        %v2936 = vsub.f32 1.0, %v373
        %v2937 = vsub.f32 1.0, %v374
        %v2938 = vsub.f32 1.0, %v375
        %v2939 = vsub.f32 1.0, %v376
        %v2940 = vsub.f32 1.0, %v377
        %v2941 = vsub.f32 1.0, %v378
        %v2942 = vsub.f32 1.0, %v379
        %v2943 = vsub.f32 1.0, %v380
        %v2944 = vsub.f32 1.0, %v381
        %v2945 = vsub.f32 1.0, %v382
        %v2946 = vsub.f32 1.0, %v383
        %v2947 = vsub.f32 1.0, %v384
        %v2948 = vsub.f32 1.0, %v385
        %v2949 = vsub.f32 1.0, %v386
        %v2950 = vsub.f32 1.0, %v387
        %v2951 = vsub.f32 1.0, %v388
        %v2952 = vsub.f32 1.0, %v389
        %v2953 = vsub.f32 1.0, %v390
        %v2954 = vsub.f32 1.0, %v391
        %v2955 = vsub.f32 1.0, %v392
        %v2956 = vsub.f32 1.0, %v393
        %v2957 = vsub.f32 1.0, %v394
        %v2958 = vsub.f32 1.0, %v395
        %v2959 = vsub.f32 1.0, %v396
        %v2960 = vsub.f32 1.0, %v397
        %v2961 = vsub.f32 1.0, %v398
        %v2962 = vsub.f32 1.0, %v399
        %v2963 = vsub.f32 1.0, %v400
        %v2964 = vsub.f32 1.0, %v401
        %v2965 = vsub.f32 1.0, %v402
        %v2966 = vsub.f32 1.0, %v403
        %v2967 = vsub.f32 1.0, %v404
        %v2968 = vsub.f32 1.0, %v405
        %v2969 = vsub.f32 1.0, %v406
        %v2970 = vsub.f32 1.0, %v407
        %v2971 = vsub.f32 1.0, %v408
        %v2972 = vsub.f32 1.0, %v409
        %v2973 = vsub.f32 1.0, %v410
        %v2974 = vsub.f32 1.0, %v411
        %v2975 = vsub.f32 1.0, %v412
        %v2976 = vsub.f32 1.0, %v413
        %v2977 = vsub.f32 1.0, %v414
        %v2978 = vsub.f32 1.0, %v415
        %v2979 = vsub.f32 1.0, %v416
        %v2980 = vsub.f32 1.0, %v417
        %v2981 = vsub.f32 1.0, %v418
        %v2982 = vsub.f32 1.0, %v419
        %v2983 = vsub.f32 1.0, %v420
        %v2984 = vsub.f32 1.0, %v421
        %v2985 = vsub.f32 1.0, %v422
        %v2986 = vsub.f32 1.0, %v423
        %v2987 = vsub.f32 1.0, %v424
        %v2988 = vsub.f32 1.0, %v425
        %v2989 = vsub.f32 1.0, %v426
        %v2990 = vsub.f32 1.0, %v427
        %v2991 = vsub.f32 1.0, %v428
        %v2992 = vsub.f32 1.0, %v429
        %v2993 = vsub.f32 1.0, %v430
        %v2994 = vsub.f32 1.0, %v431
        %v2995 = vsub.f32 1.0, %v432
        %v2996 = vsub.f32 1.0, %v433
        %v2997 = vsub.f32 1.0, %v434
        %v2998 = vsub.f32 1.0, %v435
        %v2999 = vsub.f32 1.0, %v436
        %v3000 = vsub.f32 1.0, %v437
        %v3001 = vsub.f32 1.0, %v438
        %v3002 = vsub.f32 1.0, %v439
        %v3003 = vsub.f32 1.0, %v440
        %v3004 = vsub.f32 1.0, %v441
        %v3005 = vsub.f32 1.0, %v442
        %v3006 = vsub.f32 1.0, %v443
        %v3007 = vsub.f32 1.0, %v444
        %v3008 = vsub.f32 1.0, %v445
        %v3009 = vsub.f32 1.0, %v446
        %v3010 = vsub.f32 1.0, %v447
        %v3011 = vsub.f32 1.0, %v448
        %v3012 = vsub.f32 1.0, %v449
        %v3013 = vsub.f32 1.0, %v450
        %v3014 = vsub.f32 1.0, %v451
        %v3015 = vsub.f32 1.0, %v452
        %v3016 = vsub.f32 1.0, %v453
        %v3017 = vsub.f32 1.0, %v454
        %v3018 = vsub.f32 1.0, %v455
        %v3019 = vsub.f32 1.0, %v456
        %v3020 = vsub.f32 1.0, %v457
        %v3021 = vsub.f32 1.0, %v458
        %v3022 = vsub.f32 1.0, %v459
        %v3023 = vsub.f32 1.0, %v460
        %v3024 = vsub.f32 1.0, %v461
        %v3025 = vsub.f32 1.0, %v462
        %v3026 = vsub.f32 1.0, %v463
        %v3027 = vsub.f32 1.0, %v464
        %v3028 = vsub.f32 1.0, %v465
        %v3029 = vsub.f32 1.0, %v466
        %v3030 = vsub.f32 1.0, %v467
        %v3031 = vsub.f32 1.0, %v468
        %v3032 = vsub.f32 1.0, %v469
        %v3033 = vsub.f32 1.0, %v470
        %v3034 = vsub.f32 1.0, %v471
        %v3035 = vsub.f32 1.0, %v472
        %v3036 = vsub.f32 1.0, %v473
        %v3037 = vsub.f32 1.0, %v474
        %v3038 = vsub.f32 1.0, %v475
        %v3039 = vsub.f32 1.0, %v476
        %v3040 = vsub.f32 1.0, %v477
        %v3041 = vsub.f32 1.0, %v478
        %v3042 = vsub.f32 1.0, %v479
        %v3043 = vsub.f32 1.0, %v480
        %v3044 = vsub.f32 1.0, %v481
        %v3045 = vsub.f32 1.0, %v482
        %v3046 = vsub.f32 1.0, %v483
        %v3047 = vsub.f32 1.0, %v484
        %v3048 = vsub.f32 1.0, %v485
        %v3049 = vsub.f32 1.0, %v486
        %v3050 = vsub.f32 1.0, %v487
        %v3051 = vsub.f32 1.0, %v488
        %v3052 = vsub.f32 1.0, %v489
        %v3053 = vsub.f32 1.0, %v490
        %v3054 = vsub.f32 1.0, %v491
        %v3055 = vsub.f32 1.0, %v492
        %v3056 = vsub.f32 1.0, %v493
        %v3057 = vsub.f32 1.0, %v494
        %v3058 = vsub.f32 1.0, %v495
        %v3059 = vsub.f32 1.0, %v496
        %v3060 = vsub.f32 1.0, %v497
        %v3061 = vsub.f32 1.0, %v498
        %v3062 = vsub.f32 1.0, %v499
        %v3063 = vsub.f32 1.0, %v500
        %v3064 = vsub.f32 1.0, %v501
        %v3065 = vsub.f32 1.0, %v502
        %v3066 = vsub.f32 1.0, %v503
        %v3067 = vsub.f32 1.0, %v504
        %v3068 = vsub.f32 1.0, %v505
        %v3069 = vsub.f32 1.0, %v506
        %v3070 = vsub.f32 1.0, %v507
        %v3071 = vsub.f32 1.0, %v508
        %v3072 = vsub.f32 1.0, %v509
        %v3073 = vsub.f32 1.0, %v510
        %v3074 = vsub.f32 1.0, %v511
        %v3075 = vsub.f32 1.0, %v512
        %v3076 = vsub.f32 1.0, %v513
        %v3077 = vsub.f32 1.0, %v514
        %v3078 = vsub.f32 1.0, %v515
        %v3079 = vsub.f32 1.0, %v516
        %v3080 = vsub.f32 1.0, %v517
        %v3081 = vsub.f32 1.0, %v518
        %v3082 = vsub.f32 1.0, %v519
        %v3083 = vsub.f32 1.0, %v520
        %v3084 = vsub.f32 1.0, %v521
        %v3085 = vmax.f32 %v2829, 1e-24
        %v3086 = vmax.f32 %v2830, 1e-24
        %v3087 = vmax.f32 %v2831, 1e-24
        %v3088 = vmax.f32 %v2832, 1e-24
        %v3089 = vmax.f32 %v2833, 1e-24
        %v3090 = vmax.f32 %v2834, 1e-24
        %v3091 = vmax.f32 %v2835, 1e-24
        %v3092 = vmax.f32 %v2836, 1e-24
        %v3093 = vmax.f32 %v2837, 1e-24
        %v3094 = vmax.f32 %v2838, 1e-24
        %v3095 = vmax.f32 %v2839, 1e-24
        %v3096 = vmax.f32 %v2840, 1e-24
        %v3097 = vmax.f32 %v2841, 1e-24
        %v3098 = vmax.f32 %v2842, 1e-24
        %v3099 = vmax.f32 %v2843, 1e-24
        %v3100 = vmax.f32 %v2844, 1e-24
        %v3101 = vmax.f32 %v2845, 1e-24
        %v3102 = vmax.f32 %v2846, 1e-24
        %v3103 = vmax.f32 %v2847, 1e-24
        %v3104 = vmax.f32 %v2848, 1e-24
        %v3105 = vmax.f32 %v2849, 1e-24
        %v3106 = vmax.f32 %v2850, 1e-24
        %v3107 = vmax.f32 %v2851, 1e-24
        %v3108 = vmax.f32 %v2852, 1e-24
        %v3109 = vmax.f32 %v2853, 1e-24
        %v3110 = vmax.f32 %v2854, 1e-24
        %v3111 = vmax.f32 %v2855, 1e-24
        %v3112 = vmax.f32 %v2856, 1e-24
        %v3113 = vmax.f32 %v2857, 1e-24
        %v3114 = vmax.f32 %v2858, 1e-24
        %v3115 = vmax.f32 %v2859, 1e-24
        %v3116 = vmax.f32 %v2860, 1e-24
        %v3117 = vmax.f32 %v2861, 1e-24
        %v3118 = vmax.f32 %v2862, 1e-24
        %v3119 = vmax.f32 %v2863, 1e-24
        %v3120 = vmax.f32 %v2864, 1e-24
        %v3121 = vmax.f32 %v2865, 1e-24
        %v3122 = vmax.f32 %v2866, 1e-24
        %v3123 = vmax.f32 %v2867, 1e-24
        %v3124 = vmax.f32 %v2868, 1e-24
        %v3125 = vmax.f32 %v2869, 1e-24
        %v3126 = vmax.f32 %v2870, 1e-24
        %v3127 = vmax.f32 %v2871, 1e-24
        %v3128 = vmax.f32 %v2872, 1e-24
        %v3129 = vmax.f32 %v2873, 1e-24
        %v3130 = vmax.f32 %v2874, 1e-24
        %v3131 = vmax.f32 %v2875, 1e-24
        %v3132 = vmax.f32 %v2876, 1e-24
        %v3133 = vmax.f32 %v2877, 1e-24
        %v3134 = vmax.f32 %v2878, 1e-24
        %v3135 = vmax.f32 %v2879, 1e-24
        %v3136 = vmax.f32 %v2880, 1e-24
        %v3137 = vmax.f32 %v2881, 1e-24
        %v3138 = vmax.f32 %v2882, 1e-24
        %v3139 = vmax.f32 %v2883, 1e-24
        %v3140 = vmax.f32 %v2884, 1e-24
        %v3141 = vmax.f32 %v2885, 1e-24
        %v3142 = vmax.f32 %v2886, 1e-24
        %v3143 = vmax.f32 %v2887, 1e-24
        %v3144 = vmax.f32 %v2888, 1e-24
        %v3145 = vmax.f32 %v2889, 1e-24
        %v3146 = vmax.f32 %v2890, 1e-24
        %v3147 = vmax.f32 %v2891, 1e-24
        %v3148 = vmax.f32 %v2892, 1e-24
        %v3149 = vmax.f32 %v2893, 1e-24
        %v3150 = vmax.f32 %v2894, 1e-24
        %v3151 = vmax.f32 %v2895, 1e-24
        %v3152 = vmax.f32 %v2896, 1e-24
        %v3153 = vmax.f32 %v2897, 1e-24
        %v3154 = vmax.f32 %v2898, 1e-24
        %v3155 = vmax.f32 %v2899, 1e-24
        %v3156 = vmax.f32 %v2900, 1e-24
        %v3157 = vmax.f32 %v2901, 1e-24
        %v3158 = vmax.f32 %v2902, 1e-24
        %v3159 = vmax.f32 %v2903, 1e-24
        %v3160 = vmax.f32 %v2904, 1e-24
        %v3161 = vmax.f32 %v2905, 1e-24
        %v3162 = vmax.f32 %v2906, 1e-24
        %v3163 = vmax.f32 %v2907, 1e-24
        %v3164 = vmax.f32 %v2908, 1e-24
        %v3165 = vmax.f32 %v2909, 1e-24
        %v3166 = vmax.f32 %v2910, 1e-24
        %v3167 = vmax.f32 %v2911, 1e-24
        %v3168 = vmax.f32 %v2912, 1e-24
        %v3169 = vmax.f32 %v2913, 1e-24
        %v3170 = vmax.f32 %v2914, 1e-24
        %v3171 = vmax.f32 %v2915, 1e-24
        %v3172 = vmax.f32 %v2916, 1e-24
        %v3173 = vmax.f32 %v2917, 1e-24
        %v3174 = vmax.f32 %v2918, 1e-24
        %v3175 = vmax.f32 %v2919, 1e-24
        %v3176 = vmax.f32 %v2920, 1e-24
        %v3177 = vmax.f32 %v2921, 1e-24
        %v3178 = vmax.f32 %v2922, 1e-24
        %v3179 = vmax.f32 %v2923, 1e-24
        %v3180 = vmax.f32 %v2924, 1e-24
        %v3181 = vmax.f32 %v2925, 1e-24
        %v3182 = vmax.f32 %v2926, 1e-24
        %v3183 = vmax.f32 %v2927, 1e-24
        %v3184 = vmax.f32 %v2928, 1e-24
        %v3185 = vmax.f32 %v2929, 1e-24
        %v3186 = vmax.f32 %v2930, 1e-24
        %v3187 = vmax.f32 %v2931, 1e-24
        %v3188 = vmax.f32 %v2932, 1e-24
        %v3189 = vmax.f32 %v2933, 1e-24
        %v3190 = vmax.f32 %v2934, 1e-24
        %v3191 = vmax.f32 %v2935, 1e-24
        %v3192 = vmax.f32 %v2936, 1e-24
        %v3193 = vmax.f32 %v2937, 1e-24
        %v3194 = vmax.f32 %v2938, 1e-24
        %v3195 = vmax.f32 %v2939, 1e-24
        %v3196 = vmax.f32 %v2940, 1e-24
        %v3197 = vmax.f32 %v2941, 1e-24
        %v3198 = vmax.f32 %v2942, 1e-24
        %v3199 = vmax.f32 %v2943, 1e-24
        %v3200 = vmax.f32 %v2944, 1e-24
        %v3201 = vmax.f32 %v2945, 1e-24
        %v3202 = vmax.f32 %v2946, 1e-24
        %v3203 = vmax.f32 %v2947, 1e-24
        %v3204 = vmax.f32 %v2948, 1e-24
        %v3205 = vmax.f32 %v2949, 1e-24
        %v3206 = vmax.f32 %v2950, 1e-24
        %v3207 = vmax.f32 %v2951, 1e-24
        %v3208 = vmax.f32 %v2952, 1e-24
        %v3209 = vmax.f32 %v2953, 1e-24
        %v3210 = vmax.f32 %v2954, 1e-24
        %v3211 = vmax.f32 %v2955, 1e-24
        %v3212 = vmax.f32 %v2956, 1e-24
        %v3213 = vmax.f32 %v2957, 1e-24
        %v3214 = vmax.f32 %v2958, 1e-24
        %v3215 = vmax.f32 %v2959, 1e-24
        %v3216 = vmax.f32 %v2960, 1e-24
        %v3217 = vmax.f32 %v2961, 1e-24
        %v3218 = vmax.f32 %v2962, 1e-24
        %v3219 = vmax.f32 %v2963, 1e-24
        %v3220 = vmax.f32 %v2964, 1e-24
        %v3221 = vmax.f32 %v2965, 1e-24
        %v3222 = vmax.f32 %v2966, 1e-24
        %v3223 = vmax.f32 %v2967, 1e-24
        %v3224 = vmax.f32 %v2968, 1e-24
        %v3225 = vmax.f32 %v2969, 1e-24
        %v3226 = vmax.f32 %v2970, 1e-24
        %v3227 = vmax.f32 %v2971, 1e-24
        %v3228 = vmax.f32 %v2972, 1e-24
        %v3229 = vmax.f32 %v2973, 1e-24
        %v3230 = vmax.f32 %v2974, 1e-24
        %v3231 = vmax.f32 %v2975, 1e-24
        %v3232 = vmax.f32 %v2976, 1e-24
        %v3233 = vmax.f32 %v2977, 1e-24
        %v3234 = vmax.f32 %v2978, 1e-24
        %v3235 = vmax.f32 %v2979, 1e-24
        %v3236 = vmax.f32 %v2980, 1e-24
        %v3237 = vmax.f32 %v2981, 1e-24
        %v3238 = vmax.f32 %v2982, 1e-24
        %v3239 = vmax.f32 %v2983, 1e-24
        %v3240 = vmax.f32 %v2984, 1e-24
        %v3241 = vmax.f32 %v2985, 1e-24
        %v3242 = vmax.f32 %v2986, 1e-24
        %v3243 = vmax.f32 %v2987, 1e-24
        %v3244 = vmax.f32 %v2988, 1e-24
        %v3245 = vmax.f32 %v2989, 1e-24
        %v3246 = vmax.f32 %v2990, 1e-24
        %v3247 = vmax.f32 %v2991, 1e-24
        %v3248 = vmax.f32 %v2992, 1e-24
        %v3249 = vmax.f32 %v2993, 1e-24
        %v3250 = vmax.f32 %v2994, 1e-24
        %v3251 = vmax.f32 %v2995, 1e-24
        %v3252 = vmax.f32 %v2996, 1e-24
        %v3253 = vmax.f32 %v2997, 1e-24
        %v3254 = vmax.f32 %v2998, 1e-24
        %v3255 = vmax.f32 %v2999, 1e-24
        %v3256 = vmax.f32 %v3000, 1e-24
        %v3257 = vmax.f32 %v3001, 1e-24
        %v3258 = vmax.f32 %v3002, 1e-24
        %v3259 = vmax.f32 %v3003, 1e-24
        %v3260 = vmax.f32 %v3004, 1e-24
        %v3261 = vmax.f32 %v3005, 1e-24
        %v3262 = vmax.f32 %v3006, 1e-24
        %v3263 = vmax.f32 %v3007, 1e-24
        %v3264 = vmax.f32 %v3008, 1e-24
        %v3265 = vmax.f32 %v3009, 1e-24
        %v3266 = vmax.f32 %v3010, 1e-24
        %v3267 = vmax.f32 %v3011, 1e-24
        %v3268 = vmax.f32 %v3012, 1e-24
        %v3269 = vmax.f32 %v3013, 1e-24
        %v3270 = vmax.f32 %v3014, 1e-24
        %v3271 = vmax.f32 %v3015, 1e-24
        %v3272 = vmax.f32 %v3016, 1e-24
        %v3273 = vmax.f32 %v3017, 1e-24
        %v3274 = vmax.f32 %v3018, 1e-24
        %v3275 = vmax.f32 %v3019, 1e-24
        %v3276 = vmax.f32 %v3020, 1e-24
        %v3277 = vmax.f32 %v3021, 1e-24
        %v3278 = vmax.f32 %v3022, 1e-24
        %v3279 = vmax.f32 %v3023, 1e-24
        %v3280 = vmax.f32 %v3024, 1e-24
        %v3281 = vmax.f32 %v3025, 1e-24
        %v3282 = vmax.f32 %v3026, 1e-24
        %v3283 = vmax.f32 %v3027, 1e-24
        %v3284 = vmax.f32 %v3028, 1e-24
        %v3285 = vmax.f32 %v3029, 1e-24
        %v3286 = vmax.f32 %v3030, 1e-24
        %v3287 = vmax.f32 %v3031, 1e-24
        %v3288 = vmax.f32 %v3032, 1e-24
        %v3289 = vmax.f32 %v3033, 1e-24
        %v3290 = vmax.f32 %v3034, 1e-24
        %v3291 = vmax.f32 %v3035, 1e-24
        %v3292 = vmax.f32 %v3036, 1e-24
        %v3293 = vmax.f32 %v3037, 1e-24
        %v3294 = vmax.f32 %v3038, 1e-24
        %v3295 = vmax.f32 %v3039, 1e-24
        %v3296 = vmax.f32 %v3040, 1e-24
        %v3297 = vmax.f32 %v3041, 1e-24
        %v3298 = vmax.f32 %v3042, 1e-24
        %v3299 = vmax.f32 %v3043, 1e-24
        %v3300 = vmax.f32 %v3044, 1e-24
        %v3301 = vmax.f32 %v3045, 1e-24
        %v3302 = vmax.f32 %v3046, 1e-24
        %v3303 = vmax.f32 %v3047, 1e-24
        %v3304 = vmax.f32 %v3048, 1e-24
        %v3305 = vmax.f32 %v3049, 1e-24
        %v3306 = vmax.f32 %v3050, 1e-24
        %v3307 = vmax.f32 %v3051, 1e-24
        %v3308 = vmax.f32 %v3052, 1e-24
        %v3309 = vmax.f32 %v3053, 1e-24
        %v3310 = vmax.f32 %v3054, 1e-24
        %v3311 = vmax.f32 %v3055, 1e-24
        %v3312 = vmax.f32 %v3056, 1e-24
        %v3313 = vmax.f32 %v3057, 1e-24
        %v3314 = vmax.f32 %v3058, 1e-24
        %v3315 = vmax.f32 %v3059, 1e-24
        %v3316 = vmax.f32 %v3060, 1e-24
        %v3317 = vmax.f32 %v3061, 1e-24
        %v3318 = vmax.f32 %v3062, 1e-24
        %v3319 = vmax.f32 %v3063, 1e-24
        %v3320 = vmax.f32 %v3064, 1e-24
        %v3321 = vmax.f32 %v3065, 1e-24
        %v3322 = vmax.f32 %v3066, 1e-24
        %v3323 = vmax.f32 %v3067, 1e-24
        %v3324 = vmax.f32 %v3068, 1e-24
        %v3325 = vmax.f32 %v3069, 1e-24
        %v3326 = vmax.f32 %v3070, 1e-24
        %v3327 = vmax.f32 %v3071, 1e-24
        %v3328 = vmax.f32 %v3072, 1e-24
        %v3329 = vmax.f32 %v3073, 1e-24
        %v3330 = vmax.f32 %v3074, 1e-24
        %v3331 = vmax.f32 %v3075, 1e-24
        %v3332 = vmax.f32 %v3076, 1e-24
        %v3333 = vmax.f32 %v3077, 1e-24
        %v3334 = vmax.f32 %v3078, 1e-24
        %v3335 = vmax.f32 %v3079, 1e-24
        %v3336 = vmax.f32 %v3080, 1e-24
        %v3337 = vmax.f32 %v3081, 1e-24
        %v3338 = vmax.f32 %v3082, 1e-24
        %v3339 = vmax.f32 %v3083, 1e-24
        %v3340 = vmax.f32 %v3084, 1e-24
        %v3341 = vlog2.pop %v3085
        %v3342 = vmul.f32 %v3341, 0.6931472
        %v3343 = vlog2.pop %v3086
        %v3344 = vmul.f32 %v3343, 0.6931472
        %v3345 = vlog2.pop %v3087
        %v3346 = vmul.f32 %v3345, 0.6931472
        %v3347 = vlog2.pop %v3088
        %v3348 = vmul.f32 %v3347, 0.6931472
        %v3349 = vlog2.pop %v3089
        %v3350 = vmul.f32 %v3349, 0.6931472
        %v3351 = vlog2.pop %v3090
        %v3352 = vmul.f32 %v3351, 0.6931472
        %v3353 = vlog2.pop %v3091
        %v3354 = vmul.f32 %v3353, 0.6931472
        %v3355 = vlog2.pop %v3092
        %v3356 = vmul.f32 %v3355, 0.6931472
        %v3357 = vlog2.pop %v3093
        %v3358 = vmul.f32 %v3357, 0.6931472
        %v3359 = vlog2.pop %v3094
        %v3360 = vmul.f32 %v3359, 0.6931472
        %v3361 = vlog2.pop %v3095
        %v3362 = vmul.f32 %v3361, 0.6931472
        %v3363 = vlog2.pop %v3096
        %v3364 = vmul.f32 %v3363, 0.6931472
        %v3365 = vlog2.pop %v3097
        %v3366 = vmul.f32 %v3365, 0.6931472
        %v3367 = vlog2.pop %v3098
        %v3368 = vmul.f32 %v3367, 0.6931472
        %v3369 = vlog2.pop %v3099
        %v3370 = vmul.f32 %v3369, 0.6931472
        %v3371 = vlog2.pop %v3100
        %v3372 = vmul.f32 %v3371, 0.6931472
        %v3373 = vlog2.pop %v3101
        %v3374 = vmul.f32 %v3373, 0.6931472
        %v3375 = vlog2.pop %v3102
        %v3376 = vmul.f32 %v3375, 0.6931472
        %v3377 = vlog2.pop %v3103
        %v3378 = vmul.f32 %v3377, 0.6931472
        %v3379 = vlog2.pop %v3104
        %v3380 = vmul.f32 %v3379, 0.6931472
        %v3381 = vlog2.pop %v3105
        %v3382 = vmul.f32 %v3381, 0.6931472
        %v3383 = vlog2.pop %v3106
        %v3384 = vmul.f32 %v3383, 0.6931472
        %v3385 = vlog2.pop %v3107
        %v3386 = vmul.f32 %v3385, 0.6931472
        %v3387 = vlog2.pop %v3108
        %v3388 = vmul.f32 %v3387, 0.6931472
        %v3389 = vlog2.pop %v3109
        %v3390 = vmul.f32 %v3389, 0.6931472
        %v3391 = vlog2.pop %v3110
        %v3392 = vmul.f32 %v3391, 0.6931472
        %v3393 = vlog2.pop %v3111
        %v3394 = vmul.f32 %v3393, 0.6931472
        %v3395 = vlog2.pop %v3112
        %v3396 = vmul.f32 %v3395, 0.6931472
        %v3397 = vlog2.pop %v3113
        %v3398 = vmul.f32 %v3397, 0.6931472
        %v3399 = vlog2.pop %v3114
        %v3400 = vmul.f32 %v3399, 0.6931472
        %v3401 = vlog2.pop %v3115
        %v3402 = vmul.f32 %v3401, 0.6931472
        %v3403 = vlog2.pop %v3116
        %v3404 = vmul.f32 %v3403, 0.6931472
        %v3405 = vlog2.pop %v3117
        %v3406 = vmul.f32 %v3405, 0.6931472
        %v3407 = vlog2.pop %v3118
        %v3408 = vmul.f32 %v3407, 0.6931472
        %v3409 = vlog2.pop %v3119
        %v3410 = vmul.f32 %v3409, 0.6931472
        %v3411 = vlog2.pop %v3120
        %v3412 = vmul.f32 %v3411, 0.6931472
        %v3413 = vlog2.pop %v3121
        %v3414 = vmul.f32 %v3413, 0.6931472
        %v3415 = vlog2.pop %v3122
        %v3416 = vmul.f32 %v3415, 0.6931472
        %v3417 = vlog2.pop %v3123
        %v3418 = vmul.f32 %v3417, 0.6931472
        %v3419 = vlog2.pop %v3124
        %v3420 = vmul.f32 %v3419, 0.6931472
        %v3421 = vlog2.pop %v3125
        %v3422 = vmul.f32 %v3421, 0.6931472
        %v3423 = vlog2.pop %v3126
        %v3424 = vmul.f32 %v3423, 0.6931472
        %v3425 = vlog2.pop %v3127
        %v3426 = vmul.f32 %v3425, 0.6931472
        %v3427 = vlog2.pop %v3128
        %v3428 = vmul.f32 %v3427, 0.6931472
        %v3429 = vlog2.pop %v3129
        %v3430 = vmul.f32 %v3429, 0.6931472
        %v3431 = vlog2.pop %v3130
        %v3432 = vmul.f32 %v3431, 0.6931472
        %v3433 = vlog2.pop %v3131
        %v3434 = vmul.f32 %v3433, 0.6931472
        %v3435 = vlog2.pop %v3132
        %v3436 = vmul.f32 %v3435, 0.6931472
        %v3437 = vlog2.pop %v3133
        %v3438 = vmul.f32 %v3437, 0.6931472
        %v3439 = vlog2.pop %v3134
        %v3440 = vmul.f32 %v3439, 0.6931472
        %v3441 = vlog2.pop %v3135
        %v3442 = vmul.f32 %v3441, 0.6931472
        %v3443 = vlog2.pop %v3136
        %v3444 = vmul.f32 %v3443, 0.6931472
        %v3445 = vlog2.pop %v3137
        %v3446 = vmul.f32 %v3445, 0.6931472
        %v3447 = vlog2.pop %v3138
        %v3448 = vmul.f32 %v3447, 0.6931472
        %v3449 = vlog2.pop %v3139
        %v3450 = vmul.f32 %v3449, 0.6931472
        %v3451 = vlog2.pop %v3140
        %v3452 = vmul.f32 %v3451, 0.6931472
        %v3453 = vlog2.pop %v3141
        %v3454 = vmul.f32 %v3453, 0.6931472
        %v3455 = vlog2.pop %v3142
        %v3456 = vmul.f32 %v3455, 0.6931472
        %v3457 = vlog2.pop %v3143
        %v3458 = vmul.f32 %v3457, 0.6931472
        %v3459 = vlog2.pop %v3144
        %v3460 = vmul.f32 %v3459, 0.6931472
        %v3461 = vlog2.pop %v3145
        %v3462 = vmul.f32 %v3461, 0.6931472
        %v3463 = vlog2.pop %v3146
        %v3464 = vmul.f32 %v3463, 0.6931472
        %v3465 = vlog2.pop %v3147
        %v3466 = vmul.f32 %v3465, 0.6931472
        %v3467 = vlog2.pop %v3148
        %v3468 = vmul.f32 %v3467, 0.6931472
        %v3469 = vlog2.pop %v3149
        %v3470 = vmul.f32 %v3469, 0.6931472
        %v3471 = vlog2.pop %v3150
        %v3472 = vmul.f32 %v3471, 0.6931472
        %v3473 = vlog2.pop %v3151
        %v3474 = vmul.f32 %v3473, 0.6931472
        %v3475 = vlog2.pop %v3152
        %v3476 = vmul.f32 %v3475, 0.6931472
        %v3477 = vlog2.pop %v3153
        %v3478 = vmul.f32 %v3477, 0.6931472
        %v3479 = vlog2.pop %v3154
        %v3480 = vmul.f32 %v3479, 0.6931472
        %v3481 = vlog2.pop %v3155
        %v3482 = vmul.f32 %v3481, 0.6931472
        %v3483 = vlog2.pop %v3156
        %v3484 = vmul.f32 %v3483, 0.6931472
        %v3485 = vlog2.pop %v3157
        %v3486 = vmul.f32 %v3485, 0.6931472
        %v3487 = vlog2.pop %v3158
        %v3488 = vmul.f32 %v3487, 0.6931472
        %v3489 = vlog2.pop %v3159
        %v3490 = vmul.f32 %v3489, 0.6931472
        %v3491 = vlog2.pop %v3160
        %v3492 = vmul.f32 %v3491, 0.6931472
        %v3493 = vlog2.pop %v3161
        %v3494 = vmul.f32 %v3493, 0.6931472
        %v3495 = vlog2.pop %v3162
        %v3496 = vmul.f32 %v3495, 0.6931472
        %v3497 = vlog2.pop %v3163
        %v3498 = vmul.f32 %v3497, 0.6931472
        %v3499 = vlog2.pop %v3164
        %v3500 = vmul.f32 %v3499, 0.6931472
        %v3501 = vlog2.pop %v3165
        %v3502 = vmul.f32 %v3501, 0.6931472
        %v3503 = vlog2.pop %v3166
        %v3504 = vmul.f32 %v3503, 0.6931472
        %v3505 = vlog2.pop %v3167
        %v3506 = vmul.f32 %v3505, 0.6931472
        %v3507 = vlog2.pop %v3168
        %v3508 = vmul.f32 %v3507, 0.6931472
        %v3509 = vlog2.pop %v3169
        %v3510 = vmul.f32 %v3509, 0.6931472
        %v3511 = vlog2.pop %v3170
        %v3512 = vmul.f32 %v3511, 0.6931472
        %v3513 = vlog2.pop %v3171
        %v3514 = vmul.f32 %v3513, 0.6931472
        %v3515 = vlog2.pop %v3172
        %v3516 = vmul.f32 %v3515, 0.6931472
        %v3517 = vlog2.pop %v3173
        %v3518 = vmul.f32 %v3517, 0.6931472
        %v3519 = vlog2.pop %v3174
        %v3520 = vmul.f32 %v3519, 0.6931472
        %v3521 = vlog2.pop %v3175
        %v3522 = vmul.f32 %v3521, 0.6931472
        %v3523 = vlog2.pop %v3176
        %v3524 = vmul.f32 %v3523, 0.6931472
        %v3525 = vlog2.pop %v3177
        %v3526 = vmul.f32 %v3525, 0.6931472
        %v3527 = vlog2.pop %v3178
        %v3528 = vmul.f32 %v3527, 0.6931472
        %v3529 = vlog2.pop %v3179
        %v3530 = vmul.f32 %v3529, 0.6931472
        %v3531 = vlog2.pop %v3180
        %v3532 = vmul.f32 %v3531, 0.6931472
        %v3533 = vlog2.pop %v3181
        %v3534 = vmul.f32 %v3533, 0.6931472
        %v3535 = vlog2.pop %v3182
        %v3536 = vmul.f32 %v3535, 0.6931472
        %v3537 = vlog2.pop %v3183
        %v3538 = vmul.f32 %v3537, 0.6931472
        %v3539 = vlog2.pop %v3184
        %v3540 = vmul.f32 %v3539, 0.6931472
        %v3541 = vlog2.pop %v3185
        %v3542 = vmul.f32 %v3541, 0.6931472
        %v3543 = vlog2.pop %v3186
        %v3544 = vmul.f32 %v3543, 0.6931472
        %v3545 = vlog2.pop %v3187
        %v3546 = vmul.f32 %v3545, 0.6931472
        %v3547 = vlog2.pop %v3188
        %v3548 = vmul.f32 %v3547, 0.6931472
        %v3549 = vlog2.pop %v3189
        %v3550 = vmul.f32 %v3549, 0.6931472
        %v3551 = vlog2.pop %v3190
        %v3552 = vmul.f32 %v3551, 0.6931472
        %v3553 = vlog2.pop %v3191
        %v3554 = vmul.f32 %v3553, 0.6931472
        %v3555 = vlog2.pop %v3192
        %v3556 = vmul.f32 %v3555, 0.6931472
        %v3557 = vlog2.pop %v3193
        %v3558 = vmul.f32 %v3557, 0.6931472
        %v3559 = vlog2.pop %v3194
        %v3560 = vmul.f32 %v3559, 0.6931472
        %v3561 = vlog2.pop %v3195
        %v3562 = vmul.f32 %v3561, 0.6931472
        %v3563 = vlog2.pop %v3196
        %v3564 = vmul.f32 %v3563, 0.6931472
        %v3565 = vlog2.pop %v3197
        %v3566 = vmul.f32 %v3565, 0.6931472
        %v3567 = vlog2.pop %v3198
        %v3568 = vmul.f32 %v3567, 0.6931472
        %v3569 = vlog2.pop %v3199
        %v3570 = vmul.f32 %v3569, 0.6931472
        %v3571 = vlog2.pop %v3200
        %v3572 = vmul.f32 %v3571, 0.6931472
        %v3573 = vlog2.pop %v3201
        %v3574 = vmul.f32 %v3573, 0.6931472
        %v3575 = vlog2.pop %v3202
        %v3576 = vmul.f32 %v3575, 0.6931472
        %v3577 = vlog2.pop %v3203
        %v3578 = vmul.f32 %v3577, 0.6931472
        %v3579 = vlog2.pop %v3204
        %v3580 = vmul.f32 %v3579, 0.6931472
        %v3581 = vlog2.pop %v3205
        %v3582 = vmul.f32 %v3581, 0.6931472
        %v3583 = vlog2.pop %v3206
        %v3584 = vmul.f32 %v3583, 0.6931472
        %v3585 = vlog2.pop %v3207
        %v3586 = vmul.f32 %v3585, 0.6931472
        %v3587 = vlog2.pop %v3208
        %v3588 = vmul.f32 %v3587, 0.6931472
        %v3589 = vlog2.pop %v3209
        %v3590 = vmul.f32 %v3589, 0.6931472
        %v3591 = vlog2.pop %v3210
        %v3592 = vmul.f32 %v3591, 0.6931472
        %v3593 = vlog2.pop %v3211
        %v3594 = vmul.f32 %v3593, 0.6931472
        %v3595 = vlog2.pop %v3212
        %v3596 = vmul.f32 %v3595, 0.6931472
        %v3597 = vlog2.pop %v3213
        %v3598 = vmul.f32 %v3597, 0.6931472
        %v3599 = vlog2.pop %v3214
        %v3600 = vmul.f32 %v3599, 0.6931472
        %v3601 = vlog2.pop %v3215
        %v3602 = vmul.f32 %v3601, 0.6931472
        %v3603 = vlog2.pop %v3216
        %v3604 = vmul.f32 %v3603, 0.6931472
        %v3605 = vlog2.pop %v3217
        %v3606 = vmul.f32 %v3605, 0.6931472
        %v3607 = vlog2.pop %v3218
        %v3608 = vmul.f32 %v3607, 0.6931472
        %v3609 = vlog2.pop %v3219
        %v3610 = vmul.f32 %v3609, 0.6931472
        %v3611 = vlog2.pop %v3220
        %v3612 = vmul.f32 %v3611, 0.6931472
        %v3613 = vlog2.pop %v3221
        %v3614 = vmul.f32 %v3613, 0.6931472
        %v3615 = vlog2.pop %v3222
        %v3616 = vmul.f32 %v3615, 0.6931472
        %v3617 = vlog2.pop %v3223
        %v3618 = vmul.f32 %v3617, 0.6931472
        %v3619 = vlog2.pop %v3224
        %v3620 = vmul.f32 %v3619, 0.6931472
        %v3621 = vlog2.pop %v3225
        %v3622 = vmul.f32 %v3621, 0.6931472
        %v3623 = vlog2.pop %v3226
        %v3624 = vmul.f32 %v3623, 0.6931472
        %v3625 = vlog2.pop %v3227
        %v3626 = vmul.f32 %v3625, 0.6931472
        %v3627 = vlog2.pop %v3228
        %v3628 = vmul.f32 %v3627, 0.6931472
        %v3629 = vlog2.pop %v3229
        %v3630 = vmul.f32 %v3629, 0.6931472
        %v3631 = vlog2.pop %v3230
        %v3632 = vmul.f32 %v3631, 0.6931472
        %v3633 = vlog2.pop %v3231
        %v3634 = vmul.f32 %v3633, 0.6931472
        %v3635 = vlog2.pop %v3232
        %v3636 = vmul.f32 %v3635, 0.6931472
        %v3637 = vlog2.pop %v3233
        %v3638 = vmul.f32 %v3637, 0.6931472
        %v3639 = vlog2.pop %v3234
        %v3640 = vmul.f32 %v3639, 0.6931472
        %v3641 = vlog2.pop %v3235
        %v3642 = vmul.f32 %v3641, 0.6931472
        %v3643 = vlog2.pop %v3236
        %v3644 = vmul.f32 %v3643, 0.6931472
        %v3645 = vlog2.pop %v3237
        %v3646 = vmul.f32 %v3645, 0.6931472
        %v3647 = vlog2.pop %v3238
        %v3648 = vmul.f32 %v3647, 0.6931472
        %v3649 = vlog2.pop %v3239
        %v3650 = vmul.f32 %v3649, 0.6931472
        %v3651 = vlog2.pop %v3240
        %v3652 = vmul.f32 %v3651, 0.6931472
        %v3653 = vlog2.pop %v3241
        %v3654 = vmul.f32 %v3653, 0.6931472
        %v3655 = vlog2.pop %v3242
        %v3656 = vmul.f32 %v3655, 0.6931472
        %v3657 = vlog2.pop %v3243
        %v3658 = vmul.f32 %v3657, 0.6931472
        %v3659 = vlog2.pop %v3244
        %v3660 = vmul.f32 %v3659, 0.6931472
        %v3661 = vlog2.pop %v3245
        %v3662 = vmul.f32 %v3661, 0.6931472
        %v3663 = vlog2.pop %v3246
        %v3664 = vmul.f32 %v3663, 0.6931472
        %v3665 = vlog2.pop %v3247
        %v3666 = vmul.f32 %v3665, 0.6931472
        %v3667 = vlog2.pop %v3248
        %v3668 = vmul.f32 %v3667, 0.6931472
        %v3669 = vlog2.pop %v3249
        %v3670 = vmul.f32 %v3669, 0.6931472
        %v3671 = vlog2.pop %v3250
        %v3672 = vmul.f32 %v3671, 0.6931472
        %v3673 = vlog2.pop %v3251
        %v3674 = vmul.f32 %v3673, 0.6931472
        %v3675 = vlog2.pop %v3252
        %v3676 = vmul.f32 %v3675, 0.6931472
        %v3677 = vlog2.pop %v3253
        %v3678 = vmul.f32 %v3677, 0.6931472
        %v3679 = vlog2.pop %v3254
        %v3680 = vmul.f32 %v3679, 0.6931472
        %v3681 = vlog2.pop %v3255
        %v3682 = vmul.f32 %v3681, 0.6931472
        %v3683 = vlog2.pop %v3256
        %v3684 = vmul.f32 %v3683, 0.6931472
        %v3685 = vlog2.pop %v3257
        %v3686 = vmul.f32 %v3685, 0.6931472
        %v3687 = vlog2.pop %v3258
        %v3688 = vmul.f32 %v3687, 0.6931472
        %v3689 = vlog2.pop %v3259
        %v3690 = vmul.f32 %v3689, 0.6931472
        %v3691 = vlog2.pop %v3260
        %v3692 = vmul.f32 %v3691, 0.6931472
        %v3693 = vlog2.pop %v3261
        %v3694 = vmul.f32 %v3693, 0.6931472
        %v3695 = vlog2.pop %v3262
        %v3696 = vmul.f32 %v3695, 0.6931472
        %v3697 = vlog2.pop %v3263
        %v3698 = vmul.f32 %v3697, 0.6931472
        %v3699 = vlog2.pop %v3264
        %v3700 = vmul.f32 %v3699, 0.6931472
        %v3701 = vlog2.pop %v3265
        %v3702 = vmul.f32 %v3701, 0.6931472
        %v3703 = vlog2.pop %v3266
        %v3704 = vmul.f32 %v3703, 0.6931472
        %v3705 = vlog2.pop %v3267
        %v3706 = vmul.f32 %v3705, 0.6931472
        %v3707 = vlog2.pop %v3268
        %v3708 = vmul.f32 %v3707, 0.6931472
        %v3709 = vlog2.pop %v3269
        %v3710 = vmul.f32 %v3709, 0.6931472
        %v3711 = vlog2.pop %v3270
        %v3712 = vmul.f32 %v3711, 0.6931472
        %v3713 = vlog2.pop %v3271
        %v3714 = vmul.f32 %v3713, 0.6931472
        %v3715 = vlog2.pop %v3272
        %v3716 = vmul.f32 %v3715, 0.6931472
        %v3717 = vlog2.pop %v3273
        %v3718 = vmul.f32 %v3717, 0.6931472
        %v3719 = vlog2.pop %v3274
        %v3720 = vmul.f32 %v3719, 0.6931472
        %v3721 = vlog2.pop %v3275
        %v3722 = vmul.f32 %v3721, 0.6931472
        %v3723 = vlog2.pop %v3276
        %v3724 = vmul.f32 %v3723, 0.6931472
        %v3725 = vlog2.pop %v3277
        %v3726 = vmul.f32 %v3725, 0.6931472
        %v3727 = vlog2.pop %v3278
        %v3728 = vmul.f32 %v3727, 0.6931472
        %v3729 = vlog2.pop %v3279
        %v3730 = vmul.f32 %v3729, 0.6931472
        %v3731 = vlog2.pop %v3280
        %v3732 = vmul.f32 %v3731, 0.6931472
        %v3733 = vlog2.pop %v3281
        %v3734 = vmul.f32 %v3733, 0.6931472
        %v3735 = vlog2.pop %v3282
        %v3736 = vmul.f32 %v3735, 0.6931472
        %v3737 = vlog2.pop %v3283
        %v3738 = vmul.f32 %v3737, 0.6931472
        %v3739 = vlog2.pop %v3284
        %v3740 = vmul.f32 %v3739, 0.6931472
        %v3741 = vlog2.pop %v3285
        %v3742 = vmul.f32 %v3741, 0.6931472
        %v3743 = vlog2.pop %v3286
        %v3744 = vmul.f32 %v3743, 0.6931472
        %v3745 = vlog2.pop %v3287
        %v3746 = vmul.f32 %v3745, 0.6931472
        %v3747 = vlog2.pop %v3288
        %v3748 = vmul.f32 %v3747, 0.6931472
        %v3749 = vlog2.pop %v3289
        %v3750 = vmul.f32 %v3749, 0.6931472
        %v3751 = vlog2.pop %v3290
        %v3752 = vmul.f32 %v3751, 0.6931472
        %v3753 = vlog2.pop %v3291
        %v3754 = vmul.f32 %v3753, 0.6931472
        %v3755 = vlog2.pop %v3292
        %v3756 = vmul.f32 %v3755, 0.6931472
        %v3757 = vlog2.pop %v3293
        %v3758 = vmul.f32 %v3757, 0.6931472
        %v3759 = vlog2.pop %v3294
        %v3760 = vmul.f32 %v3759, 0.6931472
        %v3761 = vlog2.pop %v3295
        %v3762 = vmul.f32 %v3761, 0.6931472
        %v3763 = vlog2.pop %v3296
        %v3764 = vmul.f32 %v3763, 0.6931472
        %v3765 = vlog2.pop %v3297
        %v3766 = vmul.f32 %v3765, 0.6931472
        %v3767 = vlog2.pop %v3298
        %v3768 = vmul.f32 %v3767, 0.6931472
        %v3769 = vlog2.pop %v3299
        %v3770 = vmul.f32 %v3769, 0.6931472
        %v3771 = vlog2.pop %v3300
        %v3772 = vmul.f32 %v3771, 0.6931472
        %v3773 = vlog2.pop %v3301
        %v3774 = vmul.f32 %v3773, 0.6931472
        %v3775 = vlog2.pop %v3302
        %v3776 = vmul.f32 %v3775, 0.6931472
        %v3777 = vlog2.pop %v3303
        %v3778 = vmul.f32 %v3777, 0.6931472
        %v3779 = vlog2.pop %v3304
        %v3780 = vmul.f32 %v3779, 0.6931472
        %v3781 = vlog2.pop %v3305
        %v3782 = vmul.f32 %v3781, 0.6931472
        %v3783 = vlog2.pop %v3306
        %v3784 = vmul.f32 %v3783, 0.6931472
        %v3785 = vlog2.pop %v3307
        %v3786 = vmul.f32 %v3785, 0.6931472
        %v3787 = vlog2.pop %v3308
        %v3788 = vmul.f32 %v3787, 0.6931472
        %v3789 = vlog2.pop %v3309
        %v3790 = vmul.f32 %v3789, 0.6931472
        %v3791 = vlog2.pop %v3310
        %v3792 = vmul.f32 %v3791, 0.6931472
        %v3793 = vlog2.pop %v3311
        %v3794 = vmul.f32 %v3793, 0.6931472
        %v3795 = vlog2.pop %v3312
        %v3796 = vmul.f32 %v3795, 0.6931472
        %v3797 = vlog2.pop %v3313
        %v3798 = vmul.f32 %v3797, 0.6931472
        %v3799 = vlog2.pop %v3314
        %v3800 = vmul.f32 %v3799, 0.6931472
        %v3801 = vlog2.pop %v3315
        %v3802 = vmul.f32 %v3801, 0.6931472
        %v3803 = vlog2.pop %v3316
        %v3804 = vmul.f32 %v3803, 0.6931472
        %v3805 = vlog2.pop %v3317
        %v3806 = vmul.f32 %v3805, 0.6931472
        %v3807 = vlog2.pop %v3318
        %v3808 = vmul.f32 %v3807, 0.6931472
        %v3809 = vlog2.pop %v3319
        %v3810 = vmul.f32 %v3809, 0.6931472
        %v3811 = vlog2.pop %v3320
        %v3812 = vmul.f32 %v3811, 0.6931472
        %v3813 = vlog2.pop %v3321
        %v3814 = vmul.f32 %v3813, 0.6931472
        %v3815 = vlog2.pop %v3322
        %v3816 = vmul.f32 %v3815, 0.6931472
        %v3817 = vlog2.pop %v3323
        %v3818 = vmul.f32 %v3817, 0.6931472
        %v3819 = vlog2.pop %v3324
        %v3820 = vmul.f32 %v3819, 0.6931472
        %v3821 = vlog2.pop %v3325
        %v3822 = vmul.f32 %v3821, 0.6931472
        %v3823 = vlog2.pop %v3326
        %v3824 = vmul.f32 %v3823, 0.6931472
        %v3825 = vlog2.pop %v3327
        %v3826 = vmul.f32 %v3825, 0.6931472
        %v3827 = vlog2.pop %v3328
        %v3828 = vmul.f32 %v3827, 0.6931472
        %v3829 = vlog2.pop %v3329
        %v3830 = vmul.f32 %v3829, 0.6931472
        %v3831 = vlog2.pop %v3330
        %v3832 = vmul.f32 %v3831, 0.6931472
        %v3833 = vlog2.pop %v3331
        %v3834 = vmul.f32 %v3833, 0.6931472
        %v3835 = vlog2.pop %v3332
        %v3836 = vmul.f32 %v3835, 0.6931472
        %v3837 = vlog2.pop %v3333
        %v3838 = vmul.f32 %v3837, 0.6931472
        %v3839 = vlog2.pop %v3334
        %v3840 = vmul.f32 %v3839, 0.6931472
        %v3841 = vlog2.pop %v3335
        %v3842 = vmul.f32 %v3841, 0.6931472
        %v3843 = vlog2.pop %v3336
        %v3844 = vmul.f32 %v3843, 0.6931472
        %v3845 = vlog2.pop %v3337
        %v3846 = vmul.f32 %v3845, 0.6931472
        %v3847 = vlog2.pop %v3338
        %v3848 = vmul.f32 %v3847, 0.6931472
        %v3849 = vlog2.pop %v3339
        %v3850 = vmul.f32 %v3849, 0.6931472
        %v3851 = vlog2.pop %v3340
        %v3852 = vmul.f32 %v3851, 0.6931472
        %v3853 = vmul.f32 %v2573, %v3342
        %v3854 = vmul.f32 %v2574, %v3344
        %v3855 = vmul.f32 %v2575, %v3346
        %v3856 = vmul.f32 %v2576, %v3348
        %v3857 = vmul.f32 %v2577, %v3350
        %v3858 = vmul.f32 %v2578, %v3352
        %v3859 = vmul.f32 %v2579, %v3354
        %v3860 = vmul.f32 %v2580, %v3356
        %v3861 = vmul.f32 %v2581, %v3358
        %v3862 = vmul.f32 %v2582, %v3360
        %v3863 = vmul.f32 %v2583, %v3362
        %v3864 = vmul.f32 %v2584, %v3364
        %v3865 = vmul.f32 %v2585, %v3366
        %v3866 = vmul.f32 %v2586, %v3368
        %v3867 = vmul.f32 %v2587, %v3370
        %v3868 = vmul.f32 %v2588, %v3372
        %v3869 = vmul.f32 %v2589, %v3374
        %v3870 = vmul.f32 %v2590, %v3376
        %v3871 = vmul.f32 %v2591, %v3378
        %v3872 = vmul.f32 %v2592, %v3380
        %v3873 = vmul.f32 %v2593, %v3382
        %v3874 = vmul.f32 %v2594, %v3384
        %v3875 = vmul.f32 %v2595, %v3386
        %v3876 = vmul.f32 %v2596, %v3388
        %v3877 = vmul.f32 %v2597, %v3390
        %v3878 = vmul.f32 %v2598, %v3392
        %v3879 = vmul.f32 %v2599, %v3394
        %v3880 = vmul.f32 %v2600, %v3396
        %v3881 = vmul.f32 %v2601, %v3398
        %v3882 = vmul.f32 %v2602, %v3400
        %v3883 = vmul.f32 %v2603, %v3402
        %v3884 = vmul.f32 %v2604, %v3404
        %v3885 = vmul.f32 %v2605, %v3406
        %v3886 = vmul.f32 %v2606, %v3408
        %v3887 = vmul.f32 %v2607, %v3410
        %v3888 = vmul.f32 %v2608, %v3412
        %v3889 = vmul.f32 %v2609, %v3414
        %v3890 = vmul.f32 %v2610, %v3416
        %v3891 = vmul.f32 %v2611, %v3418
        %v3892 = vmul.f32 %v2612, %v3420
        %v3893 = vmul.f32 %v2613, %v3422
        %v3894 = vmul.f32 %v2614, %v3424
        %v3895 = vmul.f32 %v2615, %v3426
        %v3896 = vmul.f32 %v2616, %v3428
        %v3897 = vmul.f32 %v2617, %v3430
        %v3898 = vmul.f32 %v2618, %v3432
        %v3899 = vmul.f32 %v2619, %v3434
        %v3900 = vmul.f32 %v2620, %v3436
        %v3901 = vmul.f32 %v2621, %v3438
        %v3902 = vmul.f32 %v2622, %v3440
        %v3903 = vmul.f32 %v2623, %v3442
        %v3904 = vmul.f32 %v2624, %v3444
        %v3905 = vmul.f32 %v2625, %v3446
        %v3906 = vmul.f32 %v2626, %v3448
        %v3907 = vmul.f32 %v2627, %v3450
        %v3908 = vmul.f32 %v2628, %v3452
        %v3909 = vmul.f32 %v2629, %v3454
        %v3910 = vmul.f32 %v2630, %v3456
        %v3911 = vmul.f32 %v2631, %v3458
        %v3912 = vmul.f32 %v2632, %v3460
        %v3913 = vmul.f32 %v2633, %v3462
        %v3914 = vmul.f32 %v2634, %v3464
        %v3915 = vmul.f32 %v2635, %v3466
        %v3916 = vmul.f32 %v2636, %v3468
        %v3917 = vmul.f32 %v2637, %v3470
        %v3918 = vmul.f32 %v2638, %v3472
        %v3919 = vmul.f32 %v2639, %v3474
        %v3920 = vmul.f32 %v2640, %v3476
        %v3921 = vmul.f32 %v2641, %v3478
        %v3922 = vmul.f32 %v2642, %v3480
        %v3923 = vmul.f32 %v2643, %v3482
        %v3924 = vmul.f32 %v2644, %v3484
        %v3925 = vmul.f32 %v2645, %v3486
        %v3926 = vmul.f32 %v2646, %v3488
        %v3927 = vmul.f32 %v2647, %v3490
        %v3928 = vmul.f32 %v2648, %v3492
        %v3929 = vmul.f32 %v2649, %v3494
        %v3930 = vmul.f32 %v2650, %v3496
        %v3931 = vmul.f32 %v2651, %v3498
        %v3932 = vmul.f32 %v2652, %v3500
        %v3933 = vmul.f32 %v2653, %v3502
        %v3934 = vmul.f32 %v2654, %v3504
        %v3935 = vmul.f32 %v2655, %v3506
        %v3936 = vmul.f32 %v2656, %v3508
        %v3937 = vmul.f32 %v2657, %v3510
        %v3938 = vmul.f32 %v2658, %v3512
        %v3939 = vmul.f32 %v2659, %v3514
        %v3940 = vmul.f32 %v2660, %v3516
        %v3941 = vmul.f32 %v2661, %v3518
        %v3942 = vmul.f32 %v2662, %v3520
        %v3943 = vmul.f32 %v2663, %v3522
        %v3944 = vmul.f32 %v2664, %v3524
        %v3945 = vmul.f32 %v2665, %v3526
        %v3946 = vmul.f32 %v2666, %v3528
        %v3947 = vmul.f32 %v2667, %v3530
        %v3948 = vmul.f32 %v2668, %v3532
        %v3949 = vmul.f32 %v2669, %v3534
        %v3950 = vmul.f32 %v2670, %v3536
        %v3951 = vmul.f32 %v2671, %v3538
        %v3952 = vmul.f32 %v2672, %v3540
        %v3953 = vmul.f32 %v2673, %v3542
        %v3954 = vmul.f32 %v2674, %v3544
        %v3955 = vmul.f32 %v2675, %v3546
        %v3956 = vmul.f32 %v2676, %v3548
        %v3957 = vmul.f32 %v2677, %v3550
        %v3958 = vmul.f32 %v2678, %v3552
        %v3959 = vmul.f32 %v2679, %v3554
        %v3960 = vmul.f32 %v2680, %v3556
        %v3961 = vmul.f32 %v2681, %v3558
        %v3962 = vmul.f32 %v2682, %v3560
        %v3963 = vmul.f32 %v2683, %v3562
        %v3964 = vmul.f32 %v2684, %v3564
        %v3965 = vmul.f32 %v2685, %v3566
        %v3966 = vmul.f32 %v2686, %v3568
        %v3967 = vmul.f32 %v2687, %v3570
        %v3968 = vmul.f32 %v2688, %v3572
        %v3969 = vmul.f32 %v2689, %v3574
        %v3970 = vmul.f32 %v2690, %v3576
        %v3971 = vmul.f32 %v2691, %v3578
        %v3972 = vmul.f32 %v2692, %v3580
        %v3973 = vmul.f32 %v2693, %v3582
        %v3974 = vmul.f32 %v2694, %v3584
        %v3975 = vmul.f32 %v2695, %v3586
        %v3976 = vmul.f32 %v2696, %v3588
        %v3977 = vmul.f32 %v2697, %v3590
        %v3978 = vmul.f32 %v2698, %v3592
        %v3979 = vmul.f32 %v2699, %v3594
        %v3980 = vmul.f32 %v2700, %v3596
        %v3981 = vmul.f32 %v2701, %v3598
        %v3982 = vmul.f32 %v2702, %v3600
        %v3983 = vmul.f32 %v2703, %v3602
        %v3984 = vmul.f32 %v2704, %v3604
        %v3985 = vmul.f32 %v2705, %v3606
        %v3986 = vmul.f32 %v2706, %v3608
        %v3987 = vmul.f32 %v2707, %v3610
        %v3988 = vmul.f32 %v2708, %v3612
        %v3989 = vmul.f32 %v2709, %v3614
        %v3990 = vmul.f32 %v2710, %v3616
        %v3991 = vmul.f32 %v2711, %v3618
        %v3992 = vmul.f32 %v2712, %v3620
        %v3993 = vmul.f32 %v2713, %v3622
        %v3994 = vmul.f32 %v2714, %v3624
        %v3995 = vmul.f32 %v2715, %v3626
        %v3996 = vmul.f32 %v2716, %v3628
        %v3997 = vmul.f32 %v2717, %v3630
        %v3998 = vmul.f32 %v2718, %v3632
        %v3999 = vmul.f32 %v2719, %v3634
        %v4000 = vmul.f32 %v2720, %v3636
        %v4001 = vmul.f32 %v2721, %v3638
        %v4002 = vmul.f32 %v2722, %v3640
        %v4003 = vmul.f32 %v2723, %v3642
        %v4004 = vmul.f32 %v2724, %v3644
        %v4005 = vmul.f32 %v2725, %v3646
        %v4006 = vmul.f32 %v2726, %v3648
        %v4007 = vmul.f32 %v2727, %v3650
        %v4008 = vmul.f32 %v2728, %v3652
        %v4009 = vmul.f32 %v2729, %v3654
        %v4010 = vmul.f32 %v2730, %v3656
        %v4011 = vmul.f32 %v2731, %v3658
        %v4012 = vmul.f32 %v2732, %v3660
        %v4013 = vmul.f32 %v2733, %v3662
        %v4014 = vmul.f32 %v2734, %v3664
        %v4015 = vmul.f32 %v2735, %v3666
        %v4016 = vmul.f32 %v2736, %v3668
        %v4017 = vmul.f32 %v2737, %v3670
        %v4018 = vmul.f32 %v2738, %v3672
        %v4019 = vmul.f32 %v2739, %v3674
        %v4020 = vmul.f32 %v2740, %v3676
        %v4021 = vmul.f32 %v2741, %v3678
        %v4022 = vmul.f32 %v2742, %v3680
        %v4023 = vmul.f32 %v2743, %v3682
        %v4024 = vmul.f32 %v2744, %v3684
        %v4025 = vmul.f32 %v2745, %v3686
        %v4026 = vmul.f32 %v2746, %v3688
        %v4027 = vmul.f32 %v2747, %v3690
        %v4028 = vmul.f32 %v2748, %v3692
        %v4029 = vmul.f32 %v2749, %v3694
        %v4030 = vmul.f32 %v2750, %v3696
        %v4031 = vmul.f32 %v2751, %v3698
        %v4032 = vmul.f32 %v2752, %v3700
        %v4033 = vmul.f32 %v2753, %v3702
        %v4034 = vmul.f32 %v2754, %v3704
        %v4035 = vmul.f32 %v2755, %v3706
        %v4036 = vmul.f32 %v2756, %v3708
        %v4037 = vmul.f32 %v2757, %v3710
        %v4038 = vmul.f32 %v2758, %v3712
        %v4039 = vmul.f32 %v2759, %v3714
        %v4040 = vmul.f32 %v2760, %v3716
        %v4041 = vmul.f32 %v2761, %v3718
        %v4042 = vmul.f32 %v2762, %v3720
        %v4043 = vmul.f32 %v2763, %v3722
        %v4044 = vmul.f32 %v2764, %v3724
        %v4045 = vmul.f32 %v2765, %v3726
        %v4046 = vmul.f32 %v2766, %v3728
        %v4047 = vmul.f32 %v2767, %v3730
        %v4048 = vmul.f32 %v2768, %v3732
        %v4049 = vmul.f32 %v2769, %v3734
        %v4050 = vmul.f32 %v2770, %v3736
        %v4051 = vmul.f32 %v2771, %v3738
        %v4052 = vmul.f32 %v2772, %v3740
        %v4053 = vmul.f32 %v2773, %v3742
        %v4054 = vmul.f32 %v2774, %v3744
        %v4055 = vmul.f32 %v2775, %v3746
        %v4056 = vmul.f32 %v2776, %v3748
        %v4057 = vmul.f32 %v2777, %v3750
        %v4058 = vmul.f32 %v2778, %v3752
        %v4059 = vmul.f32 %v2779, %v3754
        %v4060 = vmul.f32 %v2780, %v3756
        %v4061 = vmul.f32 %v2781, %v3758
        %v4062 = vmul.f32 %v2782, %v3760
        %v4063 = vmul.f32 %v2783, %v3762
        %v4064 = vmul.f32 %v2784, %v3764
        %v4065 = vmul.f32 %v2785, %v3766
        %v4066 = vmul.f32 %v2786, %v3768
        %v4067 = vmul.f32 %v2787, %v3770
        %v4068 = vmul.f32 %v2788, %v3772
        %v4069 = vmul.f32 %v2789, %v3774
        %v4070 = vmul.f32 %v2790, %v3776
        %v4071 = vmul.f32 %v2791, %v3778
        %v4072 = vmul.f32 %v2792, %v3780
        %v4073 = vmul.f32 %v2793, %v3782
        %v4074 = vmul.f32 %v2794, %v3784
        %v4075 = vmul.f32 %v2795, %v3786
        %v4076 = vmul.f32 %v2796, %v3788
        %v4077 = vmul.f32 %v2797, %v3790
        %v4078 = vmul.f32 %v2798, %v3792
        %v4079 = vmul.f32 %v2799, %v3794
        %v4080 = vmul.f32 %v2800, %v3796
        %v4081 = vmul.f32 %v2801, %v3798
        %v4082 = vmul.f32 %v2802, %v3800
        %v4083 = vmul.f32 %v2803, %v3802
        %v4084 = vmul.f32 %v2804, %v3804
        %v4085 = vmul.f32 %v2805, %v3806
        %v4086 = vmul.f32 %v2806, %v3808
        %v4087 = vmul.f32 %v2807, %v3810
        %v4088 = vmul.f32 %v2808, %v3812
        %v4089 = vmul.f32 %v2809, %v3814
        %v4090 = vmul.f32 %v2810, %v3816
        %v4091 = vmul.f32 %v2811, %v3818
        %v4092 = vmul.f32 %v2812, %v3820
        %v4093 = vmul.f32 %v2813, %v3822
        %v4094 = vmul.f32 %v2814, %v3824
        %v4095 = vmul.f32 %v2815, %v3826
        %v4096 = vmul.f32 %v2816, %v3828
        %v4097 = vmul.f32 %v2817, %v3830
        %v4098 = vmul.f32 %v2818, %v3832
        %v4099 = vmul.f32 %v2819, %v3834
        %v4100 = vmul.f32 %v2820, %v3836
        %v4101 = vmul.f32 %v2821, %v3838
        %v4102 = vmul.f32 %v2822, %v3840
        %v4103 = vmul.f32 %v2823, %v3842
        %v4104 = vmul.f32 %v2824, %v3844
        %v4105 = vmul.f32 %v2825, %v3846
        %v4106 = vmul.f32 %v2826, %v3848
        %v4107 = vmul.f32 %v2827, %v3850
        %v4108 = vmul.f32 %v2828, %v3852
        %v4109 = vadd.f32 %v2317, %v3853
        %v4110 = vadd.f32 %v2318, %v3854
        %v4111 = vadd.f32 %v2319, %v3855
        %v4112 = vadd.f32 %v2320, %v3856
        %v4113 = vadd.f32 %v2321, %v3857
        %v4114 = vadd.f32 %v2322, %v3858
        %v4115 = vadd.f32 %v2323, %v3859
        %v4116 = vadd.f32 %v2324, %v3860
        %v4117 = vadd.f32 %v2325, %v3861
        %v4118 = vadd.f32 %v2326, %v3862
        %v4119 = vadd.f32 %v2327, %v3863
        %v4120 = vadd.f32 %v2328, %v3864
        %v4121 = vadd.f32 %v2329, %v3865
        %v4122 = vadd.f32 %v2330, %v3866
        %v4123 = vadd.f32 %v2331, %v3867
        %v4124 = vadd.f32 %v2332, %v3868
        %v4125 = vadd.f32 %v2333, %v3869
        %v4126 = vadd.f32 %v2334, %v3870
        %v4127 = vadd.f32 %v2335, %v3871
        %v4128 = vadd.f32 %v2336, %v3872
        %v4129 = vadd.f32 %v2337, %v3873
        %v4130 = vadd.f32 %v2338, %v3874
        %v4131 = vadd.f32 %v2339, %v3875
        %v4132 = vadd.f32 %v2340, %v3876
        %v4133 = vadd.f32 %v2341, %v3877
        %v4134 = vadd.f32 %v2342, %v3878
        %v4135 = vadd.f32 %v2343, %v3879
        %v4136 = vadd.f32 %v2344, %v3880
        %v4137 = vadd.f32 %v2345, %v3881
        %v4138 = vadd.f32 %v2346, %v3882
        %v4139 = vadd.f32 %v2347, %v3883
        %v4140 = vadd.f32 %v2348, %v3884
        %v4141 = vadd.f32 %v2349, %v3885
        %v4142 = vadd.f32 %v2350, %v3886
        %v4143 = vadd.f32 %v2351, %v3887
        %v4144 = vadd.f32 %v2352, %v3888
        %v4145 = vadd.f32 %v2353, %v3889
        %v4146 = vadd.f32 %v2354, %v3890
        %v4147 = vadd.f32 %v2355, %v3891
        %v4148 = vadd.f32 %v2356, %v3892
        %v4149 = vadd.f32 %v2357, %v3893
        %v4150 = vadd.f32 %v2358, %v3894
        %v4151 = vadd.f32 %v2359, %v3895
        %v4152 = vadd.f32 %v2360, %v3896
        %v4153 = vadd.f32 %v2361, %v3897
        %v4154 = vadd.f32 %v2362, %v3898
        %v4155 = vadd.f32 %v2363, %v3899
        %v4156 = vadd.f32 %v2364, %v3900
        %v4157 = vadd.f32 %v2365, %v3901
        %v4158 = vadd.f32 %v2366, %v3902
        %v4159 = vadd.f32 %v2367, %v3903
        %v4160 = vadd.f32 %v2368, %v3904
        %v4161 = vadd.f32 %v2369, %v3905
        %v4162 = vadd.f32 %v2370, %v3906
        %v4163 = vadd.f32 %v2371, %v3907
        %v4164 = vadd.f32 %v2372, %v3908
        %v4165 = vadd.f32 %v2373, %v3909
        %v4166 = vadd.f32 %v2374, %v3910
        %v4167 = vadd.f32 %v2375, %v3911
        %v4168 = vadd.f32 %v2376, %v3912
        %v4169 = vadd.f32 %v2377, %v3913
        %v4170 = vadd.f32 %v2378, %v3914
        %v4171 = vadd.f32 %v2379, %v3915
        %v4172 = vadd.f32 %v2380, %v3916
        %v4173 = vadd.f32 %v2381, %v3917
        %v4174 = vadd.f32 %v2382, %v3918
        %v4175 = vadd.f32 %v2383, %v3919
        %v4176 = vadd.f32 %v2384, %v3920
        %v4177 = vadd.f32 %v2385, %v3921
        %v4178 = vadd.f32 %v2386, %v3922
        %v4179 = vadd.f32 %v2387, %v3923
        %v4180 = vadd.f32 %v2388, %v3924
        %v4181 = vadd.f32 %v2389, %v3925
        %v4182 = vadd.f32 %v2390, %v3926
        %v4183 = vadd.f32 %v2391, %v3927
        %v4184 = vadd.f32 %v2392, %v3928
        %v4185 = vadd.f32 %v2393, %v3929
        %v4186 = vadd.f32 %v2394, %v3930
        %v4187 = vadd.f32 %v2395, %v3931
        %v4188 = vadd.f32 %v2396, %v3932
        %v4189 = vadd.f32 %v2397, %v3933
        %v4190 = vadd.f32 %v2398, %v3934
        %v4191 = vadd.f32 %v2399, %v3935
        %v4192 = vadd.f32 %v2400, %v3936
        %v4193 = vadd.f32 %v2401, %v3937
        %v4194 = vadd.f32 %v2402, %v3938
        %v4195 = vadd.f32 %v2403, %v3939
        %v4196 = vadd.f32 %v2404, %v3940
        %v4197 = vadd.f32 %v2405, %v3941
        %v4198 = vadd.f32 %v2406, %v3942
        %v4199 = vadd.f32 %v2407, %v3943
        %v4200 = vadd.f32 %v2408, %v3944
        %v4201 = vadd.f32 %v2409, %v3945
        %v4202 = vadd.f32 %v2410, %v3946
        %v4203 = vadd.f32 %v2411, %v3947
        %v4204 = vadd.f32 %v2412, %v3948
        %v4205 = vadd.f32 %v2413, %v3949
        %v4206 = vadd.f32 %v2414, %v3950
        %v4207 = vadd.f32 %v2415, %v3951
        %v4208 = vadd.f32 %v2416, %v3952
        %v4209 = vadd.f32 %v2417, %v3953
        %v4210 = vadd.f32 %v2418, %v3954
        %v4211 = vadd.f32 %v2419, %v3955
        %v4212 = vadd.f32 %v2420, %v3956
        %v4213 = vadd.f32 %v2421, %v3957
        %v4214 = vadd.f32 %v2422, %v3958
        %v4215 = vadd.f32 %v2423, %v3959
        %v4216 = vadd.f32 %v2424, %v3960
        %v4217 = vadd.f32 %v2425, %v3961
        %v4218 = vadd.f32 %v2426, %v3962
        %v4219 = vadd.f32 %v2427, %v3963
        %v4220 = vadd.f32 %v2428, %v3964
        %v4221 = vadd.f32 %v2429, %v3965
        %v4222 = vadd.f32 %v2430, %v3966
        %v4223 = vadd.f32 %v2431, %v3967
        %v4224 = vadd.f32 %v2432, %v3968
        %v4225 = vadd.f32 %v2433, %v3969
        %v4226 = vadd.f32 %v2434, %v3970
        %v4227 = vadd.f32 %v2435, %v3971
        %v4228 = vadd.f32 %v2436, %v3972
        %v4229 = vadd.f32 %v2437, %v3973
        %v4230 = vadd.f32 %v2438, %v3974
        %v4231 = vadd.f32 %v2439, %v3975
        %v4232 = vadd.f32 %v2440, %v3976
        %v4233 = vadd.f32 %v2441, %v3977
        %v4234 = vadd.f32 %v2442, %v3978
        %v4235 = vadd.f32 %v2443, %v3979
        %v4236 = vadd.f32 %v2444, %v3980
        %v4237 = vadd.f32 %v2445, %v3981
        %v4238 = vadd.f32 %v2446, %v3982
        %v4239 = vadd.f32 %v2447, %v3983
        %v4240 = vadd.f32 %v2448, %v3984
        %v4241 = vadd.f32 %v2449, %v3985
        %v4242 = vadd.f32 %v2450, %v3986
        %v4243 = vadd.f32 %v2451, %v3987
        %v4244 = vadd.f32 %v2452, %v3988
        %v4245 = vadd.f32 %v2453, %v3989
        %v4246 = vadd.f32 %v2454, %v3990
        %v4247 = vadd.f32 %v2455, %v3991
        %v4248 = vadd.f32 %v2456, %v3992
        %v4249 = vadd.f32 %v2457, %v3993
        %v4250 = vadd.f32 %v2458, %v3994
        %v4251 = vadd.f32 %v2459, %v3995
        %v4252 = vadd.f32 %v2460, %v3996
        %v4253 = vadd.f32 %v2461, %v3997
        %v4254 = vadd.f32 %v2462, %v3998
        %v4255 = vadd.f32 %v2463, %v3999
        %v4256 = vadd.f32 %v2464, %v4000
        %v4257 = vadd.f32 %v2465, %v4001
        %v4258 = vadd.f32 %v2466, %v4002
        %v4259 = vadd.f32 %v2467, %v4003
        %v4260 = vadd.f32 %v2468, %v4004
        %v4261 = vadd.f32 %v2469, %v4005
        %v4262 = vadd.f32 %v2470, %v4006
        %v4263 = vadd.f32 %v2471, %v4007
        %v4264 = vadd.f32 %v2472, %v4008
        %v4265 = vadd.f32 %v2473, %v4009
        %v4266 = vadd.f32 %v2474, %v4010
        %v4267 = vadd.f32 %v2475, %v4011
        %v4268 = vadd.f32 %v2476, %v4012
        %v4269 = vadd.f32 %v2477, %v4013
        %v4270 = vadd.f32 %v2478, %v4014
        %v4271 = vadd.f32 %v2479, %v4015
        %v4272 = vadd.f32 %v2480, %v4016
        %v4273 = vadd.f32 %v2481, %v4017
        %v4274 = vadd.f32 %v2482, %v4018
        %v4275 = vadd.f32 %v2483, %v4019
        %v4276 = vadd.f32 %v2484, %v4020
        %v4277 = vadd.f32 %v2485, %v4021
        %v4278 = vadd.f32 %v2486, %v4022
        %v4279 = vadd.f32 %v2487, %v4023
        %v4280 = vadd.f32 %v2488, %v4024
        %v4281 = vadd.f32 %v2489, %v4025
        %v4282 = vadd.f32 %v2490, %v4026
        %v4283 = vadd.f32 %v2491, %v4027
        %v4284 = vadd.f32 %v2492, %v4028
        %v4285 = vadd.f32 %v2493, %v4029
        %v4286 = vadd.f32 %v2494, %v4030
        %v4287 = vadd.f32 %v2495, %v4031
        %v4288 = vadd.f32 %v2496, %v4032
        %v4289 = vadd.f32 %v2497, %v4033
        %v4290 = vadd.f32 %v2498, %v4034
        %v4291 = vadd.f32 %v2499, %v4035
        %v4292 = vadd.f32 %v2500, %v4036
        %v4293 = vadd.f32 %v2501, %v4037
        %v4294 = vadd.f32 %v2502, %v4038
        %v4295 = vadd.f32 %v2503, %v4039
        %v4296 = vadd.f32 %v2504, %v4040
        %v4297 = vadd.f32 %v2505, %v4041
        %v4298 = vadd.f32 %v2506, %v4042
        %v4299 = vadd.f32 %v2507, %v4043
        %v4300 = vadd.f32 %v2508, %v4044
        %v4301 = vadd.f32 %v2509, %v4045
        %v4302 = vadd.f32 %v2510, %v4046
        %v4303 = vadd.f32 %v2511, %v4047
        %v4304 = vadd.f32 %v2512, %v4048
        %v4305 = vadd.f32 %v2513, %v4049
        %v4306 = vadd.f32 %v2514, %v4050
        %v4307 = vadd.f32 %v2515, %v4051
        %v4308 = vadd.f32 %v2516, %v4052
        %v4309 = vadd.f32 %v2517, %v4053
        %v4310 = vadd.f32 %v2518, %v4054
        %v4311 = vadd.f32 %v2519, %v4055
        %v4312 = vadd.f32 %v2520, %v4056
        %v4313 = vadd.f32 %v2521, %v4057
        %v4314 = vadd.f32 %v2522, %v4058
        %v4315 = vadd.f32 %v2523, %v4059
        %v4316 = vadd.f32 %v2524, %v4060
        %v4317 = vadd.f32 %v2525, %v4061
        %v4318 = vadd.f32 %v2526, %v4062
        %v4319 = vadd.f32 %v2527, %v4063
        %v4320 = vadd.f32 %v2528, %v4064
        %v4321 = vadd.f32 %v2529, %v4065
        %v4322 = vadd.f32 %v2530, %v4066
        %v4323 = vadd.f32 %v2531, %v4067
        %v4324 = vadd.f32 %v2532, %v4068
        %v4325 = vadd.f32 %v2533, %v4069
        %v4326 = vadd.f32 %v2534, %v4070
        %v4327 = vadd.f32 %v2535, %v4071
        %v4328 = vadd.f32 %v2536, %v4072
        %v4329 = vadd.f32 %v2537, %v4073
        %v4330 = vadd.f32 %v2538, %v4074
        %v4331 = vadd.f32 %v2539, %v4075
        %v4332 = vadd.f32 %v2540, %v4076
        %v4333 = vadd.f32 %v2541, %v4077
        %v4334 = vadd.f32 %v2542, %v4078
        %v4335 = vadd.f32 %v2543, %v4079
        %v4336 = vadd.f32 %v2544, %v4080
        %v4337 = vadd.f32 %v2545, %v4081
        %v4338 = vadd.f32 %v2546, %v4082
        %v4339 = vadd.f32 %v2547, %v4083
        %v4340 = vadd.f32 %v2548, %v4084
        %v4341 = vadd.f32 %v2549, %v4085
        %v4342 = vadd.f32 %v2550, %v4086
        %v4343 = vadd.f32 %v2551, %v4087
        %v4344 = vadd.f32 %v2552, %v4088
        %v4345 = vadd.f32 %v2553, %v4089
        %v4346 = vadd.f32 %v2554, %v4090
        %v4347 = vadd.f32 %v2555, %v4091
        %v4348 = vadd.f32 %v2556, %v4092
        %v4349 = vadd.f32 %v2557, %v4093
        %v4350 = vadd.f32 %v2558, %v4094
        %v4351 = vadd.f32 %v2559, %v4095
        %v4352 = vadd.f32 %v2560, %v4096
        %v4353 = vadd.f32 %v2561, %v4097
        %v4354 = vadd.f32 %v2562, %v4098
        %v4355 = vadd.f32 %v2563, %v4099
        %v4356 = vadd.f32 %v2564, %v4100
        %v4357 = vadd.f32 %v2565, %v4101
        %v4358 = vadd.f32 %v2566, %v4102
        %v4359 = vadd.f32 %v2567, %v4103
        %v4360 = vadd.f32 %v2568, %v4104
        %v4361 = vadd.f32 %v2569, %v4105
        %v4362 = vadd.f32 %v2570, %v4106
        %v4363 = vadd.f32 %v2571, %v4107
        %v4364 = vadd.f32 %v2572, %v4108
        %s4365 = sld [smem:[#allocation3]]
        %s4366 = sld [smem:[#allocation3 + $0x1]]
        %v4367 = vlaneseq
        %v4368 = vshrl.u32 %v4367, 7
        %v4369 = vadd.s32 %v4368, 8
        %v4370 = vadd.s32 %v4368, 16
        %v4371 = vadd.s32 %v4368, 24
        %v4372 = vadd.s32 %v4368, 32
        %v4373 = vadd.s32 %v4368, 40
        %v4374 = vadd.s32 %v4368, 48
        %v4375 = vadd.s32 %v4368, 56
        %v4376 = vadd.s32 %v4368, 64
        %v4377 = vadd.s32 %v4368, 72
        %v4378 = vadd.s32 %v4368, 80
        %v4379 = vadd.s32 %v4368, 88
        %v4380 = vadd.s32 %v4368, 96
        %v4381 = vadd.s32 %v4368, 104
        %v4382 = vadd.s32 %v4368, 112
        %v4383 = vadd.s32 %v4368, 120
        %v4384 = vadd.s32 %v4368, 128
        %v4385 = vadd.s32 %v4368, 136
        %v4386 = vadd.s32 %v4368, 144
        %v4387 = vadd.s32 %v4368, 152
        %v4388 = vadd.s32 %v4368, 160
        %v4389 = vadd.s32 %v4368, 168
        %v4390 = vadd.s32 %v4368, 176
        %v4391 = vadd.s32 %v4368, 184
        %v4392 = vadd.s32 %v4368, 192
        %v4393 = vadd.s32 %v4368, 200
        %v4394 = vadd.s32 %v4368, 208
        %v4395 = vadd.s32 %v4368, 216
        %v4396 = vadd.s32 %v4368, 224
        %v4397 = vadd.s32 %v4368, 232
        %v4398 = vadd.s32 %v4368, 240
        %v4399 = vadd.s32 %v4368, 248
        %v4400 = vadd.s32 %v4368, 256
        %v4401 = vadd.s32 %v4368, 264
        %v4402 = vadd.s32 %v4368, 272
        %v4403 = vadd.s32 %v4368, 280
        %v4404 = vadd.s32 %v4368, 288
        %v4405 = vadd.s32 %v4368, 296
        %v4406 = vadd.s32 %v4368, 304
        %v4407 = vadd.s32 %v4368, 312
        %v4408 = vadd.s32 %v4368, 320
        %v4409 = vadd.s32 %v4368, 328
        %v4410 = vadd.s32 %v4368, 336
        %v4411 = vadd.s32 %v4368, 344
        %v4412 = vadd.s32 %v4368, 352
        %v4413 = vadd.s32 %v4368, 360
        %v4414 = vadd.s32 %v4368, 368
        %v4415 = vadd.s32 %v4368, 376
        %v4416 = vadd.s32 %v4368, 384
        %v4417 = vadd.s32 %v4368, 392
        %v4418 = vadd.s32 %v4368, 400
        %v4419 = vadd.s32 %v4368, 408
        %v4420 = vadd.s32 %v4368, 416
        %v4421 = vadd.s32 %v4368, 424
        %v4422 = vadd.s32 %v4368, 432
        %v4423 = vadd.s32 %v4368, 440
        %v4424 = vadd.s32 %v4368, 448
        %v4425 = vadd.s32 %v4368, 456
        %v4426 = vadd.s32 %v4368, 464
        %v4427 = vadd.s32 %v4368, 472
        %v4428 = vadd.s32 %v4368, 480
        %v4429 = vadd.s32 %v4368, 488
        %v4430 = vadd.s32 %v4368, 496
        %v4431 = vadd.s32 %v4368, 504
        %v4432 = vadd.s32 %v4368, 512
        %v4433 = vadd.s32 %v4368, 520
        %v4434 = vadd.s32 %v4368, 528
        %v4435 = vadd.s32 %v4368, 536
        %v4436 = vadd.s32 %v4368, 544
        %v4437 = vadd.s32 %v4368, 552
        %v4438 = vadd.s32 %v4368, 560
        %v4439 = vadd.s32 %v4368, 568
        %v4440 = vadd.s32 %v4368, 576
        %v4441 = vadd.s32 %v4368, 584
        %v4442 = vadd.s32 %v4368, 592
        %v4443 = vadd.s32 %v4368, 600
        %v4444 = vadd.s32 %v4368, 608
        %v4445 = vadd.s32 %v4368, 616
        %v4446 = vadd.s32 %v4368, 624
        %v4447 = vadd.s32 %v4368, 632
        %v4448 = vadd.s32 %v4368, 640
        %v4449 = vadd.s32 %v4368, 648
        %v4450 = vadd.s32 %v4368, 656
        %v4451 = vadd.s32 %v4368, 664
        %v4452 = vadd.s32 %v4368, 672
        %v4453 = vadd.s32 %v4368, 680
        %v4454 = vadd.s32 %v4368, 688
        %v4455 = vadd.s32 %v4368, 696
        %v4456 = vadd.s32 %v4368, 704
        %v4457 = vadd.s32 %v4368, 712
        %v4458 = vadd.s32 %v4368, 720
        %v4459 = vadd.s32 %v4368, 728
        %v4460 = vadd.s32 %v4368, 736
        %v4461 = vadd.s32 %v4368, 744
        %v4462 = vadd.s32 %v4368, 752
        %v4463 = vadd.s32 %v4368, 760
        %v4464 = vadd.s32 %v4368, 768
        %v4465 = vadd.s32 %v4368, 776
        %v4466 = vadd.s32 %v4368, 784
        %v4467 = vadd.s32 %v4368, 792
        %v4468 = vadd.s32 %v4368, 800
        %v4469 = vadd.s32 %v4368, 808
        %v4470 = vadd.s32 %v4368, 816
        %v4471 = vadd.s32 %v4368, 824
        %v4472 = vadd.s32 %v4368, 832
        %v4473 = vadd.s32 %v4368, 840
        %v4474 = vadd.s32 %v4368, 848
        %v4475 = vadd.s32 %v4368, 856
        %v4476 = vadd.s32 %v4368, 864
        %v4477 = vadd.s32 %v4368, 872
        %v4478 = vadd.s32 %v4368, 880
        %v4479 = vadd.s32 %v4368, 888
        %v4480 = vadd.s32 %v4368, 896
        %v4481 = vadd.s32 %v4368, 904
        %v4482 = vadd.s32 %v4368, 912
        %v4483 = vadd.s32 %v4368, 920
        %v4484 = vadd.s32 %v4368, 928
        %v4485 = vadd.s32 %v4368, 936
        %v4486 = vadd.s32 %v4368, 944
        %v4487 = vadd.s32 %v4368, 952
        %v4488 = vadd.s32 %v4368, 960
        %v4489 = vadd.s32 %v4368, 968
        %v4490 = vadd.s32 %v4368, 976
        %v4491 = vadd.s32 %v4368, 984
        %v4492 = vadd.s32 %v4368, 992
        %v4493 = vadd.s32 %v4368, 1000
        %v4494 = vadd.s32 %v4368, 1008
        %v4495 = vadd.s32 %v4368, 1016
        %v4496 = vadd.s32 %v4368, 1024
        %v4497 = vadd.s32 %v4368, 1032
        %v4498 = vadd.s32 %v4368, 1040
        %v4499 = vadd.s32 %v4368, 1048
        %v4500 = vadd.s32 %v4368, 1056
        %v4501 = vadd.s32 %v4368, 1064
        %v4502 = vadd.s32 %v4368, 1072
        %v4503 = vadd.s32 %v4368, 1080
        %v4504 = vadd.s32 %v4368, 1088
        %v4505 = vadd.s32 %v4368, 1096
        %v4506 = vadd.s32 %v4368, 1104
        %v4507 = vadd.s32 %v4368, 1112
        %v4508 = vadd.s32 %v4368, 1120
        %v4509 = vadd.s32 %v4368, 1128
        %v4510 = vadd.s32 %v4368, 1136
        %v4511 = vadd.s32 %v4368, 1144
        %v4512 = vadd.s32 %v4368, 1152
        %v4513 = vadd.s32 %v4368, 1160
        %v4514 = vadd.s32 %v4368, 1168
        %v4515 = vadd.s32 %v4368, 1176
        %v4516 = vadd.s32 %v4368, 1184
        %v4517 = vadd.s32 %v4368, 1192
        %v4518 = vadd.s32 %v4368, 1200
        %v4519 = vadd.s32 %v4368, 1208
        %v4520 = vadd.s32 %v4368, 1216
        %v4521 = vadd.s32 %v4368, 1224
        %v4522 = vadd.s32 %v4368, 1232
        %v4523 = vadd.s32 %v4368, 1240
        %v4524 = vadd.s32 %v4368, 1248
        %v4525 = vadd.s32 %v4368, 1256
        %v4526 = vadd.s32 %v4368, 1264
        %v4527 = vadd.s32 %v4368, 1272
        %v4528 = vadd.s32 %v4368, 1280
        %v4529 = vadd.s32 %v4368, 1288
        %v4530 = vadd.s32 %v4368, 1296
        %v4531 = vadd.s32 %v4368, 1304
        %v4532 = vadd.s32 %v4368, 1312
        %v4533 = vadd.s32 %v4368, 1320
        %v4534 = vadd.s32 %v4368, 1328
        %v4535 = vadd.s32 %v4368, 1336
        %v4536 = vadd.s32 %v4368, 1344
        %v4537 = vadd.s32 %v4368, 1352
        %v4538 = vadd.s32 %v4368, 1360
        %v4539 = vadd.s32 %v4368, 1368
        %v4540 = vadd.s32 %v4368, 1376
        %v4541 = vadd.s32 %v4368, 1384
        %v4542 = vadd.s32 %v4368, 1392
        %v4543 = vadd.s32 %v4368, 1400
        %v4544 = vadd.s32 %v4368, 1408
        %v4545 = vadd.s32 %v4368, 1416
        %v4546 = vadd.s32 %v4368, 1424
        %v4547 = vadd.s32 %v4368, 1432
        %v4548 = vadd.s32 %v4368, 1440
        %v4549 = vadd.s32 %v4368, 1448
        %v4550 = vadd.s32 %v4368, 1456
        %v4551 = vadd.s32 %v4368, 1464
        %v4552 = vadd.s32 %v4368, 1472
        %v4553 = vadd.s32 %v4368, 1480
        %v4554 = vadd.s32 %v4368, 1488
        %v4555 = vadd.s32 %v4368, 1496
        %v4556 = vadd.s32 %v4368, 1504
        %v4557 = vadd.s32 %v4368, 1512
        %v4558 = vadd.s32 %v4368, 1520
        %v4559 = vadd.s32 %v4368, 1528
        %v4560 = vadd.s32 %v4368, 1536
        %v4561 = vadd.s32 %v4368, 1544
        %v4562 = vadd.s32 %v4368, 1552
        %v4563 = vadd.s32 %v4368, 1560
        %v4564 = vadd.s32 %v4368, 1568
        %v4565 = vadd.s32 %v4368, 1576
        %v4566 = vadd.s32 %v4368, 1584
        %v4567 = vadd.s32 %v4368, 1592
        %v4568 = vadd.s32 %v4368, 1600
        %v4569 = vadd.s32 %v4368, 1608
        %v4570 = vadd.s32 %v4368, 1616
        %v4571 = vadd.s32 %v4368, 1624
        %v4572 = vadd.s32 %v4368, 1632
        %v4573 = vadd.s32 %v4368, 1640
        %v4574 = vadd.s32 %v4368, 1648
        %v4575 = vadd.s32 %v4368, 1656
        %v4576 = vadd.s32 %v4368, 1664
        %v4577 = vadd.s32 %v4368, 1672
        %v4578 = vadd.s32 %v4368, 1680
        %v4579 = vadd.s32 %v4368, 1688
        %v4580 = vadd.s32 %v4368, 1696
        %v4581 = vadd.s32 %v4368, 1704
        %v4582 = vadd.s32 %v4368, 1712
        %v4583 = vadd.s32 %v4368, 1720
        %v4584 = vadd.s32 %v4368, 1728
        %v4585 = vadd.s32 %v4368, 1736
        %v4586 = vadd.s32 %v4368, 1744
        %v4587 = vadd.s32 %v4368, 1752
        %v4588 = vadd.s32 %v4368, 1760
        %v4589 = vadd.s32 %v4368, 1768
        %v4590 = vadd.s32 %v4368, 1776
        %v4591 = vadd.s32 %v4368, 1784
        %v4592 = vadd.s32 %v4368, 1792
        %v4593 = vadd.s32 %v4368, 1800
        %v4594 = vadd.s32 %v4368, 1808
        %v4595 = vadd.s32 %v4368, 1816
        %v4596 = vadd.s32 %v4368, 1824
        %v4597 = vadd.s32 %v4368, 1832
        %v4598 = vadd.s32 %v4368, 1840
        %v4599 = vadd.s32 %v4368, 1848
        %v4600 = vadd.s32 %v4368, 1856
        %v4601 = vadd.s32 %v4368, 1864
        %v4602 = vadd.s32 %v4368, 1872
        %v4603 = vadd.s32 %v4368, 1880
        %v4604 = vadd.s32 %v4368, 1888
        %v4605 = vadd.s32 %v4368, 1896
        %v4606 = vadd.s32 %v4368, 1904
        %v4607 = vadd.s32 %v4368, 1912
        %v4608 = vadd.s32 %v4368, 1920
        %v4609 = vadd.s32 %v4368, 1928
        %v4610 = vadd.s32 %v4368, 1936
        %v4611 = vadd.s32 %v4368, 1944
        %v4612 = vadd.s32 %v4368, 1952
        %v4613 = vadd.s32 %v4368, 1960
        %v4614 = vadd.s32 %v4368, 1968
        %v4615 = vadd.s32 %v4368, 1976
        %v4616 = vadd.s32 %v4368, 1984
        %v4617 = vadd.s32 %v4368, 1992
        %v4618 = vadd.s32 %v4368, 2000
        %v4619 = vadd.s32 %v4368, 2008
        %v4620 = vadd.s32 %v4368, 2016
        %v4621 = vadd.s32 %v4368, 2024
        %v4622 = vadd.s32 %v4368, 2032
        %v4623 = vadd.s32 %v4368, 2040
        %v4624 = vlaneseq
        %v4625 = vand.u32 %v4624, 127
        %s4626 = sadd.s32 %s35, %s36
        %s4627 = smul.u32 %s4626, 2048
        %v4628 = vstv %s4627
        %v4629 = vadd.s32 %v4628, %v4368
        %v4630 = vadd.s32 %v4628, %v4369
        %v4631 = vadd.s32 %v4628, %v4370
        %v4632 = vadd.s32 %v4628, %v4371
        %v4633 = vadd.s32 %v4628, %v4372
        %v4634 = vadd.s32 %v4628, %v4373
        %v4635 = vadd.s32 %v4628, %v4374
        %v4636 = vadd.s32 %v4628, %v4375
        %v4637 = vadd.s32 %v4628, %v4376
        %v4638 = vadd.s32 %v4628, %v4377
        %v4639 = vadd.s32 %v4628, %v4378
        %v4640 = vadd.s32 %v4628, %v4379
        %v4641 = vadd.s32 %v4628, %v4380
        %v4642 = vadd.s32 %v4628, %v4381
        %v4643 = vadd.s32 %v4628, %v4382
        %v4644 = vadd.s32 %v4628, %v4383
        %v4645 = vadd.s32 %v4628, %v4384
        %v4646 = vadd.s32 %v4628, %v4385
        %v4647 = vadd.s32 %v4628, %v4386
        %v4648 = vadd.s32 %v4628, %v4387
        %v4649 = vadd.s32 %v4628, %v4388
        %v4650 = vadd.s32 %v4628, %v4389
        %v4651 = vadd.s32 %v4628, %v4390
        %v4652 = vadd.s32 %v4628, %v4391
        %v4653 = vadd.s32 %v4628, %v4392
        %v4654 = vadd.s32 %v4628, %v4393
        %v4655 = vadd.s32 %v4628, %v4394
        %v4656 = vadd.s32 %v4628, %v4395
        %v4657 = vadd.s32 %v4628, %v4396
        %v4658 = vadd.s32 %v4628, %v4397
        %v4659 = vadd.s32 %v4628, %v4398
        %v4660 = vadd.s32 %v4628, %v4399
        %v4661 = vadd.s32 %v4628, %v4400
        %v4662 = vadd.s32 %v4628, %v4401
        %v4663 = vadd.s32 %v4628, %v4402
        %v4664 = vadd.s32 %v4628, %v4403
        %v4665 = vadd.s32 %v4628, %v4404
        %v4666 = vadd.s32 %v4628, %v4405
        %v4667 = vadd.s32 %v4628, %v4406
        %v4668 = vadd.s32 %v4628, %v4407
        %v4669 = vadd.s32 %v4628, %v4408
        %v4670 = vadd.s32 %v4628, %v4409
        %v4671 = vadd.s32 %v4628, %v4410
        %v4672 = vadd.s32 %v4628, %v4411
        %v4673 = vadd.s32 %v4628, %v4412
        %v4674 = vadd.s32 %v4628, %v4413
        %v4675 = vadd.s32 %v4628, %v4414
        %v4676 = vadd.s32 %v4628, %v4415
        %v4677 = vadd.s32 %v4628, %v4416
        %v4678 = vadd.s32 %v4628, %v4417
        %v4679 = vadd.s32 %v4628, %v4418
        %v4680 = vadd.s32 %v4628, %v4419
        %v4681 = vadd.s32 %v4628, %v4420
        %v4682 = vadd.s32 %v4628, %v4421
        %v4683 = vadd.s32 %v4628, %v4422
        %v4684 = vadd.s32 %v4628, %v4423
        %v4685 = vadd.s32 %v4628, %v4424
        %v4686 = vadd.s32 %v4628, %v4425
        %v4687 = vadd.s32 %v4628, %v4426
        %v4688 = vadd.s32 %v4628, %v4427
        %v4689 = vadd.s32 %v4628, %v4428
        %v4690 = vadd.s32 %v4628, %v4429
        %v4691 = vadd.s32 %v4628, %v4430
        %v4692 = vadd.s32 %v4628, %v4431
        %v4693 = vadd.s32 %v4628, %v4432
        %v4694 = vadd.s32 %v4628, %v4433
        %v4695 = vadd.s32 %v4628, %v4434
        %v4696 = vadd.s32 %v4628, %v4435
        %v4697 = vadd.s32 %v4628, %v4436
        %v4698 = vadd.s32 %v4628, %v4437
        %v4699 = vadd.s32 %v4628, %v4438
        %v4700 = vadd.s32 %v4628, %v4439
        %v4701 = vadd.s32 %v4628, %v4440
        %v4702 = vadd.s32 %v4628, %v4441
        %v4703 = vadd.s32 %v4628, %v4442
        %v4704 = vadd.s32 %v4628, %v4443
        %v4705 = vadd.s32 %v4628, %v4444
        %v4706 = vadd.s32 %v4628, %v4445
        %v4707 = vadd.s32 %v4628, %v4446
        %v4708 = vadd.s32 %v4628, %v4447
        %v4709 = vadd.s32 %v4628, %v4448
        %v4710 = vadd.s32 %v4628, %v4449
        %v4711 = vadd.s32 %v4628, %v4450
        %v4712 = vadd.s32 %v4628, %v4451
        %v4713 = vadd.s32 %v4628, %v4452
        %v4714 = vadd.s32 %v4628, %v4453
        %v4715 = vadd.s32 %v4628, %v4454
        %v4716 = vadd.s32 %v4628, %v4455
        %v4717 = vadd.s32 %v4628, %v4456
        %v4718 = vadd.s32 %v4628, %v4457
        %v4719 = vadd.s32 %v4628, %v4458
        %v4720 = vadd.s32 %v4628, %v4459
        %v4721 = vadd.s32 %v4628, %v4460
        %v4722 = vadd.s32 %v4628, %v4461
        %v4723 = vadd.s32 %v4628, %v4462
        %v4724 = vadd.s32 %v4628, %v4463
        %v4725 = vadd.s32 %v4628, %v4464
        %v4726 = vadd.s32 %v4628, %v4465
        %v4727 = vadd.s32 %v4628, %v4466
        %v4728 = vadd.s32 %v4628, %v4467
        %v4729 = vadd.s32 %v4628, %v4468
        %v4730 = vadd.s32 %v4628, %v4469
        %v4731 = vadd.s32 %v4628, %v4470
        %v4732 = vadd.s32 %v4628, %v4471
        %v4733 = vadd.s32 %v4628, %v4472
        %v4734 = vadd.s32 %v4628, %v4473
        %v4735 = vadd.s32 %v4628, %v4474
        %v4736 = vadd.s32 %v4628, %v4475
        %v4737 = vadd.s32 %v4628, %v4476
        %v4738 = vadd.s32 %v4628, %v4477
        %v4739 = vadd.s32 %v4628, %v4478
        %v4740 = vadd.s32 %v4628, %v4479
        %v4741 = vadd.s32 %v4628, %v4480
        %v4742 = vadd.s32 %v4628, %v4481
        %v4743 = vadd.s32 %v4628, %v4482
        %v4744 = vadd.s32 %v4628, %v4483
        %v4745 = vadd.s32 %v4628, %v4484
        %v4746 = vadd.s32 %v4628, %v4485
        %v4747 = vadd.s32 %v4628, %v4486
        %v4748 = vadd.s32 %v4628, %v4487
        %v4749 = vadd.s32 %v4628, %v4488
        %v4750 = vadd.s32 %v4628, %v4489
        %v4751 = vadd.s32 %v4628, %v4490
        %v4752 = vadd.s32 %v4628, %v4491
        %v4753 = vadd.s32 %v4628, %v4492
        %v4754 = vadd.s32 %v4628, %v4493
        %v4755 = vadd.s32 %v4628, %v4494
        %v4756 = vadd.s32 %v4628, %v4495
        %v4757 = vadd.s32 %v4628, %v4496
        %v4758 = vadd.s32 %v4628, %v4497
        %v4759 = vadd.s32 %v4628, %v4498
        %v4760 = vadd.s32 %v4628, %v4499
        %v4761 = vadd.s32 %v4628, %v4500
        %v4762 = vadd.s32 %v4628, %v4501
        %v4763 = vadd.s32 %v4628, %v4502
        %v4764 = vadd.s32 %v4628, %v4503
        %v4765 = vadd.s32 %v4628, %v4504
        %v4766 = vadd.s32 %v4628, %v4505
        %v4767 = vadd.s32 %v4628, %v4506
        %v4768 = vadd.s32 %v4628, %v4507
        %v4769 = vadd.s32 %v4628, %v4508
        %v4770 = vadd.s32 %v4628, %v4509
        %v4771 = vadd.s32 %v4628, %v4510
        %v4772 = vadd.s32 %v4628, %v4511
        %v4773 = vadd.s32 %v4628, %v4512
        %v4774 = vadd.s32 %v4628, %v4513
        %v4775 = vadd.s32 %v4628, %v4514
        %v4776 = vadd.s32 %v4628, %v4515
        %v4777 = vadd.s32 %v4628, %v4516
        %v4778 = vadd.s32 %v4628, %v4517
        %v4779 = vadd.s32 %v4628, %v4518
        %v4780 = vadd.s32 %v4628, %v4519
        %v4781 = vadd.s32 %v4628, %v4520
        %v4782 = vadd.s32 %v4628, %v4521
        %v4783 = vadd.s32 %v4628, %v4522
        %v4784 = vadd.s32 %v4628, %v4523
        %v4785 = vadd.s32 %v4628, %v4524
        %v4786 = vadd.s32 %v4628, %v4525
        %v4787 = vadd.s32 %v4628, %v4526
        %v4788 = vadd.s32 %v4628, %v4527
        %v4789 = vadd.s32 %v4628, %v4528
        %v4790 = vadd.s32 %v4628, %v4529
        %v4791 = vadd.s32 %v4628, %v4530
        %v4792 = vadd.s32 %v4628, %v4531
        %v4793 = vadd.s32 %v4628, %v4532
        %v4794 = vadd.s32 %v4628, %v4533
        %v4795 = vadd.s32 %v4628, %v4534
        %v4796 = vadd.s32 %v4628, %v4535
        %v4797 = vadd.s32 %v4628, %v4536
        %v4798 = vadd.s32 %v4628, %v4537
        %v4799 = vadd.s32 %v4628, %v4538
        %v4800 = vadd.s32 %v4628, %v4539
        %v4801 = vadd.s32 %v4628, %v4540
        %v4802 = vadd.s32 %v4628, %v4541
        %v4803 = vadd.s32 %v4628, %v4542
        %v4804 = vadd.s32 %v4628, %v4543
        %v4805 = vadd.s32 %v4628, %v4544
        %v4806 = vadd.s32 %v4628, %v4545
        %v4807 = vadd.s32 %v4628, %v4546
        %v4808 = vadd.s32 %v4628, %v4547
        %v4809 = vadd.s32 %v4628, %v4548
        %v4810 = vadd.s32 %v4628, %v4549
        %v4811 = vadd.s32 %v4628, %v4550
        %v4812 = vadd.s32 %v4628, %v4551
        %v4813 = vadd.s32 %v4628, %v4552
        %v4814 = vadd.s32 %v4628, %v4553
        %v4815 = vadd.s32 %v4628, %v4554
        %v4816 = vadd.s32 %v4628, %v4555
        %v4817 = vadd.s32 %v4628, %v4556
        %v4818 = vadd.s32 %v4628, %v4557
        %v4819 = vadd.s32 %v4628, %v4558
        %v4820 = vadd.s32 %v4628, %v4559
        %v4821 = vadd.s32 %v4628, %v4560
        %v4822 = vadd.s32 %v4628, %v4561
        %v4823 = vadd.s32 %v4628, %v4562
        %v4824 = vadd.s32 %v4628, %v4563
        %v4825 = vadd.s32 %v4628, %v4564
        %v4826 = vadd.s32 %v4628, %v4565
        %v4827 = vadd.s32 %v4628, %v4566
        %v4828 = vadd.s32 %v4628, %v4567
        %v4829 = vadd.s32 %v4628, %v4568
        %v4830 = vadd.s32 %v4628, %v4569
        %v4831 = vadd.s32 %v4628, %v4570
        %v4832 = vadd.s32 %v4628, %v4571
        %v4833 = vadd.s32 %v4628, %v4572
        %v4834 = vadd.s32 %v4628, %v4573
        %v4835 = vadd.s32 %v4628, %v4574
        %v4836 = vadd.s32 %v4628, %v4575
        %v4837 = vadd.s32 %v4628, %v4576
        %v4838 = vadd.s32 %v4628, %v4577
        %v4839 = vadd.s32 %v4628, %v4578
        %v4840 = vadd.s32 %v4628, %v4579
        %v4841 = vadd.s32 %v4628, %v4580
        %v4842 = vadd.s32 %v4628, %v4581
        %v4843 = vadd.s32 %v4628, %v4582
        %v4844 = vadd.s32 %v4628, %v4583
        %v4845 = vadd.s32 %v4628, %v4584
        %v4846 = vadd.s32 %v4628, %v4585
        %v4847 = vadd.s32 %v4628, %v4586
        %v4848 = vadd.s32 %v4628, %v4587
        %v4849 = vadd.s32 %v4628, %v4588
        %v4850 = vadd.s32 %v4628, %v4589
        %v4851 = vadd.s32 %v4628, %v4590
        %v4852 = vadd.s32 %v4628, %v4591
        %v4853 = vadd.s32 %v4628, %v4592
        %v4854 = vadd.s32 %v4628, %v4593
        %v4855 = vadd.s32 %v4628, %v4594
        %v4856 = vadd.s32 %v4628, %v4595
        %v4857 = vadd.s32 %v4628, %v4596
        %v4858 = vadd.s32 %v4628, %v4597
        %v4859 = vadd.s32 %v4628, %v4598
        %v4860 = vadd.s32 %v4628, %v4599
        %v4861 = vadd.s32 %v4628, %v4600
        %v4862 = vadd.s32 %v4628, %v4601
        %v4863 = vadd.s32 %v4628, %v4602
        %v4864 = vadd.s32 %v4628, %v4603
        %v4865 = vadd.s32 %v4628, %v4604
        %v4866 = vadd.s32 %v4628, %v4605
        %v4867 = vadd.s32 %v4628, %v4606
        %v4868 = vadd.s32 %v4628, %v4607
        %v4869 = vadd.s32 %v4628, %v4608
        %v4870 = vadd.s32 %v4628, %v4609
        %v4871 = vadd.s32 %v4628, %v4610
        %v4872 = vadd.s32 %v4628, %v4611
        %v4873 = vadd.s32 %v4628, %v4612
        %v4874 = vadd.s32 %v4628, %v4613
        %v4875 = vadd.s32 %v4628, %v4614
        %v4876 = vadd.s32 %v4628, %v4615
        %v4877 = vadd.s32 %v4628, %v4616
        %v4878 = vadd.s32 %v4628, %v4617
        %v4879 = vadd.s32 %v4628, %v4618
        %v4880 = vadd.s32 %v4628, %v4619
        %v4881 = vadd.s32 %v4628, %v4620
        %v4882 = vadd.s32 %v4628, %v4621
        %v4883 = vadd.s32 %v4628, %v4622
        %v4884 = vadd.s32 %v4628, %v4623
        %v4885 = vstv %s4365
        %vm4886 = vcmp.lt.s32.totalorder %v4629, %v4885
        %vm4887 = vcmp.lt.s32.totalorder %v4630, %v4885
        %vm4888 = vcmp.lt.s32.totalorder %v4631, %v4885
        %vm4889 = vcmp.lt.s32.totalorder %v4632, %v4885
        %vm4890 = vcmp.lt.s32.totalorder %v4633, %v4885
        %vm4891 = vcmp.lt.s32.totalorder %v4634, %v4885
        %vm4892 = vcmp.lt.s32.totalorder %v4635, %v4885
        %vm4893 = vcmp.lt.s32.totalorder %v4636, %v4885
        %vm4894 = vcmp.lt.s32.totalorder %v4637, %v4885
        %vm4895 = vcmp.lt.s32.totalorder %v4638, %v4885
        %vm4896 = vcmp.lt.s32.totalorder %v4639, %v4885
        %vm4897 = vcmp.lt.s32.totalorder %v4640, %v4885
        %vm4898 = vcmp.lt.s32.totalorder %v4641, %v4885
        %vm4899 = vcmp.lt.s32.totalorder %v4642, %v4885
        %vm4900 = vcmp.lt.s32.totalorder %v4643, %v4885
        %vm4901 = vcmp.lt.s32.totalorder %v4644, %v4885
        %vm4902 = vcmp.lt.s32.totalorder %v4645, %v4885
        %vm4903 = vcmp.lt.s32.totalorder %v4646, %v4885
        %vm4904 = vcmp.lt.s32.totalorder %v4647, %v4885
        %vm4905 = vcmp.lt.s32.totalorder %v4648, %v4885
        %vm4906 = vcmp.lt.s32.totalorder %v4649, %v4885
        %vm4907 = vcmp.lt.s32.totalorder %v4650, %v4885
        %vm4908 = vcmp.lt.s32.totalorder %v4651, %v4885
        %vm4909 = vcmp.lt.s32.totalorder %v4652, %v4885
        %vm4910 = vcmp.lt.s32.totalorder %v4653, %v4885
        %vm4911 = vcmp.lt.s32.totalorder %v4654, %v4885
        %vm4912 = vcmp.lt.s32.totalorder %v4655, %v4885
        %vm4913 = vcmp.lt.s32.totalorder %v4656, %v4885
        %vm4914 = vcmp.lt.s32.totalorder %v4657, %v4885
        %vm4915 = vcmp.lt.s32.totalorder %v4658, %v4885
        %vm4916 = vcmp.lt.s32.totalorder %v4659, %v4885
        %vm4917 = vcmp.lt.s32.totalorder %v4660, %v4885
        %vm4918 = vcmp.lt.s32.totalorder %v4661, %v4885
        %vm4919 = vcmp.lt.s32.totalorder %v4662, %v4885
        %vm4920 = vcmp.lt.s32.totalorder %v4663, %v4885
        %vm4921 = vcmp.lt.s32.totalorder %v4664, %v4885
        %vm4922 = vcmp.lt.s32.totalorder %v4665, %v4885
        %vm4923 = vcmp.lt.s32.totalorder %v4666, %v4885
        %vm4924 = vcmp.lt.s32.totalorder %v4667, %v4885
        %vm4925 = vcmp.lt.s32.totalorder %v4668, %v4885
        %vm4926 = vcmp.lt.s32.totalorder %v4669, %v4885
        %vm4927 = vcmp.lt.s32.totalorder %v4670, %v4885
        %vm4928 = vcmp.lt.s32.totalorder %v4671, %v4885
        %vm4929 = vcmp.lt.s32.totalorder %v4672, %v4885
        %vm4930 = vcmp.lt.s32.totalorder %v4673, %v4885
        %vm4931 = vcmp.lt.s32.totalorder %v4674, %v4885
        %vm4932 = vcmp.lt.s32.totalorder %v4675, %v4885
        %vm4933 = vcmp.lt.s32.totalorder %v4676, %v4885
        %vm4934 = vcmp.lt.s32.totalorder %v4677, %v4885
        %vm4935 = vcmp.lt.s32.totalorder %v4678, %v4885
        %vm4936 = vcmp.lt.s32.totalorder %v4679, %v4885
        %vm4937 = vcmp.lt.s32.totalorder %v4680, %v4885
        %vm4938 = vcmp.lt.s32.totalorder %v4681, %v4885
        %vm4939 = vcmp.lt.s32.totalorder %v4682, %v4885
        %vm4940 = vcmp.lt.s32.totalorder %v4683, %v4885
        %vm4941 = vcmp.lt.s32.totalorder %v4684, %v4885
        %vm4942 = vcmp.lt.s32.totalorder %v4685, %v4885
        %vm4943 = vcmp.lt.s32.totalorder %v4686, %v4885
        %vm4944 = vcmp.lt.s32.totalorder %v4687, %v4885
        %vm4945 = vcmp.lt.s32.totalorder %v4688, %v4885
        %vm4946 = vcmp.lt.s32.totalorder %v4689, %v4885
        %vm4947 = vcmp.lt.s32.totalorder %v4690, %v4885
        %vm4948 = vcmp.lt.s32.totalorder %v4691, %v4885
        %vm4949 = vcmp.lt.s32.totalorder %v4692, %v4885
        %vm4950 = vcmp.lt.s32.totalorder %v4693, %v4885
        %vm4951 = vcmp.lt.s32.totalorder %v4694, %v4885
        %vm4952 = vcmp.lt.s32.totalorder %v4695, %v4885
        %vm4953 = vcmp.lt.s32.totalorder %v4696, %v4885
        %vm4954 = vcmp.lt.s32.totalorder %v4697, %v4885
        %vm4955 = vcmp.lt.s32.totalorder %v4698, %v4885
        %vm4956 = vcmp.lt.s32.totalorder %v4699, %v4885
        %vm4957 = vcmp.lt.s32.totalorder %v4700, %v4885
        %vm4958 = vcmp.lt.s32.totalorder %v4701, %v4885
        %vm4959 = vcmp.lt.s32.totalorder %v4702, %v4885
        %vm4960 = vcmp.lt.s32.totalorder %v4703, %v4885
        %vm4961 = vcmp.lt.s32.totalorder %v4704, %v4885
        %vm4962 = vcmp.lt.s32.totalorder %v4705, %v4885
        %vm4963 = vcmp.lt.s32.totalorder %v4706, %v4885
        %vm4964 = vcmp.lt.s32.totalorder %v4707, %v4885
        %vm4965 = vcmp.lt.s32.totalorder %v4708, %v4885
        %vm4966 = vcmp.lt.s32.totalorder %v4709, %v4885
        %vm4967 = vcmp.lt.s32.totalorder %v4710, %v4885
        %vm4968 = vcmp.lt.s32.totalorder %v4711, %v4885
        %vm4969 = vcmp.lt.s32.totalorder %v4712, %v4885
        %vm4970 = vcmp.lt.s32.totalorder %v4713, %v4885
        %vm4971 = vcmp.lt.s32.totalorder %v4714, %v4885
        %vm4972 = vcmp.lt.s32.totalorder %v4715, %v4885
        %vm4973 = vcmp.lt.s32.totalorder %v4716, %v4885
        %vm4974 = vcmp.lt.s32.totalorder %v4717, %v4885
        %vm4975 = vcmp.lt.s32.totalorder %v4718, %v4885
        %vm4976 = vcmp.lt.s32.totalorder %v4719, %v4885
        %vm4977 = vcmp.lt.s32.totalorder %v4720, %v4885
        %vm4978 = vcmp.lt.s32.totalorder %v4721, %v4885
        %vm4979 = vcmp.lt.s32.totalorder %v4722, %v4885
        %vm4980 = vcmp.lt.s32.totalorder %v4723, %v4885
        %vm4981 = vcmp.lt.s32.totalorder %v4724, %v4885
        %vm4982 = vcmp.lt.s32.totalorder %v4725, %v4885
        %vm4983 = vcmp.lt.s32.totalorder %v4726, %v4885
        %vm4984 = vcmp.lt.s32.totalorder %v4727, %v4885
        %vm4985 = vcmp.lt.s32.totalorder %v4728, %v4885
        %vm4986 = vcmp.lt.s32.totalorder %v4729, %v4885
        %vm4987 = vcmp.lt.s32.totalorder %v4730, %v4885
        %vm4988 = vcmp.lt.s32.totalorder %v4731, %v4885
        %vm4989 = vcmp.lt.s32.totalorder %v4732, %v4885
        %vm4990 = vcmp.lt.s32.totalorder %v4733, %v4885
        %vm4991 = vcmp.lt.s32.totalorder %v4734, %v4885
        %vm4992 = vcmp.lt.s32.totalorder %v4735, %v4885
        %vm4993 = vcmp.lt.s32.totalorder %v4736, %v4885
        %vm4994 = vcmp.lt.s32.totalorder %v4737, %v4885
        %vm4995 = vcmp.lt.s32.totalorder %v4738, %v4885
        %vm4996 = vcmp.lt.s32.totalorder %v4739, %v4885
        %vm4997 = vcmp.lt.s32.totalorder %v4740, %v4885
        %vm4998 = vcmp.lt.s32.totalorder %v4741, %v4885
        %vm4999 = vcmp.lt.s32.totalorder %v4742, %v4885
        %vm5000 = vcmp.lt.s32.totalorder %v4743, %v4885
        %vm5001 = vcmp.lt.s32.totalorder %v4744, %v4885
        %vm5002 = vcmp.lt.s32.totalorder %v4745, %v4885
        %vm5003 = vcmp.lt.s32.totalorder %v4746, %v4885
        %vm5004 = vcmp.lt.s32.totalorder %v4747, %v4885
        %vm5005 = vcmp.lt.s32.totalorder %v4748, %v4885
        %vm5006 = vcmp.lt.s32.totalorder %v4749, %v4885
        %vm5007 = vcmp.lt.s32.totalorder %v4750, %v4885
        %vm5008 = vcmp.lt.s32.totalorder %v4751, %v4885
        %vm5009 = vcmp.lt.s32.totalorder %v4752, %v4885
        %vm5010 = vcmp.lt.s32.totalorder %v4753, %v4885
        %vm5011 = vcmp.lt.s32.totalorder %v4754, %v4885
        %vm5012 = vcmp.lt.s32.totalorder %v4755, %v4885
        %vm5013 = vcmp.lt.s32.totalorder %v4756, %v4885
        %vm5014 = vcmp.lt.s32.totalorder %v4757, %v4885
        %vm5015 = vcmp.lt.s32.totalorder %v4758, %v4885
        %vm5016 = vcmp.lt.s32.totalorder %v4759, %v4885
        %vm5017 = vcmp.lt.s32.totalorder %v4760, %v4885
        %vm5018 = vcmp.lt.s32.totalorder %v4761, %v4885
        %vm5019 = vcmp.lt.s32.totalorder %v4762, %v4885
        %vm5020 = vcmp.lt.s32.totalorder %v4763, %v4885
        %vm5021 = vcmp.lt.s32.totalorder %v4764, %v4885
        %vm5022 = vcmp.lt.s32.totalorder %v4765, %v4885
        %vm5023 = vcmp.lt.s32.totalorder %v4766, %v4885
        %vm5024 = vcmp.lt.s32.totalorder %v4767, %v4885
        %vm5025 = vcmp.lt.s32.totalorder %v4768, %v4885
        %vm5026 = vcmp.lt.s32.totalorder %v4769, %v4885
        %vm5027 = vcmp.lt.s32.totalorder %v4770, %v4885
        %vm5028 = vcmp.lt.s32.totalorder %v4771, %v4885
        %vm5029 = vcmp.lt.s32.totalorder %v4772, %v4885
        %vm5030 = vcmp.lt.s32.totalorder %v4773, %v4885
        %vm5031 = vcmp.lt.s32.totalorder %v4774, %v4885
        %vm5032 = vcmp.lt.s32.totalorder %v4775, %v4885
        %vm5033 = vcmp.lt.s32.totalorder %v4776, %v4885
        %vm5034 = vcmp.lt.s32.totalorder %v4777, %v4885
        %vm5035 = vcmp.lt.s32.totalorder %v4778, %v4885
        %vm5036 = vcmp.lt.s32.totalorder %v4779, %v4885
        %vm5037 = vcmp.lt.s32.totalorder %v4780, %v4885
        %vm5038 = vcmp.lt.s32.totalorder %v4781, %v4885
        %vm5039 = vcmp.lt.s32.totalorder %v4782, %v4885
        %vm5040 = vcmp.lt.s32.totalorder %v4783, %v4885
        %vm5041 = vcmp.lt.s32.totalorder %v4784, %v4885
        %vm5042 = vcmp.lt.s32.totalorder %v4785, %v4885
        %vm5043 = vcmp.lt.s32.totalorder %v4786, %v4885
        %vm5044 = vcmp.lt.s32.totalorder %v4787, %v4885
        %vm5045 = vcmp.lt.s32.totalorder %v4788, %v4885
        %vm5046 = vcmp.lt.s32.totalorder %v4789, %v4885
        %vm5047 = vcmp.lt.s32.totalorder %v4790, %v4885
        %vm5048 = vcmp.lt.s32.totalorder %v4791, %v4885
        %vm5049 = vcmp.lt.s32.totalorder %v4792, %v4885
        %vm5050 = vcmp.lt.s32.totalorder %v4793, %v4885
        %vm5051 = vcmp.lt.s32.totalorder %v4794, %v4885
        %vm5052 = vcmp.lt.s32.totalorder %v4795, %v4885
        %vm5053 = vcmp.lt.s32.totalorder %v4796, %v4885
        %vm5054 = vcmp.lt.s32.totalorder %v4797, %v4885
        %vm5055 = vcmp.lt.s32.totalorder %v4798, %v4885
        %vm5056 = vcmp.lt.s32.totalorder %v4799, %v4885
        %vm5057 = vcmp.lt.s32.totalorder %v4800, %v4885
        %vm5058 = vcmp.lt.s32.totalorder %v4801, %v4885
        %vm5059 = vcmp.lt.s32.totalorder %v4802, %v4885
        %vm5060 = vcmp.lt.s32.totalorder %v4803, %v4885
        %vm5061 = vcmp.lt.s32.totalorder %v4804, %v4885
        %vm5062 = vcmp.lt.s32.totalorder %v4805, %v4885
        %vm5063 = vcmp.lt.s32.totalorder %v4806, %v4885
        %vm5064 = vcmp.lt.s32.totalorder %v4807, %v4885
        %vm5065 = vcmp.lt.s32.totalorder %v4808, %v4885
        %vm5066 = vcmp.lt.s32.totalorder %v4809, %v4885
        %vm5067 = vcmp.lt.s32.totalorder %v4810, %v4885
        %vm5068 = vcmp.lt.s32.totalorder %v4811, %v4885
        %vm5069 = vcmp.lt.s32.totalorder %v4812, %v4885
        %vm5070 = vcmp.lt.s32.totalorder %v4813, %v4885
        %vm5071 = vcmp.lt.s32.totalorder %v4814, %v4885
        %vm5072 = vcmp.lt.s32.totalorder %v4815, %v4885
        %vm5073 = vcmp.lt.s32.totalorder %v4816, %v4885
        %vm5074 = vcmp.lt.s32.totalorder %v4817, %v4885
        %vm5075 = vcmp.lt.s32.totalorder %v4818, %v4885
        %vm5076 = vcmp.lt.s32.totalorder %v4819, %v4885
        %vm5077 = vcmp.lt.s32.totalorder %v4820, %v4885
        %vm5078 = vcmp.lt.s32.totalorder %v4821, %v4885
        %vm5079 = vcmp.lt.s32.totalorder %v4822, %v4885
        %vm5080 = vcmp.lt.s32.totalorder %v4823, %v4885
        %vm5081 = vcmp.lt.s32.totalorder %v4824, %v4885
        %vm5082 = vcmp.lt.s32.totalorder %v4825, %v4885
        %vm5083 = vcmp.lt.s32.totalorder %v4826, %v4885
        %vm5084 = vcmp.lt.s32.totalorder %v4827, %v4885
        %vm5085 = vcmp.lt.s32.totalorder %v4828, %v4885
        %vm5086 = vcmp.lt.s32.totalorder %v4829, %v4885
        %vm5087 = vcmp.lt.s32.totalorder %v4830, %v4885
        %vm5088 = vcmp.lt.s32.totalorder %v4831, %v4885
        %vm5089 = vcmp.lt.s32.totalorder %v4832, %v4885
        %vm5090 = vcmp.lt.s32.totalorder %v4833, %v4885
        %vm5091 = vcmp.lt.s32.totalorder %v4834, %v4885
        %vm5092 = vcmp.lt.s32.totalorder %v4835, %v4885
        %vm5093 = vcmp.lt.s32.totalorder %v4836, %v4885
        %vm5094 = vcmp.lt.s32.totalorder %v4837, %v4885
        %vm5095 = vcmp.lt.s32.totalorder %v4838, %v4885
        %vm5096 = vcmp.lt.s32.totalorder %v4839, %v4885
        %vm5097 = vcmp.lt.s32.totalorder %v4840, %v4885
        %vm5098 = vcmp.lt.s32.totalorder %v4841, %v4885
        %vm5099 = vcmp.lt.s32.totalorder %v4842, %v4885
        %vm5100 = vcmp.lt.s32.totalorder %v4843, %v4885
        %vm5101 = vcmp.lt.s32.totalorder %v4844, %v4885
        %vm5102 = vcmp.lt.s32.totalorder %v4845, %v4885
        %vm5103 = vcmp.lt.s32.totalorder %v4846, %v4885
        %vm5104 = vcmp.lt.s32.totalorder %v4847, %v4885
        %vm5105 = vcmp.lt.s32.totalorder %v4848, %v4885
        %vm5106 = vcmp.lt.s32.totalorder %v4849, %v4885
        %vm5107 = vcmp.lt.s32.totalorder %v4850, %v4885
        %vm5108 = vcmp.lt.s32.totalorder %v4851, %v4885
        %vm5109 = vcmp.lt.s32.totalorder %v4852, %v4885
        %vm5110 = vcmp.lt.s32.totalorder %v4853, %v4885
        %vm5111 = vcmp.lt.s32.totalorder %v4854, %v4885
        %vm5112 = vcmp.lt.s32.totalorder %v4855, %v4885
        %vm5113 = vcmp.lt.s32.totalorder %v4856, %v4885
        %vm5114 = vcmp.lt.s32.totalorder %v4857, %v4885
        %vm5115 = vcmp.lt.s32.totalorder %v4858, %v4885
        %vm5116 = vcmp.lt.s32.totalorder %v4859, %v4885
        %vm5117 = vcmp.lt.s32.totalorder %v4860, %v4885
        %vm5118 = vcmp.lt.s32.totalorder %v4861, %v4885
        %vm5119 = vcmp.lt.s32.totalorder %v4862, %v4885
        %vm5120 = vcmp.lt.s32.totalorder %v4863, %v4885
        %vm5121 = vcmp.lt.s32.totalorder %v4864, %v4885
        %vm5122 = vcmp.lt.s32.totalorder %v4865, %v4885
        %vm5123 = vcmp.lt.s32.totalorder %v4866, %v4885
        %vm5124 = vcmp.lt.s32.totalorder %v4867, %v4885
        %vm5125 = vcmp.lt.s32.totalorder %v4868, %v4885
        %vm5126 = vcmp.lt.s32.totalorder %v4869, %v4885
        %vm5127 = vcmp.lt.s32.totalorder %v4870, %v4885
        %vm5128 = vcmp.lt.s32.totalorder %v4871, %v4885
        %vm5129 = vcmp.lt.s32.totalorder %v4872, %v4885
        %vm5130 = vcmp.lt.s32.totalorder %v4873, %v4885
        %vm5131 = vcmp.lt.s32.totalorder %v4874, %v4885
        %vm5132 = vcmp.lt.s32.totalorder %v4875, %v4885
        %vm5133 = vcmp.lt.s32.totalorder %v4876, %v4885
        %vm5134 = vcmp.lt.s32.totalorder %v4877, %v4885
        %vm5135 = vcmp.lt.s32.totalorder %v4878, %v4885
        %vm5136 = vcmp.lt.s32.totalorder %v4879, %v4885
        %vm5137 = vcmp.lt.s32.totalorder %v4880, %v4885
        %vm5138 = vcmp.lt.s32.totalorder %v4881, %v4885
        %vm5139 = vcmp.lt.s32.totalorder %v4882, %v4885
        %vm5140 = vcmp.lt.s32.totalorder %v4883, %v4885
        %vm5141 = vcmp.lt.s32.totalorder %v4884, %v4885
        %vm5142 = vcmp.eq.s32.totalorder %v4629, %v4885
        %vm5143 = vcmp.eq.s32.totalorder %v4630, %v4885
        %vm5144 = vcmp.eq.s32.totalorder %v4631, %v4885
        %vm5145 = vcmp.eq.s32.totalorder %v4632, %v4885
        %vm5146 = vcmp.eq.s32.totalorder %v4633, %v4885
        %vm5147 = vcmp.eq.s32.totalorder %v4634, %v4885
        %vm5148 = vcmp.eq.s32.totalorder %v4635, %v4885
        %vm5149 = vcmp.eq.s32.totalorder %v4636, %v4885
        %vm5150 = vcmp.eq.s32.totalorder %v4637, %v4885
        %vm5151 = vcmp.eq.s32.totalorder %v4638, %v4885
        %vm5152 = vcmp.eq.s32.totalorder %v4639, %v4885
        %vm5153 = vcmp.eq.s32.totalorder %v4640, %v4885
        %vm5154 = vcmp.eq.s32.totalorder %v4641, %v4885
        %vm5155 = vcmp.eq.s32.totalorder %v4642, %v4885
        %vm5156 = vcmp.eq.s32.totalorder %v4643, %v4885
        %vm5157 = vcmp.eq.s32.totalorder %v4644, %v4885
        %vm5158 = vcmp.eq.s32.totalorder %v4645, %v4885
        %vm5159 = vcmp.eq.s32.totalorder %v4646, %v4885
        %vm5160 = vcmp.eq.s32.totalorder %v4647, %v4885
        %vm5161 = vcmp.eq.s32.totalorder %v4648, %v4885
        %vm5162 = vcmp.eq.s32.totalorder %v4649, %v4885
        %vm5163 = vcmp.eq.s32.totalorder %v4650, %v4885
        %vm5164 = vcmp.eq.s32.totalorder %v4651, %v4885
        %vm5165 = vcmp.eq.s32.totalorder %v4652, %v4885
        %vm5166 = vcmp.eq.s32.totalorder %v4653, %v4885
        %vm5167 = vcmp.eq.s32.totalorder %v4654, %v4885
        %vm5168 = vcmp.eq.s32.totalorder %v4655, %v4885
        %vm5169 = vcmp.eq.s32.totalorder %v4656, %v4885
        %vm5170 = vcmp.eq.s32.totalorder %v4657, %v4885
        %vm5171 = vcmp.eq.s32.totalorder %v4658, %v4885
        %vm5172 = vcmp.eq.s32.totalorder %v4659, %v4885
        %vm5173 = vcmp.eq.s32.totalorder %v4660, %v4885
        %vm5174 = vcmp.eq.s32.totalorder %v4661, %v4885
        %vm5175 = vcmp.eq.s32.totalorder %v4662, %v4885
        %vm5176 = vcmp.eq.s32.totalorder %v4663, %v4885
        %vm5177 = vcmp.eq.s32.totalorder %v4664, %v4885
        %vm5178 = vcmp.eq.s32.totalorder %v4665, %v4885
        %vm5179 = vcmp.eq.s32.totalorder %v4666, %v4885
        %vm5180 = vcmp.eq.s32.totalorder %v4667, %v4885
        %vm5181 = vcmp.eq.s32.totalorder %v4668, %v4885
        %vm5182 = vcmp.eq.s32.totalorder %v4669, %v4885
        %vm5183 = vcmp.eq.s32.totalorder %v4670, %v4885
        %vm5184 = vcmp.eq.s32.totalorder %v4671, %v4885
        %vm5185 = vcmp.eq.s32.totalorder %v4672, %v4885
        %vm5186 = vcmp.eq.s32.totalorder %v4673, %v4885
        %vm5187 = vcmp.eq.s32.totalorder %v4674, %v4885
        %vm5188 = vcmp.eq.s32.totalorder %v4675, %v4885
        %vm5189 = vcmp.eq.s32.totalorder %v4676, %v4885
        %vm5190 = vcmp.eq.s32.totalorder %v4677, %v4885
        %vm5191 = vcmp.eq.s32.totalorder %v4678, %v4885
        %vm5192 = vcmp.eq.s32.totalorder %v4679, %v4885
        %vm5193 = vcmp.eq.s32.totalorder %v4680, %v4885
        %vm5194 = vcmp.eq.s32.totalorder %v4681, %v4885
        %vm5195 = vcmp.eq.s32.totalorder %v4682, %v4885
        %vm5196 = vcmp.eq.s32.totalorder %v4683, %v4885
        %vm5197 = vcmp.eq.s32.totalorder %v4684, %v4885
        %vm5198 = vcmp.eq.s32.totalorder %v4685, %v4885
        %vm5199 = vcmp.eq.s32.totalorder %v4686, %v4885
        %vm5200 = vcmp.eq.s32.totalorder %v4687, %v4885
        %vm5201 = vcmp.eq.s32.totalorder %v4688, %v4885
        %vm5202 = vcmp.eq.s32.totalorder %v4689, %v4885
        %vm5203 = vcmp.eq.s32.totalorder %v4690, %v4885
        %vm5204 = vcmp.eq.s32.totalorder %v4691, %v4885
        %vm5205 = vcmp.eq.s32.totalorder %v4692, %v4885
        %vm5206 = vcmp.eq.s32.totalorder %v4693, %v4885
        %vm5207 = vcmp.eq.s32.totalorder %v4694, %v4885
        %vm5208 = vcmp.eq.s32.totalorder %v4695, %v4885
        %vm5209 = vcmp.eq.s32.totalorder %v4696, %v4885
        %vm5210 = vcmp.eq.s32.totalorder %v4697, %v4885
        %vm5211 = vcmp.eq.s32.totalorder %v4698, %v4885
        %vm5212 = vcmp.eq.s32.totalorder %v4699, %v4885
        %vm5213 = vcmp.eq.s32.totalorder %v4700, %v4885
        %vm5214 = vcmp.eq.s32.totalorder %v4701, %v4885
        %vm5215 = vcmp.eq.s32.totalorder %v4702, %v4885
        %vm5216 = vcmp.eq.s32.totalorder %v4703, %v4885
        %vm5217 = vcmp.eq.s32.totalorder %v4704, %v4885
        %vm5218 = vcmp.eq.s32.totalorder %v4705, %v4885
        %vm5219 = vcmp.eq.s32.totalorder %v4706, %v4885
        %vm5220 = vcmp.eq.s32.totalorder %v4707, %v4885
        %vm5221 = vcmp.eq.s32.totalorder %v4708, %v4885
        %vm5222 = vcmp.eq.s32.totalorder %v4709, %v4885
        %vm5223 = vcmp.eq.s32.totalorder %v4710, %v4885
        %vm5224 = vcmp.eq.s32.totalorder %v4711, %v4885
        %vm5225 = vcmp.eq.s32.totalorder %v4712, %v4885
        %vm5226 = vcmp.eq.s32.totalorder %v4713, %v4885
        %vm5227 = vcmp.eq.s32.totalorder %v4714, %v4885
        %vm5228 = vcmp.eq.s32.totalorder %v4715, %v4885
        %vm5229 = vcmp.eq.s32.totalorder %v4716, %v4885
        %vm5230 = vcmp.eq.s32.totalorder %v4717, %v4885
        %vm5231 = vcmp.eq.s32.totalorder %v4718, %v4885
        %vm5232 = vcmp.eq.s32.totalorder %v4719, %v4885
        %vm5233 = vcmp.eq.s32.totalorder %v4720, %v4885
        %vm5234 = vcmp.eq.s32.totalorder %v4721, %v4885
        %vm5235 = vcmp.eq.s32.totalorder %v4722, %v4885
        %vm5236 = vcmp.eq.s32.totalorder %v4723, %v4885
        %vm5237 = vcmp.eq.s32.totalorder %v4724, %v4885
        %vm5238 = vcmp.eq.s32.totalorder %v4725, %v4885
        %vm5239 = vcmp.eq.s32.totalorder %v4726, %v4885
        %vm5240 = vcmp.eq.s32.totalorder %v4727, %v4885
        %vm5241 = vcmp.eq.s32.totalorder %v4728, %v4885
        %vm5242 = vcmp.eq.s32.totalorder %v4729, %v4885
        %vm5243 = vcmp.eq.s32.totalorder %v4730, %v4885
        %vm5244 = vcmp.eq.s32.totalorder %v4731, %v4885
        %vm5245 = vcmp.eq.s32.totalorder %v4732, %v4885
        %vm5246 = vcmp.eq.s32.totalorder %v4733, %v4885
        %vm5247 = vcmp.eq.s32.totalorder %v4734, %v4885
        %vm5248 = vcmp.eq.s32.totalorder %v4735, %v4885
        %vm5249 = vcmp.eq.s32.totalorder %v4736, %v4885
        %vm5250 = vcmp.eq.s32.totalorder %v4737, %v4885
        %vm5251 = vcmp.eq.s32.totalorder %v4738, %v4885
        %vm5252 = vcmp.eq.s32.totalorder %v4739, %v4885
        %vm5253 = vcmp.eq.s32.totalorder %v4740, %v4885
        %vm5254 = vcmp.eq.s32.totalorder %v4741, %v4885
        %vm5255 = vcmp.eq.s32.totalorder %v4742, %v4885
        %vm5256 = vcmp.eq.s32.totalorder %v4743, %v4885
        %vm5257 = vcmp.eq.s32.totalorder %v4744, %v4885
        %vm5258 = vcmp.eq.s32.totalorder %v4745, %v4885
        %vm5259 = vcmp.eq.s32.totalorder %v4746, %v4885
        %vm5260 = vcmp.eq.s32.totalorder %v4747, %v4885
        %vm5261 = vcmp.eq.s32.totalorder %v4748, %v4885
        %vm5262 = vcmp.eq.s32.totalorder %v4749, %v4885
        %vm5263 = vcmp.eq.s32.totalorder %v4750, %v4885
        %vm5264 = vcmp.eq.s32.totalorder %v4751, %v4885
        %vm5265 = vcmp.eq.s32.totalorder %v4752, %v4885
        %vm5266 = vcmp.eq.s32.totalorder %v4753, %v4885
        %vm5267 = vcmp.eq.s32.totalorder %v4754, %v4885
        %vm5268 = vcmp.eq.s32.totalorder %v4755, %v4885
        %vm5269 = vcmp.eq.s32.totalorder %v4756, %v4885
        %vm5270 = vcmp.eq.s32.totalorder %v4757, %v4885
        %vm5271 = vcmp.eq.s32.totalorder %v4758, %v4885
        %vm5272 = vcmp.eq.s32.totalorder %v4759, %v4885
        %vm5273 = vcmp.eq.s32.totalorder %v4760, %v4885
        %vm5274 = vcmp.eq.s32.totalorder %v4761, %v4885
        %vm5275 = vcmp.eq.s32.totalorder %v4762, %v4885
        %vm5276 = vcmp.eq.s32.totalorder %v4763, %v4885
        %vm5277 = vcmp.eq.s32.totalorder %v4764, %v4885
        %vm5278 = vcmp.eq.s32.totalorder %v4765, %v4885
        %vm5279 = vcmp.eq.s32.totalorder %v4766, %v4885
        %vm5280 = vcmp.eq.s32.totalorder %v4767, %v4885
        %vm5281 = vcmp.eq.s32.totalorder %v4768, %v4885
        %vm5282 = vcmp.eq.s32.totalorder %v4769, %v4885
        %vm5283 = vcmp.eq.s32.totalorder %v4770, %v4885
        %vm5284 = vcmp.eq.s32.totalorder %v4771, %v4885
        %vm5285 = vcmp.eq.s32.totalorder %v4772, %v4885
        %vm5286 = vcmp.eq.s32.totalorder %v4773, %v4885
        %vm5287 = vcmp.eq.s32.totalorder %v4774, %v4885
        %vm5288 = vcmp.eq.s32.totalorder %v4775, %v4885
        %vm5289 = vcmp.eq.s32.totalorder %v4776, %v4885
        %vm5290 = vcmp.eq.s32.totalorder %v4777, %v4885
        %vm5291 = vcmp.eq.s32.totalorder %v4778, %v4885
        %vm5292 = vcmp.eq.s32.totalorder %v4779, %v4885
        %vm5293 = vcmp.eq.s32.totalorder %v4780, %v4885
        %vm5294 = vcmp.eq.s32.totalorder %v4781, %v4885
        %vm5295 = vcmp.eq.s32.totalorder %v4782, %v4885
        %vm5296 = vcmp.eq.s32.totalorder %v4783, %v4885
        %vm5297 = vcmp.eq.s32.totalorder %v4784, %v4885
        %vm5298 = vcmp.eq.s32.totalorder %v4785, %v4885
        %vm5299 = vcmp.eq.s32.totalorder %v4786, %v4885
        %vm5300 = vcmp.eq.s32.totalorder %v4787, %v4885
        %vm5301 = vcmp.eq.s32.totalorder %v4788, %v4885
        %vm5302 = vcmp.eq.s32.totalorder %v4789, %v4885
        %vm5303 = vcmp.eq.s32.totalorder %v4790, %v4885
        %vm5304 = vcmp.eq.s32.totalorder %v4791, %v4885
        %vm5305 = vcmp.eq.s32.totalorder %v4792, %v4885
        %vm5306 = vcmp.eq.s32.totalorder %v4793, %v4885
        %vm5307 = vcmp.eq.s32.totalorder %v4794, %v4885
        %vm5308 = vcmp.eq.s32.totalorder %v4795, %v4885
        %vm5309 = vcmp.eq.s32.totalorder %v4796, %v4885
        %vm5310 = vcmp.eq.s32.totalorder %v4797, %v4885
        %vm5311 = vcmp.eq.s32.totalorder %v4798, %v4885
        %vm5312 = vcmp.eq.s32.totalorder %v4799, %v4885
        %vm5313 = vcmp.eq.s32.totalorder %v4800, %v4885
        %vm5314 = vcmp.eq.s32.totalorder %v4801, %v4885
        %vm5315 = vcmp.eq.s32.totalorder %v4802, %v4885
        %vm5316 = vcmp.eq.s32.totalorder %v4803, %v4885
        %vm5317 = vcmp.eq.s32.totalorder %v4804, %v4885
        %vm5318 = vcmp.eq.s32.totalorder %v4805, %v4885
        %vm5319 = vcmp.eq.s32.totalorder %v4806, %v4885
        %vm5320 = vcmp.eq.s32.totalorder %v4807, %v4885
        %vm5321 = vcmp.eq.s32.totalorder %v4808, %v4885
        %vm5322 = vcmp.eq.s32.totalorder %v4809, %v4885
        %vm5323 = vcmp.eq.s32.totalorder %v4810, %v4885
        %vm5324 = vcmp.eq.s32.totalorder %v4811, %v4885
        %vm5325 = vcmp.eq.s32.totalorder %v4812, %v4885
        %vm5326 = vcmp.eq.s32.totalorder %v4813, %v4885
        %vm5327 = vcmp.eq.s32.totalorder %v4814, %v4885
        %vm5328 = vcmp.eq.s32.totalorder %v4815, %v4885
        %vm5329 = vcmp.eq.s32.totalorder %v4816, %v4885
        %vm5330 = vcmp.eq.s32.totalorder %v4817, %v4885
        %vm5331 = vcmp.eq.s32.totalorder %v4818, %v4885
        %vm5332 = vcmp.eq.s32.totalorder %v4819, %v4885
        %vm5333 = vcmp.eq.s32.totalorder %v4820, %v4885
        %vm5334 = vcmp.eq.s32.totalorder %v4821, %v4885
        %vm5335 = vcmp.eq.s32.totalorder %v4822, %v4885
        %vm5336 = vcmp.eq.s32.totalorder %v4823, %v4885
        %vm5337 = vcmp.eq.s32.totalorder %v4824, %v4885
        %vm5338 = vcmp.eq.s32.totalorder %v4825, %v4885
        %vm5339 = vcmp.eq.s32.totalorder %v4826, %v4885
        %vm5340 = vcmp.eq.s32.totalorder %v4827, %v4885
        %vm5341 = vcmp.eq.s32.totalorder %v4828, %v4885
        %vm5342 = vcmp.eq.s32.totalorder %v4829, %v4885
        %vm5343 = vcmp.eq.s32.totalorder %v4830, %v4885
        %vm5344 = vcmp.eq.s32.totalorder %v4831, %v4885
        %vm5345 = vcmp.eq.s32.totalorder %v4832, %v4885
        %vm5346 = vcmp.eq.s32.totalorder %v4833, %v4885
        %vm5347 = vcmp.eq.s32.totalorder %v4834, %v4885
        %vm5348 = vcmp.eq.s32.totalorder %v4835, %v4885
        %vm5349 = vcmp.eq.s32.totalorder %v4836, %v4885
        %vm5350 = vcmp.eq.s32.totalorder %v4837, %v4885
        %vm5351 = vcmp.eq.s32.totalorder %v4838, %v4885
        %vm5352 = vcmp.eq.s32.totalorder %v4839, %v4885
        %vm5353 = vcmp.eq.s32.totalorder %v4840, %v4885
        %vm5354 = vcmp.eq.s32.totalorder %v4841, %v4885
        %vm5355 = vcmp.eq.s32.totalorder %v4842, %v4885
        %vm5356 = vcmp.eq.s32.totalorder %v4843, %v4885
        %vm5357 = vcmp.eq.s32.totalorder %v4844, %v4885
        %vm5358 = vcmp.eq.s32.totalorder %v4845, %v4885
        %vm5359 = vcmp.eq.s32.totalorder %v4846, %v4885
        %vm5360 = vcmp.eq.s32.totalorder %v4847, %v4885
        %vm5361 = vcmp.eq.s32.totalorder %v4848, %v4885
        %vm5362 = vcmp.eq.s32.totalorder %v4849, %v4885
        %vm5363 = vcmp.eq.s32.totalorder %v4850, %v4885
        %vm5364 = vcmp.eq.s32.totalorder %v4851, %v4885
        %vm5365 = vcmp.eq.s32.totalorder %v4852, %v4885
        %vm5366 = vcmp.eq.s32.totalorder %v4853, %v4885
        %vm5367 = vcmp.eq.s32.totalorder %v4854, %v4885
        %vm5368 = vcmp.eq.s32.totalorder %v4855, %v4885
        %vm5369 = vcmp.eq.s32.totalorder %v4856, %v4885
        %vm5370 = vcmp.eq.s32.totalorder %v4857, %v4885
        %vm5371 = vcmp.eq.s32.totalorder %v4858, %v4885
        %vm5372 = vcmp.eq.s32.totalorder %v4859, %v4885
        %vm5373 = vcmp.eq.s32.totalorder %v4860, %v4885
        %vm5374 = vcmp.eq.s32.totalorder %v4861, %v4885
        %vm5375 = vcmp.eq.s32.totalorder %v4862, %v4885
        %vm5376 = vcmp.eq.s32.totalorder %v4863, %v4885
        %vm5377 = vcmp.eq.s32.totalorder %v4864, %v4885
        %vm5378 = vcmp.eq.s32.totalorder %v4865, %v4885
        %vm5379 = vcmp.eq.s32.totalorder %v4866, %v4885
        %vm5380 = vcmp.eq.s32.totalorder %v4867, %v4885
        %vm5381 = vcmp.eq.s32.totalorder %v4868, %v4885
        %vm5382 = vcmp.eq.s32.totalorder %v4869, %v4885
        %vm5383 = vcmp.eq.s32.totalorder %v4870, %v4885
        %vm5384 = vcmp.eq.s32.totalorder %v4871, %v4885
        %vm5385 = vcmp.eq.s32.totalorder %v4872, %v4885
        %vm5386 = vcmp.eq.s32.totalorder %v4873, %v4885
        %vm5387 = vcmp.eq.s32.totalorder %v4874, %v4885
        %vm5388 = vcmp.eq.s32.totalorder %v4875, %v4885
        %vm5389 = vcmp.eq.s32.totalorder %v4876, %v4885
        %vm5390 = vcmp.eq.s32.totalorder %v4877, %v4885
        %vm5391 = vcmp.eq.s32.totalorder %v4878, %v4885
        %vm5392 = vcmp.eq.s32.totalorder %v4879, %v4885
        %vm5393 = vcmp.eq.s32.totalorder %v4880, %v4885
        %vm5394 = vcmp.eq.s32.totalorder %v4881, %v4885
        %vm5395 = vcmp.eq.s32.totalorder %v4882, %v4885
        %vm5396 = vcmp.eq.s32.totalorder %v4883, %v4885
        %vm5397 = vcmp.eq.s32.totalorder %v4884, %v4885
        %v5398 = vstv %s4366
        %vm5399 = vcmp.lt.s32.totalorder %v4625, %v5398
        %vm5400 = vmand %vm5142, %vm5399
        %vm5401 = vmand %vm5143, %vm5399
        %vm5402 = vmand %vm5144, %vm5399
        %vm5403 = vmand %vm5145, %vm5399
        %vm5404 = vmand %vm5146, %vm5399
        %vm5405 = vmand %vm5147, %vm5399
        %vm5406 = vmand %vm5148, %vm5399
        %vm5407 = vmand %vm5149, %vm5399
        %vm5408 = vmand %vm5150, %vm5399
        %vm5409 = vmand %vm5151, %vm5399
        %vm5410 = vmand %vm5152, %vm5399
        %vm5411 = vmand %vm5153, %vm5399
        %vm5412 = vmand %vm5154, %vm5399
        %vm5413 = vmand %vm5155, %vm5399
        %vm5414 = vmand %vm5156, %vm5399
        %vm5415 = vmand %vm5157, %vm5399
        %vm5416 = vmand %vm5158, %vm5399
        %vm5417 = vmand %vm5159, %vm5399
        %vm5418 = vmand %vm5160, %vm5399
        %vm5419 = vmand %vm5161, %vm5399
        %vm5420 = vmand %vm5162, %vm5399
        %vm5421 = vmand %vm5163, %vm5399
        %vm5422 = vmand %vm5164, %vm5399
        %vm5423 = vmand %vm5165, %vm5399
        %vm5424 = vmand %vm5166, %vm5399
        %vm5425 = vmand %vm5167, %vm5399
        %vm5426 = vmand %vm5168, %vm5399
        %vm5427 = vmand %vm5169, %vm5399
        %vm5428 = vmand %vm5170, %vm5399
        %vm5429 = vmand %vm5171, %vm5399
        %vm5430 = vmand %vm5172, %vm5399
        %vm5431 = vmand %vm5173, %vm5399
        %vm5432 = vmand %vm5174, %vm5399
        %vm5433 = vmand %vm5175, %vm5399
        %vm5434 = vmand %vm5176, %vm5399
        %vm5435 = vmand %vm5177, %vm5399
        %vm5436 = vmand %vm5178, %vm5399
        %vm5437 = vmand %vm5179, %vm5399
        %vm5438 = vmand %vm5180, %vm5399
        %vm5439 = vmand %vm5181, %vm5399
        %vm5440 = vmand %vm5182, %vm5399
        %vm5441 = vmand %vm5183, %vm5399
        %vm5442 = vmand %vm5184, %vm5399
        %vm5443 = vmand %vm5185, %vm5399
        %vm5444 = vmand %vm5186, %vm5399
        %vm5445 = vmand %vm5187, %vm5399
        %vm5446 = vmand %vm5188, %vm5399
        %vm5447 = vmand %vm5189, %vm5399
        %vm5448 = vmand %vm5190, %vm5399
        %vm5449 = vmand %vm5191, %vm5399
        %vm5450 = vmand %vm5192, %vm5399
        %vm5451 = vmand %vm5193, %vm5399
        %vm5452 = vmand %vm5194, %vm5399
        %vm5453 = vmand %vm5195, %vm5399
        %vm5454 = vmand %vm5196, %vm5399
        %vm5455 = vmand %vm5197, %vm5399
        %vm5456 = vmand %vm5198, %vm5399
        %vm5457 = vmand %vm5199, %vm5399
        %vm5458 = vmand %vm5200, %vm5399
        %vm5459 = vmand %vm5201, %vm5399
        %vm5460 = vmand %vm5202, %vm5399
        %vm5461 = vmand %vm5203, %vm5399
        %vm5462 = vmand %vm5204, %vm5399
        %vm5463 = vmand %vm5205, %vm5399
        %vm5464 = vmand %vm5206, %vm5399
        %vm5465 = vmand %vm5207, %vm5399
        %vm5466 = vmand %vm5208, %vm5399
        %vm5467 = vmand %vm5209, %vm5399
        %vm5468 = vmand %vm5210, %vm5399
        %vm5469 = vmand %vm5211, %vm5399
        %vm5470 = vmand %vm5212, %vm5399
        %vm5471 = vmand %vm5213, %vm5399
        %vm5472 = vmand %vm5214, %vm5399
        %vm5473 = vmand %vm5215, %vm5399
        %vm5474 = vmand %vm5216, %vm5399
        %vm5475 = vmand %vm5217, %vm5399
        %vm5476 = vmand %vm5218, %vm5399
        %vm5477 = vmand %vm5219, %vm5399
        %vm5478 = vmand %vm5220, %vm5399
        %vm5479 = vmand %vm5221, %vm5399
        %vm5480 = vmand %vm5222, %vm5399
        %vm5481 = vmand %vm5223, %vm5399
        %vm5482 = vmand %vm5224, %vm5399
        %vm5483 = vmand %vm5225, %vm5399
        %vm5484 = vmand %vm5226, %vm5399
        %vm5485 = vmand %vm5227, %vm5399
        %vm5486 = vmand %vm5228, %vm5399
        %vm5487 = vmand %vm5229, %vm5399
        %vm5488 = vmand %vm5230, %vm5399
        %vm5489 = vmand %vm5231, %vm5399
        %vm5490 = vmand %vm5232, %vm5399
        %vm5491 = vmand %vm5233, %vm5399
        %vm5492 = vmand %vm5234, %vm5399
        %vm5493 = vmand %vm5235, %vm5399
        %vm5494 = vmand %vm5236, %vm5399
        %vm5495 = vmand %vm5237, %vm5399
        %vm5496 = vmand %vm5238, %vm5399
        %vm5497 = vmand %vm5239, %vm5399
        %vm5498 = vmand %vm5240, %vm5399
        %vm5499 = vmand %vm5241, %vm5399
        %vm5500 = vmand %vm5242, %vm5399
        %vm5501 = vmand %vm5243, %vm5399
        %vm5502 = vmand %vm5244, %vm5399
        %vm5503 = vmand %vm5245, %vm5399
        %vm5504 = vmand %vm5246, %vm5399
        %vm5505 = vmand %vm5247, %vm5399
        %vm5506 = vmand %vm5248, %vm5399
        %vm5507 = vmand %vm5249, %vm5399
        %vm5508 = vmand %vm5250, %vm5399
        %vm5509 = vmand %vm5251, %vm5399
        %vm5510 = vmand %vm5252, %vm5399
        %vm5511 = vmand %vm5253, %vm5399
        %vm5512 = vmand %vm5254, %vm5399
        %vm5513 = vmand %vm5255, %vm5399
        %vm5514 = vmand %vm5256, %vm5399
        %vm5515 = vmand %vm5257, %vm5399
        %vm5516 = vmand %vm5258, %vm5399
        %vm5517 = vmand %vm5259, %vm5399
        %vm5518 = vmand %vm5260, %vm5399
        %vm5519 = vmand %vm5261, %vm5399
        %vm5520 = vmand %vm5262, %vm5399
        %vm5521 = vmand %vm5263, %vm5399
        %vm5522 = vmand %vm5264, %vm5399
        %vm5523 = vmand %vm5265, %vm5399
        %vm5524 = vmand %vm5266, %vm5399
        %vm5525 = vmand %vm5267, %vm5399
        %vm5526 = vmand %vm5268, %vm5399
        %vm5527 = vmand %vm5269, %vm5399
        %vm5528 = vmand %vm5270, %vm5399
        %vm5529 = vmand %vm5271, %vm5399
        %vm5530 = vmand %vm5272, %vm5399
        %vm5531 = vmand %vm5273, %vm5399
        %vm5532 = vmand %vm5274, %vm5399
        %vm5533 = vmand %vm5275, %vm5399
        %vm5534 = vmand %vm5276, %vm5399
        %vm5535 = vmand %vm5277, %vm5399
        %vm5536 = vmand %vm5278, %vm5399
        %vm5537 = vmand %vm5279, %vm5399
        %vm5538 = vmand %vm5280, %vm5399
        %vm5539 = vmand %vm5281, %vm5399
        %vm5540 = vmand %vm5282, %vm5399
        %vm5541 = vmand %vm5283, %vm5399
        %vm5542 = vmand %vm5284, %vm5399
        %vm5543 = vmand %vm5285, %vm5399
        %vm5544 = vmand %vm5286, %vm5399
        %vm5545 = vmand %vm5287, %vm5399
        %vm5546 = vmand %vm5288, %vm5399
        %vm5547 = vmand %vm5289, %vm5399
        %vm5548 = vmand %vm5290, %vm5399
        %vm5549 = vmand %vm5291, %vm5399
        %vm5550 = vmand %vm5292, %vm5399
        %vm5551 = vmand %vm5293, %vm5399
        %vm5552 = vmand %vm5294, %vm5399
        %vm5553 = vmand %vm5295, %vm5399
        %vm5554 = vmand %vm5296, %vm5399
        %vm5555 = vmand %vm5297, %vm5399
        %vm5556 = vmand %vm5298, %vm5399
        %vm5557 = vmand %vm5299, %vm5399
        %vm5558 = vmand %vm5300, %vm5399
        %vm5559 = vmand %vm5301, %vm5399
        %vm5560 = vmand %vm5302, %vm5399
        %vm5561 = vmand %vm5303, %vm5399
        %vm5562 = vmand %vm5304, %vm5399
        %vm5563 = vmand %vm5305, %vm5399
        %vm5564 = vmand %vm5306, %vm5399
        %vm5565 = vmand %vm5307, %vm5399
        %vm5566 = vmand %vm5308, %vm5399
        %vm5567 = vmand %vm5309, %vm5399
        %vm5568 = vmand %vm5310, %vm5399
        %vm5569 = vmand %vm5311, %vm5399
        %vm5570 = vmand %vm5312, %vm5399
        %vm5571 = vmand %vm5313, %vm5399
        %vm5572 = vmand %vm5314, %vm5399
        %vm5573 = vmand %vm5315, %vm5399
        %vm5574 = vmand %vm5316, %vm5399
        %vm5575 = vmand %vm5317, %vm5399
        %vm5576 = vmand %vm5318, %vm5399
        %vm5577 = vmand %vm5319, %vm5399
        %vm5578 = vmand %vm5320, %vm5399
        %vm5579 = vmand %vm5321, %vm5399
        %vm5580 = vmand %vm5322, %vm5399
        %vm5581 = vmand %vm5323, %vm5399
        %vm5582 = vmand %vm5324, %vm5399
        %vm5583 = vmand %vm5325, %vm5399
        %vm5584 = vmand %vm5326, %vm5399
        %vm5585 = vmand %vm5327, %vm5399
        %vm5586 = vmand %vm5328, %vm5399
        %vm5587 = vmand %vm5329, %vm5399
        %vm5588 = vmand %vm5330, %vm5399
        %vm5589 = vmand %vm5331, %vm5399
        %vm5590 = vmand %vm5332, %vm5399
        %vm5591 = vmand %vm5333, %vm5399
        %vm5592 = vmand %vm5334, %vm5399
        %vm5593 = vmand %vm5335, %vm5399
        %vm5594 = vmand %vm5336, %vm5399
        %vm5595 = vmand %vm5337, %vm5399
        %vm5596 = vmand %vm5338, %vm5399
        %vm5597 = vmand %vm5339, %vm5399
        %vm5598 = vmand %vm5340, %vm5399
        %vm5599 = vmand %vm5341, %vm5399
        %vm5600 = vmand %vm5342, %vm5399
        %vm5601 = vmand %vm5343, %vm5399
        %vm5602 = vmand %vm5344, %vm5399
        %vm5603 = vmand %vm5345, %vm5399
        %vm5604 = vmand %vm5346, %vm5399
        %vm5605 = vmand %vm5347, %vm5399
        %vm5606 = vmand %vm5348, %vm5399
        %vm5607 = vmand %vm5349, %vm5399
        %vm5608 = vmand %vm5350, %vm5399
        %vm5609 = vmand %vm5351, %vm5399
        %vm5610 = vmand %vm5352, %vm5399
        %vm5611 = vmand %vm5353, %vm5399
        %vm5612 = vmand %vm5354, %vm5399
        %vm5613 = vmand %vm5355, %vm5399
        %vm5614 = vmand %vm5356, %vm5399
        %vm5615 = vmand %vm5357, %vm5399
        %vm5616 = vmand %vm5358, %vm5399
        %vm5617 = vmand %vm5359, %vm5399
        %vm5618 = vmand %vm5360, %vm5399
        %vm5619 = vmand %vm5361, %vm5399
        %vm5620 = vmand %vm5362, %vm5399
        %vm5621 = vmand %vm5363, %vm5399
        %vm5622 = vmand %vm5364, %vm5399
        %vm5623 = vmand %vm5365, %vm5399
        %vm5624 = vmand %vm5366, %vm5399
        %vm5625 = vmand %vm5367, %vm5399
        %vm5626 = vmand %vm5368, %vm5399
        %vm5627 = vmand %vm5369, %vm5399
        %vm5628 = vmand %vm5370, %vm5399
        %vm5629 = vmand %vm5371, %vm5399
        %vm5630 = vmand %vm5372, %vm5399
        %vm5631 = vmand %vm5373, %vm5399
        %vm5632 = vmand %vm5374, %vm5399
        %vm5633 = vmand %vm5375, %vm5399
        %vm5634 = vmand %vm5376, %vm5399
        %vm5635 = vmand %vm5377, %vm5399
        %vm5636 = vmand %vm5378, %vm5399
        %vm5637 = vmand %vm5379, %vm5399
        %vm5638 = vmand %vm5380, %vm5399
        %vm5639 = vmand %vm5381, %vm5399
        %vm5640 = vmand %vm5382, %vm5399
        %vm5641 = vmand %vm5383, %vm5399
        %vm5642 = vmand %vm5384, %vm5399
        %vm5643 = vmand %vm5385, %vm5399
        %vm5644 = vmand %vm5386, %vm5399
        %vm5645 = vmand %vm5387, %vm5399
        %vm5646 = vmand %vm5388, %vm5399
        %vm5647 = vmand %vm5389, %vm5399
        %vm5648 = vmand %vm5390, %vm5399
        %vm5649 = vmand %vm5391, %vm5399
        %vm5650 = vmand %vm5392, %vm5399
        %vm5651 = vmand %vm5393, %vm5399
        %vm5652 = vmand %vm5394, %vm5399
        %vm5653 = vmand %vm5395, %vm5399
        %vm5654 = vmand %vm5396, %vm5399
        %vm5655 = vmand %vm5397, %vm5399
        %vm5656 = vmor %vm4886, %vm5400
        %vm5657 = vmor %vm4887, %vm5401
        %vm5658 = vmor %vm4888, %vm5402
        %vm5659 = vmor %vm4889, %vm5403
        %vm5660 = vmor %vm4890, %vm5404
        %vm5661 = vmor %vm4891, %vm5405
        %vm5662 = vmor %vm4892, %vm5406
        %vm5663 = vmor %vm4893, %vm5407
        %vm5664 = vmor %vm4894, %vm5408
        %vm5665 = vmor %vm4895, %vm5409
        %vm5666 = vmor %vm4896, %vm5410
        %vm5667 = vmor %vm4897, %vm5411
        %vm5668 = vmor %vm4898, %vm5412
        %vm5669 = vmor %vm4899, %vm5413
        %vm5670 = vmor %vm4900, %vm5414
        %vm5671 = vmor %vm4901, %vm5415
        %vm5672 = vmor %vm4902, %vm5416
        %vm5673 = vmor %vm4903, %vm5417
        %vm5674 = vmor %vm4904, %vm5418
        %vm5675 = vmor %vm4905, %vm5419
        %vm5676 = vmor %vm4906, %vm5420
        %vm5677 = vmor %vm4907, %vm5421
        %vm5678 = vmor %vm4908, %vm5422
        %vm5679 = vmor %vm4909, %vm5423
        %vm5680 = vmor %vm4910, %vm5424
        %vm5681 = vmor %vm4911, %vm5425
        %vm5682 = vmor %vm4912, %vm5426
        %vm5683 = vmor %vm4913, %vm5427
        %vm5684 = vmor %vm4914, %vm5428
        %vm5685 = vmor %vm4915, %vm5429
        %vm5686 = vmor %vm4916, %vm5430
        %vm5687 = vmor %vm4917, %vm5431
        %vm5688 = vmor %vm4918, %vm5432
        %vm5689 = vmor %vm4919, %vm5433
        %vm5690 = vmor %vm4920, %vm5434
        %vm5691 = vmor %vm4921, %vm5435
        %vm5692 = vmor %vm4922, %vm5436
        %vm5693 = vmor %vm4923, %vm5437
        %vm5694 = vmor %vm4924, %vm5438
        %vm5695 = vmor %vm4925, %vm5439
        %vm5696 = vmor %vm4926, %vm5440
        %vm5697 = vmor %vm4927, %vm5441
        %vm5698 = vmor %vm4928, %vm5442
        %vm5699 = vmor %vm4929, %vm5443
        %vm5700 = vmor %vm4930, %vm5444
        %vm5701 = vmor %vm4931, %vm5445
        %vm5702 = vmor %vm4932, %vm5446
        %vm5703 = vmor %vm4933, %vm5447
        %vm5704 = vmor %vm4934, %vm5448
        %vm5705 = vmor %vm4935, %vm5449
        %vm5706 = vmor %vm4936, %vm5450
        %vm5707 = vmor %vm4937, %vm5451
        %vm5708 = vmor %vm4938, %vm5452
        %vm5709 = vmor %vm4939, %vm5453
        %vm5710 = vmor %vm4940, %vm5454
        %vm5711 = vmor %vm4941, %vm5455
        %vm5712 = vmor %vm4942, %vm5456
        %vm5713 = vmor %vm4943, %vm5457
        %vm5714 = vmor %vm4944, %vm5458
        %vm5715 = vmor %vm4945, %vm5459
        %vm5716 = vmor %vm4946, %vm5460
        %vm5717 = vmor %vm4947, %vm5461
        %vm5718 = vmor %vm4948, %vm5462
        %vm5719 = vmor %vm4949, %vm5463
        %vm5720 = vmor %vm4950, %vm5464
        %vm5721 = vmor %vm4951, %vm5465
        %vm5722 = vmor %vm4952, %vm5466
        %vm5723 = vmor %vm4953, %vm5467
        %vm5724 = vmor %vm4954, %vm5468
        %vm5725 = vmor %vm4955, %vm5469
        %vm5726 = vmor %vm4956, %vm5470
        %vm5727 = vmor %vm4957, %vm5471
        %vm5728 = vmor %vm4958, %vm5472
        %vm5729 = vmor %vm4959, %vm5473
        %vm5730 = vmor %vm4960, %vm5474
        %vm5731 = vmor %vm4961, %vm5475
        %vm5732 = vmor %vm4962, %vm5476
        %vm5733 = vmor %vm4963, %vm5477
        %vm5734 = vmor %vm4964, %vm5478
        %vm5735 = vmor %vm4965, %vm5479
        %vm5736 = vmor %vm4966, %vm5480
        %vm5737 = vmor %vm4967, %vm5481
        %vm5738 = vmor %vm4968, %vm5482
        %vm5739 = vmor %vm4969, %vm5483
        %vm5740 = vmor %vm4970, %vm5484
        %vm5741 = vmor %vm4971, %vm5485
        %vm5742 = vmor %vm4972, %vm5486
        %vm5743 = vmor %vm4973, %vm5487
        %vm5744 = vmor %vm4974, %vm5488
        %vm5745 = vmor %vm4975, %vm5489
        %vm5746 = vmor %vm4976, %vm5490
        %vm5747 = vmor %vm4977, %vm5491
        %vm5748 = vmor %vm4978, %vm5492
        %vm5749 = vmor %vm4979, %vm5493
        %vm5750 = vmor %vm4980, %vm5494
        %vm5751 = vmor %vm4981, %vm5495
        %vm5752 = vmor %vm4982, %vm5496
        %vm5753 = vmor %vm4983, %vm5497
        %vm5754 = vmor %vm4984, %vm5498
        %vm5755 = vmor %vm4985, %vm5499
        %vm5756 = vmor %vm4986, %vm5500
        %vm5757 = vmor %vm4987, %vm5501
        %vm5758 = vmor %vm4988, %vm5502
        %vm5759 = vmor %vm4989, %vm5503
        %vm5760 = vmor %vm4990, %vm5504
        %vm5761 = vmor %vm4991, %vm5505
        %vm5762 = vmor %vm4992, %vm5506
        %vm5763 = vmor %vm4993, %vm5507
        %vm5764 = vmor %vm4994, %vm5508
        %vm5765 = vmor %vm4995, %vm5509
        %vm5766 = vmor %vm4996, %vm5510
        %vm5767 = vmor %vm4997, %vm5511
        %vm5768 = vmor %vm4998, %vm5512
        %vm5769 = vmor %vm4999, %vm5513
        %vm5770 = vmor %vm5000, %vm5514
        %vm5771 = vmor %vm5001, %vm5515
        %vm5772 = vmor %vm5002, %vm5516
        %vm5773 = vmor %vm5003, %vm5517
        %vm5774 = vmor %vm5004, %vm5518
        %vm5775 = vmor %vm5005, %vm5519
        %vm5776 = vmor %vm5006, %vm5520
        %vm5777 = vmor %vm5007, %vm5521
        %vm5778 = vmor %vm5008, %vm5522
        %vm5779 = vmor %vm5009, %vm5523
        %vm5780 = vmor %vm5010, %vm5524
        %vm5781 = vmor %vm5011, %vm5525
        %vm5782 = vmor %vm5012, %vm5526
        %vm5783 = vmor %vm5013, %vm5527
        %vm5784 = vmor %vm5014, %vm5528
        %vm5785 = vmor %vm5015, %vm5529
        %vm5786 = vmor %vm5016, %vm5530
        %vm5787 = vmor %vm5017, %vm5531
        %vm5788 = vmor %vm5018, %vm5532
        %vm5789 = vmor %vm5019, %vm5533
        %vm5790 = vmor %vm5020, %vm5534
        %vm5791 = vmor %vm5021, %vm5535
        %vm5792 = vmor %vm5022, %vm5536
        %vm5793 = vmor %vm5023, %vm5537
        %vm5794 = vmor %vm5024, %vm5538
        %vm5795 = vmor %vm5025, %vm5539
        %vm5796 = vmor %vm5026, %vm5540
        %vm5797 = vmor %vm5027, %vm5541
        %vm5798 = vmor %vm5028, %vm5542
        %vm5799 = vmor %vm5029, %vm5543
        %vm5800 = vmor %vm5030, %vm5544
        %vm5801 = vmor %vm5031, %vm5545
        %vm5802 = vmor %vm5032, %vm5546
        %vm5803 = vmor %vm5033, %vm5547
        %vm5804 = vmor %vm5034, %vm5548
        %vm5805 = vmor %vm5035, %vm5549
        %vm5806 = vmor %vm5036, %vm5550
        %vm5807 = vmor %vm5037, %vm5551
        %vm5808 = vmor %vm5038, %vm5552
        %vm5809 = vmor %vm5039, %vm5553
        %vm5810 = vmor %vm5040, %vm5554
        %vm5811 = vmor %vm5041, %vm5555
        %vm5812 = vmor %vm5042, %vm5556
        %vm5813 = vmor %vm5043, %vm5557
        %vm5814 = vmor %vm5044, %vm5558
        %vm5815 = vmor %vm5045, %vm5559
        %vm5816 = vmor %vm5046, %vm5560
        %vm5817 = vmor %vm5047, %vm5561
        %vm5818 = vmor %vm5048, %vm5562
        %vm5819 = vmor %vm5049, %vm5563
        %vm5820 = vmor %vm5050, %vm5564
        %vm5821 = vmor %vm5051, %vm5565
        %vm5822 = vmor %vm5052, %vm5566
        %vm5823 = vmor %vm5053, %vm5567
        %vm5824 = vmor %vm5054, %vm5568
        %vm5825 = vmor %vm5055, %vm5569
        %vm5826 = vmor %vm5056, %vm5570
        %vm5827 = vmor %vm5057, %vm5571
        %vm5828 = vmor %vm5058, %vm5572
        %vm5829 = vmor %vm5059, %vm5573
        %vm5830 = vmor %vm5060, %vm5574
        %vm5831 = vmor %vm5061, %vm5575
        %vm5832 = vmor %vm5062, %vm5576
        %vm5833 = vmor %vm5063, %vm5577
        %vm5834 = vmor %vm5064, %vm5578
        %vm5835 = vmor %vm5065, %vm5579
        %vm5836 = vmor %vm5066, %vm5580
        %vm5837 = vmor %vm5067, %vm5581
        %vm5838 = vmor %vm5068, %vm5582
        %vm5839 = vmor %vm5069, %vm5583
        %vm5840 = vmor %vm5070, %vm5584
        %vm5841 = vmor %vm5071, %vm5585
        %vm5842 = vmor %vm5072, %vm5586
        %vm5843 = vmor %vm5073, %vm5587
        %vm5844 = vmor %vm5074, %vm5588
        %vm5845 = vmor %vm5075, %vm5589
        %vm5846 = vmor %vm5076, %vm5590
        %vm5847 = vmor %vm5077, %vm5591
        %vm5848 = vmor %vm5078, %vm5592
        %vm5849 = vmor %vm5079, %vm5593
        %vm5850 = vmor %vm5080, %vm5594
        %vm5851 = vmor %vm5081, %vm5595
        %vm5852 = vmor %vm5082, %vm5596
        %vm5853 = vmor %vm5083, %vm5597
        %vm5854 = vmor %vm5084, %vm5598
        %vm5855 = vmor %vm5085, %vm5599
        %vm5856 = vmor %vm5086, %vm5600
        %vm5857 = vmor %vm5087, %vm5601
        %vm5858 = vmor %vm5088, %vm5602
        %vm5859 = vmor %vm5089, %vm5603
        %vm5860 = vmor %vm5090, %vm5604
        %vm5861 = vmor %vm5091, %vm5605
        %vm5862 = vmor %vm5092, %vm5606
        %vm5863 = vmor %vm5093, %vm5607
        %vm5864 = vmor %vm5094, %vm5608
        %vm5865 = vmor %vm5095, %vm5609
        %vm5866 = vmor %vm5096, %vm5610
        %vm5867 = vmor %vm5097, %vm5611
        %vm5868 = vmor %vm5098, %vm5612
        %vm5869 = vmor %vm5099, %vm5613
        %vm5870 = vmor %vm5100, %vm5614
        %vm5871 = vmor %vm5101, %vm5615
        %vm5872 = vmor %vm5102, %vm5616
        %vm5873 = vmor %vm5103, %vm5617
        %vm5874 = vmor %vm5104, %vm5618
        %vm5875 = vmor %vm5105, %vm5619
        %vm5876 = vmor %vm5106, %vm5620
        %vm5877 = vmor %vm5107, %vm5621
        %vm5878 = vmor %vm5108, %vm5622
        %vm5879 = vmor %vm5109, %vm5623
        %vm5880 = vmor %vm5110, %vm5624
        %vm5881 = vmor %vm5111, %vm5625
        %vm5882 = vmor %vm5112, %vm5626
        %vm5883 = vmor %vm5113, %vm5627
        %vm5884 = vmor %vm5114, %vm5628
        %vm5885 = vmor %vm5115, %vm5629
        %vm5886 = vmor %vm5116, %vm5630
        %vm5887 = vmor %vm5117, %vm5631
        %vm5888 = vmor %vm5118, %vm5632
        %vm5889 = vmor %vm5119, %vm5633
        %vm5890 = vmor %vm5120, %vm5634
        %vm5891 = vmor %vm5121, %vm5635
        %vm5892 = vmor %vm5122, %vm5636
        %vm5893 = vmor %vm5123, %vm5637
        %vm5894 = vmor %vm5124, %vm5638
        %vm5895 = vmor %vm5125, %vm5639
        %vm5896 = vmor %vm5126, %vm5640
        %vm5897 = vmor %vm5127, %vm5641
        %vm5898 = vmor %vm5128, %vm5642
        %vm5899 = vmor %vm5129, %vm5643
        %vm5900 = vmor %vm5130, %vm5644
        %vm5901 = vmor %vm5131, %vm5645
        %vm5902 = vmor %vm5132, %vm5646
        %vm5903 = vmor %vm5133, %vm5647
        %vm5904 = vmor %vm5134, %vm5648
        %vm5905 = vmor %vm5135, %vm5649
        %vm5906 = vmor %vm5136, %vm5650
        %vm5907 = vmor %vm5137, %vm5651
        %vm5908 = vmor %vm5138, %vm5652
        %vm5909 = vmor %vm5139, %vm5653
        %vm5910 = vmor %vm5140, %vm5654
        %vm5911 = vmor %vm5141, %vm5655
        %v5912 = vsel %vm5656, %v4109, 0.0
        %v5913 = vsel %vm5657, %v4110, 0.0
        %v5914 = vsel %vm5658, %v4111, 0.0
        %v5915 = vsel %vm5659, %v4112, 0.0
        %v5916 = vsel %vm5660, %v4113, 0.0
        %v5917 = vsel %vm5661, %v4114, 0.0
        %v5918 = vsel %vm5662, %v4115, 0.0
        %v5919 = vsel %vm5663, %v4116, 0.0
        %v5920 = vsel %vm5664, %v4117, 0.0
        %v5921 = vsel %vm5665, %v4118, 0.0
        %v5922 = vsel %vm5666, %v4119, 0.0
        %v5923 = vsel %vm5667, %v4120, 0.0
        %v5924 = vsel %vm5668, %v4121, 0.0
        %v5925 = vsel %vm5669, %v4122, 0.0
        %v5926 = vsel %vm5670, %v4123, 0.0
        %v5927 = vsel %vm5671, %v4124, 0.0
        %v5928 = vsel %vm5672, %v4125, 0.0
        %v5929 = vsel %vm5673, %v4126, 0.0
        %v5930 = vsel %vm5674, %v4127, 0.0
        %v5931 = vsel %vm5675, %v4128, 0.0
        %v5932 = vsel %vm5676, %v4129, 0.0
        %v5933 = vsel %vm5677, %v4130, 0.0
        %v5934 = vsel %vm5678, %v4131, 0.0
        %v5935 = vsel %vm5679, %v4132, 0.0
        %v5936 = vsel %vm5680, %v4133, 0.0
        %v5937 = vsel %vm5681, %v4134, 0.0
        %v5938 = vsel %vm5682, %v4135, 0.0
        %v5939 = vsel %vm5683, %v4136, 0.0
        %v5940 = vsel %vm5684, %v4137, 0.0
        %v5941 = vsel %vm5685, %v4138, 0.0
        %v5942 = vsel %vm5686, %v4139, 0.0
        %v5943 = vsel %vm5687, %v4140, 0.0
        %v5944 = vsel %vm5688, %v4141, 0.0
        %v5945 = vsel %vm5689, %v4142, 0.0
        %v5946 = vsel %vm5690, %v4143, 0.0
        %v5947 = vsel %vm5691, %v4144, 0.0
        %v5948 = vsel %vm5692, %v4145, 0.0
        %v5949 = vsel %vm5693, %v4146, 0.0
        %v5950 = vsel %vm5694, %v4147, 0.0
        %v5951 = vsel %vm5695, %v4148, 0.0
        %v5952 = vsel %vm5696, %v4149, 0.0
        %v5953 = vsel %vm5697, %v4150, 0.0
        %v5954 = vsel %vm5698, %v4151, 0.0
        %v5955 = vsel %vm5699, %v4152, 0.0
        %v5956 = vsel %vm5700, %v4153, 0.0
        %v5957 = vsel %vm5701, %v4154, 0.0
        %v5958 = vsel %vm5702, %v4155, 0.0
        %v5959 = vsel %vm5703, %v4156, 0.0
        %v5960 = vsel %vm5704, %v4157, 0.0
        %v5961 = vsel %vm5705, %v4158, 0.0
        %v5962 = vsel %vm5706, %v4159, 0.0
        %v5963 = vsel %vm5707, %v4160, 0.0
        %v5964 = vsel %vm5708, %v4161, 0.0
        %v5965 = vsel %vm5709, %v4162, 0.0
        %v5966 = vsel %vm5710, %v4163, 0.0
        %v5967 = vsel %vm5711, %v4164, 0.0
        %v5968 = vsel %vm5712, %v4165, 0.0
        %v5969 = vsel %vm5713, %v4166, 0.0
        %v5970 = vsel %vm5714, %v4167, 0.0
        %v5971 = vsel %vm5715, %v4168, 0.0
        %v5972 = vsel %vm5716, %v4169, 0.0
        %v5973 = vsel %vm5717, %v4170, 0.0
        %v5974 = vsel %vm5718, %v4171, 0.0
        %v5975 = vsel %vm5719, %v4172, 0.0
        %v5976 = vsel %vm5720, %v4173, 0.0
        %v5977 = vsel %vm5721, %v4174, 0.0
        %v5978 = vsel %vm5722, %v4175, 0.0
        %v5979 = vsel %vm5723, %v4176, 0.0
        %v5980 = vsel %vm5724, %v4177, 0.0
        %v5981 = vsel %vm5725, %v4178, 0.0
        %v5982 = vsel %vm5726, %v4179, 0.0
        %v5983 = vsel %vm5727, %v4180, 0.0
        %v5984 = vsel %vm5728, %v4181, 0.0
        %v5985 = vsel %vm5729, %v4182, 0.0
        %v5986 = vsel %vm5730, %v4183, 0.0
        %v5987 = vsel %vm5731, %v4184, 0.0
        %v5988 = vsel %vm5732, %v4185, 0.0
        %v5989 = vsel %vm5733, %v4186, 0.0
        %v5990 = vsel %vm5734, %v4187, 0.0
        %v5991 = vsel %vm5735, %v4188, 0.0
        %v5992 = vsel %vm5736, %v4189, 0.0
        %v5993 = vsel %vm5737, %v4190, 0.0
        %v5994 = vsel %vm5738, %v4191, 0.0
        %v5995 = vsel %vm5739, %v4192, 0.0
        %v5996 = vsel %vm5740, %v4193, 0.0
        %v5997 = vsel %vm5741, %v4194, 0.0
        %v5998 = vsel %vm5742, %v4195, 0.0
        %v5999 = vsel %vm5743, %v4196, 0.0
        %v6000 = vsel %vm5744, %v4197, 0.0
        %v6001 = vsel %vm5745, %v4198, 0.0
        %v6002 = vsel %vm5746, %v4199, 0.0
        %v6003 = vsel %vm5747, %v4200, 0.0
        %v6004 = vsel %vm5748, %v4201, 0.0
        %v6005 = vsel %vm5749, %v4202, 0.0
        %v6006 = vsel %vm5750, %v4203, 0.0
        %v6007 = vsel %vm5751, %v4204, 0.0
        %v6008 = vsel %vm5752, %v4205, 0.0
        %v6009 = vsel %vm5753, %v4206, 0.0
        %v6010 = vsel %vm5754, %v4207, 0.0
        %v6011 = vsel %vm5755, %v4208, 0.0
        %v6012 = vsel %vm5756, %v4209, 0.0
        %v6013 = vsel %vm5757, %v4210, 0.0
        %v6014 = vsel %vm5758, %v4211, 0.0
        %v6015 = vsel %vm5759, %v4212, 0.0
        %v6016 = vsel %vm5760, %v4213, 0.0
        %v6017 = vsel %vm5761, %v4214, 0.0
        %v6018 = vsel %vm5762, %v4215, 0.0
        %v6019 = vsel %vm5763, %v4216, 0.0
        %v6020 = vsel %vm5764, %v4217, 0.0
        %v6021 = vsel %vm5765, %v4218, 0.0
        %v6022 = vsel %vm5766, %v4219, 0.0
        %v6023 = vsel %vm5767, %v4220, 0.0
        %v6024 = vsel %vm5768, %v4221, 0.0
        %v6025 = vsel %vm5769, %v4222, 0.0
        %v6026 = vsel %vm5770, %v4223, 0.0
        %v6027 = vsel %vm5771, %v4224, 0.0
        %v6028 = vsel %vm5772, %v4225, 0.0
        %v6029 = vsel %vm5773, %v4226, 0.0
        %v6030 = vsel %vm5774, %v4227, 0.0
        %v6031 = vsel %vm5775, %v4228, 0.0
        %v6032 = vsel %vm5776, %v4229, 0.0
        %v6033 = vsel %vm5777, %v4230, 0.0
        %v6034 = vsel %vm5778, %v4231, 0.0
        %v6035 = vsel %vm5779, %v4232, 0.0
        %v6036 = vsel %vm5780, %v4233, 0.0
        %v6037 = vsel %vm5781, %v4234, 0.0
        %v6038 = vsel %vm5782, %v4235, 0.0
        %v6039 = vsel %vm5783, %v4236, 0.0
        %v6040 = vsel %vm5784, %v4237, 0.0
        %v6041 = vsel %vm5785, %v4238, 0.0
        %v6042 = vsel %vm5786, %v4239, 0.0
        %v6043 = vsel %vm5787, %v4240, 0.0
        %v6044 = vsel %vm5788, %v4241, 0.0
        %v6045 = vsel %vm5789, %v4242, 0.0
        %v6046 = vsel %vm5790, %v4243, 0.0
        %v6047 = vsel %vm5791, %v4244, 0.0
        %v6048 = vsel %vm5792, %v4245, 0.0
        %v6049 = vsel %vm5793, %v4246, 0.0
        %v6050 = vsel %vm5794, %v4247, 0.0
        %v6051 = vsel %vm5795, %v4248, 0.0
        %v6052 = vsel %vm5796, %v4249, 0.0
        %v6053 = vsel %vm5797, %v4250, 0.0
        %v6054 = vsel %vm5798, %v4251, 0.0
        %v6055 = vsel %vm5799, %v4252, 0.0
        %v6056 = vsel %vm5800, %v4253, 0.0
        %v6057 = vsel %vm5801, %v4254, 0.0
        %v6058 = vsel %vm5802, %v4255, 0.0
        %v6059 = vsel %vm5803, %v4256, 0.0
        %v6060 = vsel %vm5804, %v4257, 0.0
        %v6061 = vsel %vm5805, %v4258, 0.0
        %v6062 = vsel %vm5806, %v4259, 0.0
        %v6063 = vsel %vm5807, %v4260, 0.0
        %v6064 = vsel %vm5808, %v4261, 0.0
        %v6065 = vsel %vm5809, %v4262, 0.0
        %v6066 = vsel %vm5810, %v4263, 0.0
        %v6067 = vsel %vm5811, %v4264, 0.0
        %v6068 = vsel %vm5812, %v4265, 0.0
        %v6069 = vsel %vm5813, %v4266, 0.0
        %v6070 = vsel %vm5814, %v4267, 0.0
        %v6071 = vsel %vm5815, %v4268, 0.0
        %v6072 = vsel %vm5816, %v4269, 0.0
        %v6073 = vsel %vm5817, %v4270, 0.0
        %v6074 = vsel %vm5818, %v4271, 0.0
        %v6075 = vsel %vm5819, %v4272, 0.0
        %v6076 = vsel %vm5820, %v4273, 0.0
        %v6077 = vsel %vm5821, %v4274, 0.0
        %v6078 = vsel %vm5822, %v4275, 0.0
        %v6079 = vsel %vm5823, %v4276, 0.0
        %v6080 = vsel %vm5824, %v4277, 0.0
        %v6081 = vsel %vm5825, %v4278, 0.0
        %v6082 = vsel %vm5826, %v4279, 0.0
        %v6083 = vsel %vm5827, %v4280, 0.0
        %v6084 = vsel %vm5828, %v4281, 0.0
        %v6085 = vsel %vm5829, %v4282, 0.0
        %v6086 = vsel %vm5830, %v4283, 0.0
        %v6087 = vsel %vm5831, %v4284, 0.0
        %v6088 = vsel %vm5832, %v4285, 0.0
        %v6089 = vsel %vm5833, %v4286, 0.0
        %v6090 = vsel %vm5834, %v4287, 0.0
        %v6091 = vsel %vm5835, %v4288, 0.0
        %v6092 = vsel %vm5836, %v4289, 0.0
        %v6093 = vsel %vm5837, %v4290, 0.0
        %v6094 = vsel %vm5838, %v4291, 0.0
        %v6095 = vsel %vm5839, %v4292, 0.0
        %v6096 = vsel %vm5840, %v4293, 0.0
        %v6097 = vsel %vm5841, %v4294, 0.0
        %v6098 = vsel %vm5842, %v4295, 0.0
        %v6099 = vsel %vm5843, %v4296, 0.0
        %v6100 = vsel %vm5844, %v4297, 0.0
        %v6101 = vsel %vm5845, %v4298, 0.0
        %v6102 = vsel %vm5846, %v4299, 0.0
        %v6103 = vsel %vm5847, %v4300, 0.0
        %v6104 = vsel %vm5848, %v4301, 0.0
        %v6105 = vsel %vm5849, %v4302, 0.0
        %v6106 = vsel %vm5850, %v4303, 0.0
        %v6107 = vsel %vm5851, %v4304, 0.0
        %v6108 = vsel %vm5852, %v4305, 0.0
        %v6109 = vsel %vm5853, %v4306, 0.0
        %v6110 = vsel %vm5854, %v4307, 0.0
        %v6111 = vsel %vm5855, %v4308, 0.0
        %v6112 = vsel %vm5856, %v4309, 0.0
        %v6113 = vsel %vm5857, %v4310, 0.0
        %v6114 = vsel %vm5858, %v4311, 0.0
        %v6115 = vsel %vm5859, %v4312, 0.0
        %v6116 = vsel %vm5860, %v4313, 0.0
        %v6117 = vsel %vm5861, %v4314, 0.0
        %v6118 = vsel %vm5862, %v4315, 0.0
        %v6119 = vsel %vm5863, %v4316, 0.0
        %v6120 = vsel %vm5864, %v4317, 0.0
        %v6121 = vsel %vm5865, %v4318, 0.0
        %v6122 = vsel %vm5866, %v4319, 0.0
        %v6123 = vsel %vm5867, %v4320, 0.0
        %v6124 = vsel %vm5868, %v4321, 0.0
        %v6125 = vsel %vm5869, %v4322, 0.0
        %v6126 = vsel %vm5870, %v4323, 0.0
        %v6127 = vsel %vm5871, %v4324, 0.0
        %v6128 = vsel %vm5872, %v4325, 0.0
        %v6129 = vsel %vm5873, %v4326, 0.0
        %v6130 = vsel %vm5874, %v4327, 0.0
        %v6131 = vsel %vm5875, %v4328, 0.0
        %v6132 = vsel %vm5876, %v4329, 0.0
        %v6133 = vsel %vm5877, %v4330, 0.0
        %v6134 = vsel %vm5878, %v4331, 0.0
        %v6135 = vsel %vm5879, %v4332, 0.0
        %v6136 = vsel %vm5880, %v4333, 0.0
        %v6137 = vsel %vm5881, %v4334, 0.0
        %v6138 = vsel %vm5882, %v4335, 0.0
        %v6139 = vsel %vm5883, %v4336, 0.0
        %v6140 = vsel %vm5884, %v4337, 0.0
        %v6141 = vsel %vm5885, %v4338, 0.0
        %v6142 = vsel %vm5886, %v4339, 0.0
        %v6143 = vsel %vm5887, %v4340, 0.0
        %v6144 = vsel %vm5888, %v4341, 0.0
        %v6145 = vsel %vm5889, %v4342, 0.0
        %v6146 = vsel %vm5890, %v4343, 0.0
        %v6147 = vsel %vm5891, %v4344, 0.0
        %v6148 = vsel %vm5892, %v4345, 0.0
        %v6149 = vsel %vm5893, %v4346, 0.0
        %v6150 = vsel %vm5894, %v4347, 0.0
        %v6151 = vsel %vm5895, %v4348, 0.0
        %v6152 = vsel %vm5896, %v4349, 0.0
        %v6153 = vsel %vm5897, %v4350, 0.0
        %v6154 = vsel %vm5898, %v4351, 0.0
        %v6155 = vsel %vm5899, %v4352, 0.0
        %v6156 = vsel %vm5900, %v4353, 0.0
        %v6157 = vsel %vm5901, %v4354, 0.0
        %v6158 = vsel %vm5902, %v4355, 0.0
        %v6159 = vsel %vm5903, %v4356, 0.0
        %v6160 = vsel %vm5904, %v4357, 0.0
        %v6161 = vsel %vm5905, %v4358, 0.0
        %v6162 = vsel %vm5906, %v4359, 0.0
        %v6163 = vsel %vm5907, %v4360, 0.0
        %v6164 = vsel %vm5908, %v4361, 0.0
        %v6165 = vsel %vm5909, %v4362, 0.0
        %v6166 = vsel %vm5910, %v4363, 0.0
        %v6167 = vsel %vm5911, %v4364, 0.0
        %v6168 = vld [vmem:[%s248] sm:$0xff]
        %v6169 = vadd.f32 %v5912, %v5913
        %v6170 = vadd.f32 %v6169, %v5914
        %v6171 = vadd.f32 %v6170, %v5915
        %v6172 = vadd.f32 %v6171, %v5916
        %v6173 = vadd.f32 %v6172, %v5917
        %v6174 = vadd.f32 %v6173, %v5918
        %v6175 = vadd.f32 %v6174, %v5919
        %v6176 = vadd.f32 %v6175, %v5920
        %v6177 = vadd.f32 %v6176, %v5921
        %v6178 = vadd.f32 %v6177, %v5922
        %v6179 = vadd.f32 %v6178, %v5923
        %v6180 = vadd.f32 %v6179, %v5924
        %v6181 = vadd.f32 %v6180, %v5925
        %v6182 = vadd.f32 %v6181, %v5926
        %v6183 = vadd.f32 %v6182, %v5927
        %v6184 = vadd.f32 %v6183, %v5928
        %v6185 = vadd.f32 %v6184, %v5929
        %v6186 = vadd.f32 %v6185, %v5930
        %v6187 = vadd.f32 %v6186, %v5931
        %v6188 = vadd.f32 %v6187, %v5932
        %v6189 = vadd.f32 %v6188, %v5933
        %v6190 = vadd.f32 %v6189, %v5934
        %v6191 = vadd.f32 %v6190, %v5935
        %v6192 = vadd.f32 %v6191, %v5936
        %v6193 = vadd.f32 %v6192, %v5937
        %v6194 = vadd.f32 %v6193, %v5938
        %v6195 = vadd.f32 %v6194, %v5939
        %v6196 = vadd.f32 %v6195, %v5940
        %v6197 = vadd.f32 %v6196, %v5941
        %v6198 = vadd.f32 %v6197, %v5942
        %v6199 = vadd.f32 %v6198, %v5943
        %v6200 = vadd.f32 %v6199, %v5944
        %v6201 = vadd.f32 %v6200, %v5945
        %v6202 = vadd.f32 %v6201, %v5946
        %v6203 = vadd.f32 %v6202, %v5947
        %v6204 = vadd.f32 %v6203, %v5948
        %v6205 = vadd.f32 %v6204, %v5949
        %v6206 = vadd.f32 %v6205, %v5950
        %v6207 = vadd.f32 %v6206, %v5951
        %v6208 = vadd.f32 %v6207, %v5952
        %v6209 = vadd.f32 %v6208, %v5953
        %v6210 = vadd.f32 %v6209, %v5954
        %v6211 = vadd.f32 %v6210, %v5955
        %v6212 = vadd.f32 %v6211, %v5956
        %v6213 = vadd.f32 %v6212, %v5957
        %v6214 = vadd.f32 %v6213, %v5958
        %v6215 = vadd.f32 %v6214, %v5959
        %v6216 = vadd.f32 %v6215, %v5960
        %v6217 = vadd.f32 %v6216, %v5961
        %v6218 = vadd.f32 %v6217, %v5962
        %v6219 = vadd.f32 %v6218, %v5963
        %v6220 = vadd.f32 %v6219, %v5964
        %v6221 = vadd.f32 %v6220, %v5965
        %v6222 = vadd.f32 %v6221, %v5966
        %v6223 = vadd.f32 %v6222, %v5967
        %v6224 = vadd.f32 %v6223, %v5968
        %v6225 = vadd.f32 %v6224, %v5969
        %v6226 = vadd.f32 %v6225, %v5970
        %v6227 = vadd.f32 %v6226, %v5971
        %v6228 = vadd.f32 %v6227, %v5972
        %v6229 = vadd.f32 %v6228, %v5973
        %v6230 = vadd.f32 %v6229, %v5974
        %v6231 = vadd.f32 %v6230, %v5975
        %v6232 = vadd.f32 %v6231, %v5976
        %v6233 = vadd.f32 %v6232, %v5977
        %v6234 = vadd.f32 %v6233, %v5978
        %v6235 = vadd.f32 %v6234, %v5979
        %v6236 = vadd.f32 %v6235, %v5980
        %v6237 = vadd.f32 %v6236, %v5981
        %v6238 = vadd.f32 %v6237, %v5982
        %v6239 = vadd.f32 %v6238, %v5983
        %v6240 = vadd.f32 %v6239, %v5984
        %v6241 = vadd.f32 %v6240, %v5985
        %v6242 = vadd.f32 %v6241, %v5986
        %v6243 = vadd.f32 %v6242, %v5987
        %v6244 = vadd.f32 %v6243, %v5988
        %v6245 = vadd.f32 %v6244, %v5989
        %v6246 = vadd.f32 %v6245, %v5990
        %v6247 = vadd.f32 %v6246, %v5991
        %v6248 = vadd.f32 %v6247, %v5992
        %v6249 = vadd.f32 %v6248, %v5993
        %v6250 = vadd.f32 %v6249, %v5994
        %v6251 = vadd.f32 %v6250, %v5995
        %v6252 = vadd.f32 %v6251, %v5996
        %v6253 = vadd.f32 %v6252, %v5997
        %v6254 = vadd.f32 %v6253, %v5998
        %v6255 = vadd.f32 %v6254, %v5999
        %v6256 = vadd.f32 %v6255, %v6000
        %v6257 = vadd.f32 %v6256, %v6001
        %v6258 = vadd.f32 %v6257, %v6002
        %v6259 = vadd.f32 %v6258, %v6003
        %v6260 = vadd.f32 %v6259, %v6004
        %v6261 = vadd.f32 %v6260, %v6005
        %v6262 = vadd.f32 %v6261, %v6006
        %v6263 = vadd.f32 %v6262, %v6007
        %v6264 = vadd.f32 %v6263, %v6008
        %v6265 = vadd.f32 %v6264, %v6009
        %v6266 = vadd.f32 %v6265, %v6010
        %v6267 = vadd.f32 %v6266, %v6011
        %v6268 = vadd.f32 %v6267, %v6012
        %v6269 = vadd.f32 %v6268, %v6013
        %v6270 = vadd.f32 %v6269, %v6014
        %v6271 = vadd.f32 %v6270, %v6015
        %v6272 = vadd.f32 %v6271, %v6016
        %v6273 = vadd.f32 %v6272, %v6017
        %v6274 = vadd.f32 %v6273, %v6018
        %v6275 = vadd.f32 %v6274, %v6019
        %v6276 = vadd.f32 %v6275, %v6020
        %v6277 = vadd.f32 %v6276, %v6021
        %v6278 = vadd.f32 %v6277, %v6022
        %v6279 = vadd.f32 %v6278, %v6023
        %v6280 = vadd.f32 %v6279, %v6024
        %v6281 = vadd.f32 %v6280, %v6025
        %v6282 = vadd.f32 %v6281, %v6026
        %v6283 = vadd.f32 %v6282, %v6027
        %v6284 = vadd.f32 %v6283, %v6028
        %v6285 = vadd.f32 %v6284, %v6029
        %v6286 = vadd.f32 %v6285, %v6030
        %v6287 = vadd.f32 %v6286, %v6031
        %v6288 = vadd.f32 %v6287, %v6032
        %v6289 = vadd.f32 %v6288, %v6033
        %v6290 = vadd.f32 %v6289, %v6034
        %v6291 = vadd.f32 %v6290, %v6035
        %v6292 = vadd.f32 %v6291, %v6036
        %v6293 = vadd.f32 %v6292, %v6037
        %v6294 = vadd.f32 %v6293, %v6038
        %v6295 = vadd.f32 %v6294, %v6039
        %v6296 = vadd.f32 %v6295, %v6040
        %v6297 = vadd.f32 %v6296, %v6041
        %v6298 = vadd.f32 %v6297, %v6042
        %v6299 = vadd.f32 %v6298, %v6043
        %v6300 = vadd.f32 %v6299, %v6044
        %v6301 = vadd.f32 %v6300, %v6045
        %v6302 = vadd.f32 %v6301, %v6046
        %v6303 = vadd.f32 %v6302, %v6047
        %v6304 = vadd.f32 %v6303, %v6048
        %v6305 = vadd.f32 %v6304, %v6049
        %v6306 = vadd.f32 %v6305, %v6050
        %v6307 = vadd.f32 %v6306, %v6051
        %v6308 = vadd.f32 %v6307, %v6052
        %v6309 = vadd.f32 %v6308, %v6053
        %v6310 = vadd.f32 %v6309, %v6054
        %v6311 = vadd.f32 %v6310, %v6055
        %v6312 = vadd.f32 %v6311, %v6056
        %v6313 = vadd.f32 %v6312, %v6057
        %v6314 = vadd.f32 %v6313, %v6058
        %v6315 = vadd.f32 %v6314, %v6059
        %v6316 = vadd.f32 %v6315, %v6060
        %v6317 = vadd.f32 %v6316, %v6061
        %v6318 = vadd.f32 %v6317, %v6062
        %v6319 = vadd.f32 %v6318, %v6063
        %v6320 = vadd.f32 %v6319, %v6064
        %v6321 = vadd.f32 %v6320, %v6065
        %v6322 = vadd.f32 %v6321, %v6066
        %v6323 = vadd.f32 %v6322, %v6067
        %v6324 = vadd.f32 %v6323, %v6068
        %v6325 = vadd.f32 %v6324, %v6069
        %v6326 = vadd.f32 %v6325, %v6070
        %v6327 = vadd.f32 %v6326, %v6071
        %v6328 = vadd.f32 %v6327, %v6072
        %v6329 = vadd.f32 %v6328, %v6073
        %v6330 = vadd.f32 %v6329, %v6074
        %v6331 = vadd.f32 %v6330, %v6075
        %v6332 = vadd.f32 %v6331, %v6076
        %v6333 = vadd.f32 %v6332, %v6077
        %v6334 = vadd.f32 %v6333, %v6078
        %v6335 = vadd.f32 %v6334, %v6079
        %v6336 = vadd.f32 %v6335, %v6080
        %v6337 = vadd.f32 %v6336, %v6081
        %v6338 = vadd.f32 %v6337, %v6082
        %v6339 = vadd.f32 %v6338, %v6083
        %v6340 = vadd.f32 %v6339, %v6084
        %v6341 = vadd.f32 %v6340, %v6085
        %v6342 = vadd.f32 %v6341, %v6086
        %v6343 = vadd.f32 %v6342, %v6087
        %v6344 = vadd.f32 %v6343, %v6088
        %v6345 = vadd.f32 %v6344, %v6089
        %v6346 = vadd.f32 %v6345, %v6090
        %v6347 = vadd.f32 %v6346, %v6091
        %v6348 = vadd.f32 %v6347, %v6092
        %v6349 = vadd.f32 %v6348, %v6093
        %v6350 = vadd.f32 %v6349, %v6094
        %v6351 = vadd.f32 %v6350, %v6095
        %v6352 = vadd.f32 %v6351, %v6096
        %v6353 = vadd.f32 %v6352, %v6097
        %v6354 = vadd.f32 %v6353, %v6098
        %v6355 = vadd.f32 %v6354, %v6099
        %v6356 = vadd.f32 %v6355, %v6100
        %v6357 = vadd.f32 %v6356, %v6101
        %v6358 = vadd.f32 %v6357, %v6102
        %v6359 = vadd.f32 %v6358, %v6103
        %v6360 = vadd.f32 %v6359, %v6104
        %v6361 = vadd.f32 %v6360, %v6105
        %v6362 = vadd.f32 %v6361, %v6106
        %v6363 = vadd.f32 %v6362, %v6107
        %v6364 = vadd.f32 %v6363, %v6108
        %v6365 = vadd.f32 %v6364, %v6109
        %v6366 = vadd.f32 %v6365, %v6110
        %v6367 = vadd.f32 %v6366, %v6111
        %v6368 = vadd.f32 %v6367, %v6112
        %v6369 = vadd.f32 %v6368, %v6113
        %v6370 = vadd.f32 %v6369, %v6114
        %v6371 = vadd.f32 %v6370, %v6115
        %v6372 = vadd.f32 %v6371, %v6116
        %v6373 = vadd.f32 %v6372, %v6117
        %v6374 = vadd.f32 %v6373, %v6118
        %v6375 = vadd.f32 %v6374, %v6119
        %v6376 = vadd.f32 %v6375, %v6120
        %v6377 = vadd.f32 %v6376, %v6121
        %v6378 = vadd.f32 %v6377, %v6122
        %v6379 = vadd.f32 %v6378, %v6123
        %v6380 = vadd.f32 %v6379, %v6124
        %v6381 = vadd.f32 %v6380, %v6125
        %v6382 = vadd.f32 %v6381, %v6126
        %v6383 = vadd.f32 %v6382, %v6127
        %v6384 = vadd.f32 %v6383, %v6128
        %v6385 = vadd.f32 %v6384, %v6129
        %v6386 = vadd.f32 %v6385, %v6130
        %v6387 = vadd.f32 %v6386, %v6131
        %v6388 = vadd.f32 %v6387, %v6132
        %v6389 = vadd.f32 %v6388, %v6133
        %v6390 = vadd.f32 %v6389, %v6134
        %v6391 = vadd.f32 %v6390, %v6135
        %v6392 = vadd.f32 %v6391, %v6136
        %v6393 = vadd.f32 %v6392, %v6137
        %v6394 = vadd.f32 %v6393, %v6138
        %v6395 = vadd.f32 %v6394, %v6139
        %v6396 = vadd.f32 %v6395, %v6140
        %v6397 = vadd.f32 %v6396, %v6141
        %v6398 = vadd.f32 %v6397, %v6142
        %v6399 = vadd.f32 %v6398, %v6143
        %v6400 = vadd.f32 %v6399, %v6144
        %v6401 = vadd.f32 %v6400, %v6145
        %v6402 = vadd.f32 %v6401, %v6146
        %v6403 = vadd.f32 %v6402, %v6147
        %v6404 = vadd.f32 %v6403, %v6148
        %v6405 = vadd.f32 %v6404, %v6149
        %v6406 = vadd.f32 %v6405, %v6150
        %v6407 = vadd.f32 %v6406, %v6151
        %v6408 = vadd.f32 %v6407, %v6152
        %v6409 = vadd.f32 %v6408, %v6153
        %v6410 = vadd.f32 %v6409, %v6154
        %v6411 = vadd.f32 %v6410, %v6155
        %v6412 = vadd.f32 %v6411, %v6156
        %v6413 = vadd.f32 %v6412, %v6157
        %v6414 = vadd.f32 %v6413, %v6158
        %v6415 = vadd.f32 %v6414, %v6159
        %v6416 = vadd.f32 %v6415, %v6160
        %v6417 = vadd.f32 %v6416, %v6161
        %v6418 = vadd.f32 %v6417, %v6162
        %v6419 = vadd.f32 %v6418, %v6163
        %v6420 = vadd.f32 %v6419, %v6164
        %v6421 = vadd.f32 %v6420, %v6165
        %v6422 = vadd.f32 %v6421, %v6166
        %v6423 = vadd.f32 %v6422, %v6167
        %v6424 = vadd.f32 %v6168, %v6423
        %6425 = vst [vmem:[%s248] sm:$0xff] %v6424
        %s6426 = sand.u32 %s115, 1
        %s6427 = scalar_lea.sflag [#allocation7], %s6426
        %s6428 = sand.u32 %s115, 1
        %s6429 = smul.addr %s6428, 8
        %s6430 = scalar_lea.vmem [#allocation10], %s6429
        // Predicated region
        $region41: #{tpu_custom_call.1} parent=27 // pred_check
          %p6431 = pneg %p125
        $region42: #{tpu_custom_call.1} parent=27 // pred_check_branch
          %6433 = sbr.rel (%p6431) target = $region44
        $region43: #{tpu_custom_call.1} parent=27 // pred_region
          %s6435 = ssub.s32 128, 128
          %6436 = vsyncadd %s6427, %s6435
          %s6437 = smul.addr %s35, 128
          %s6438 = scalar_lea.hbm %s4, %s6437
          %s6440 = sshll.u32 %s6430, 4
          %s6441 = int_to_ptr.vmem [resolvable:$true] %s6440
          %6443 = dma.vmem_to_hbm [thread:$0]  %s6441, 128, %s6438, %s6427
        $region44: #{tpu_custom_call.1} parent=27 // pred_fallthru
          _
      $region28: #{tpu_custom_call.1} parent=5 // pred_fallthru
        _
      %p6444 = scmp.le.s32.totalorder 2, %s26
      // Predicated region
      $region45: #{tpu_custom_call.1} parent=5 // pred_check
        %p6445 = pneg %p6444
      $region46: #{tpu_custom_call.1} parent=5 // pred_check_branch
        %6447 = sbr.rel (%p6445) target = $region48
      $region47: #{tpu_custom_call.1} parent=5 // pred_region
        %s6448 = ssub.s32 %s26, 2
        // Predicated region
        $region49: #{tpu_custom_call.1} parent=47 // pred_check
          %p6449 = pneg %p131
        $region50: #{tpu_custom_call.1} parent=47 // pred_check_branch
          %6451 = sbr.rel (%p6449) target = $region52
        $region51: #{tpu_custom_call.1} parent=47 // pred_region
          %s6452 = sand.u32 %s116, 1
          %s6453 = scalar_lea.sflag [#allocation7], %s6452
          %s6454 = sand.u32 %s116, 1
          %s6455 = smul.addr %s6454, 8
          %s6456 = scalar_lea.vmem [#allocation10], %s6455
          %6457 = dma.done %s6453, 128
        $region52: #{tpu_custom_call.1} parent=47 // pred_fallthru
          _
      $region48: #{tpu_custom_call.1} parent=5 // pred_fallthru
        _
    $region6: #{tpu_custom_call.1} parent=1 // loop_footer
      %s30 = sadd.s32 1, %s26
    $region7: #{tpu_custom_call.1} parent=1 // loop_footer_branch
      %25 = sbr.rel target = $region3
    $region8: #{tpu_custom_call.1} parent=1 // loop_exit
      _
    %6458 = vsyncpa [#allocation6], 1
    %s6459 = scalar_lea.sflag [#allocation6], 1
    %6460 = vsyncpa %s6459, 1
    %6461 = vsyncpa [#allocation9], 1
    %s6462 = scalar_lea.sflag [#allocation9], 1
    %6463 = vsyncpa %s6462, 1
    %6464 = vsyncpa [#allocation7], 1
    %s6465 = scalar_lea.sflag [#allocation7], 1
    %6466 = vsyncpa %s6465, 1

</llo_original>
